<compile_context>
chip_gen: v7x
topology: tpu7x:2x2x1
jax: 0.10.0
libtpu: 0.0.40
codegen_flags: <defaults>
</compile_context>

<pallas_src>
import functools

import jax
import jax.numpy as jnp
from jax.experimental import pallas as pl
from jax.experimental.pallas import tpu as pltpu

# Contract the trailing dim of both operands (A @ B^T), same form flash-attention uses.
_NT_DIMS = (((1,), (1,)), ((), ()))


def _cube_downsample_kernel(x_ref, w1k_ref, b1k_ref, w2_ref, b2_ref,
                            w3k_ref, b3r_ref, g_ref, bb_ref, o_ref,
                            *, eps, n_elem, prec):
    """One batch element per grid step; three wide matmuls + LayerNorm epilogue.

    Layouts (per sample, P = in_planes, Q = out_planes):
      x_ref   : (1, P*P, P)   rows = (c,h)  cols = w        (free fold of NCHW)
      w1k_ref : (Q*P, P*P)    kron(W1, I_P)   rows (o1,h), cols (c,h)
      b1k_ref : (Q*P, 1)      b1 repeated over h
      w2_ref  : (Q, P)        conv2 weight
      b2_ref  : (Q, 1)
      w3k_ref : (Q*P, Q*Q)    kron(I_Q, W3^T) rows (o1,h), cols (o1,o3)
      b3r_ref : (1, Q*Q)      b3 tiled over o1
      g_ref   : (Q, Q*Q)      LayerNorm gamma permuted to (o2, (o1,o3))
      bb_ref  : (Q, Q*Q)      LayerNorm beta  permuted to (o2, (o1,o3))
      o_ref   : (1, Q, Q*Q)   rows = o2, cols = (o1,o3)  -> lane-dense store
    """
    x = x_ref[0]                                                       # (P*P, P)

    # conv1 + permute + relu:  t1[(o1,h), w] = relu(sum_c W1[o1,c] x[c,h,w] + b1[o1])
    t1 = jnp.maximum(
        jnp.dot(w1k_ref[...], x, precision=prec,
                preferred_element_type=jnp.float32) + b1k_ref[...], 0.0)   # (Q*P, P)

    # conv2 + permute + relu (NT matmul, contract w = trailing dim of both):
    #   t2[o2, (o1,h)] = relu(sum_w W2[o2,w] t1[(o1,h), w] + b2[o2])
    t2 = jnp.maximum(
        jax.lax.dot_general(w2_ref[...], t1, _NT_DIMS, precision=prec,
                            preferred_element_type=jnp.float32)
        + b2_ref[...], 0.0)                                                # (Q, Q*P)

    # conv3 + permute + relu:  t3[o2, (o1,o3)] = relu(sum_h W3[o3,h] t2[o2,(o1,h)] + b3[o3])
    t3 = jnp.maximum(
        jnp.dot(t2, w3k_ref[...], precision=prec,
                preferred_element_type=jnp.float32) + b3r_ref[...], 0.0)   # (Q, Q*Q)

    # LayerNorm([Q,Q,Q]) over the whole per-sample cube (two-pass, biased variance).
    mu = jnp.sum(t3) / n_elem
    d = t3 - mu
    var = jnp.sum(d * d) / n_elem
    inv = jax.lax.rsqrt(var + eps)
    o_ref[0] = (d * inv * g_ref[...] + bb_ref[...]).astype(o_ref.dtype)


def cube_downsample_pallas(x, params, eps=1e-5,
                           precision=jax.lax.Precision.HIGHEST):
    """x: (N, C, H, W) float32 with C == H == W == in_planes."""
    w1, b1, w2, b2, w3, b3, gamma, beta = params
    N, C, H, W = x.shape
    assert C == H == W, "cube_downsample requires a cubic NCHW input"
    P = C
    Q = w1.shape[0]

    # ---- wrapper-side glue (tiny constants / free reshapes; no HBM pass over x) ----
    x_r = x.reshape(N, P * P, P)                                # (n, (c,h), w)
    w1k = jnp.kron(w1, jnp.eye(P, dtype=w1.dtype))              # ((o1,h), (c,h))
    b1k = jnp.repeat(b1, P).reshape(Q * P, 1)                   # b1k[(o1,h)] = b1[o1]
    w3k = jnp.kron(jnp.eye(Q, dtype=w3.dtype), w3.T)            # ((o1,h), (o1,o3))
    b3r = jnp.tile(b3, Q).reshape(1, Q * Q)                     # b3r[(o1,o3)] = b3[o3]
    g_k = jnp.transpose(gamma, (2, 0, 1)).reshape(Q, Q * Q)     # gamma[o1,o3,o2] -> (o2,(o1,o3))
    b_k = jnp.transpose(beta, (2, 0, 1)).reshape(Q, Q * Q)

    kernel = functools.partial(_cube_downsample_kernel, eps=eps,
                               n_elem=float(Q * Q * Q), prec=precision)

    out = pl.pallas_call(
        kernel,
        out_shape=jax.ShapeDtypeStruct((N, Q, Q * Q), jnp.float32),
        grid_spec=pltpu.PrefetchScalarGridSpec(
            num_scalar_prefetch=0,
            grid=(N,),
            in_specs=[
                pl.BlockSpec((1, P * P, P), lambda n: (n, 0, 0)),   # x (one sample)
                pl.BlockSpec((Q * P, P * P), lambda n: (0, 0)),     # kron(W1, I_P)
                pl.BlockSpec((Q * P, 1), lambda n: (0, 0)),         # b1 expanded
                pl.BlockSpec((Q, P), lambda n: (0, 0)),             # W2
                pl.BlockSpec((Q, 1), lambda n: (0, 0)),             # b2
                pl.BlockSpec((Q * P, Q * Q), lambda n: (0, 0)),     # kron(I_Q, W3^T)
                pl.BlockSpec((1, Q * Q), lambda n: (0, 0)),         # b3 tiled
                pl.BlockSpec((Q, Q * Q), lambda n: (0, 0)),         # gamma (permuted)
                pl.BlockSpec((Q, Q * Q), lambda n: (0, 0)),         # beta  (permuted)
            ],
            out_specs=pl.BlockSpec((1, Q, Q * Q), lambda n: (n, 0, 0)),
        ),
        compiler_params=pltpu.CompilerParams(
            dimension_semantics=("parallel",)),
    )(x_r, w1k, b1k, w2, b2.reshape(Q, 1), w3k, b3r, g_k, b_k)

    # Kernel layout (n, o2, (o1,o3)) -> module layout (n, o1, o3, o2).
    return jnp.transpose(out.reshape(N, Q, Q, Q), (0, 2, 3, 1))


def cube_downsample_reference(x, params, eps=1e-5):
    """Pure-JAX reference mirroring the PyTorch forward exactly."""
    w1, b1, w2, b2, w3, b3, gamma, beta = params
    prec = jax.lax.Precision.HIGHEST

    def step(t, w, b):
        y = jnp.einsum('oc,nchw->nohw', w, t, precision=prec) \
            + b[None, :, None, None]                       # 1x1 conv
        y = jnp.transpose(y, (0, 3, 1, 2))                 # .permute(0, 3, 1, 2)
        return jnp.maximum(y, 0.0)                         # relu

    t = step(x, w1, b1)
    t = step(t, w2, b2)
    t = step(t, w3, b3)
    mu = jnp.mean(t, axis=(1, 2, 3), keepdims=True)
    var = jnp.mean((t - mu) ** 2, axis=(1, 2, 3), keepdims=True)   # biased, like LayerNorm
    return (t - mu) / jnp.sqrt(var + eps) * gamma[None] + beta[None]


if __name__ == "__main__":
    key = jax.random.PRNGKey(0)
    N, P, Q = 2, 8, 16            # batch, in_planes (cube side), out_planes
    ks = jax.random.split(key, 9)

    x = jax.random.normal(ks[0], (N, P, P, P), jnp.float32)

    # Deterministic synthetic parameters (Conv2d kernel_size=1 -> (out, in) matrices).
    scale = 1.0 / jnp.sqrt(jnp.float32(P))
    w1 = jax.random.normal(ks[1], (Q, P), jnp.float32) * scale
    b1 = jax.random.normal(ks[2], (Q,), jnp.float32) * 0.1
    w2 = jax.random.normal(ks[3], (Q, P), jnp.float32) * scale
    b2 = jax.random.normal(ks[4], (Q,), jnp.float32) * 0.1
    w3 = jax.random.normal(ks[5], (Q, P), jnp.float32) * scale
    b3 = jax.random.normal(ks[6], (Q,), jnp.float32) * 0.1
    gamma = 1.0 + 0.1 * jax.random.normal(ks[7], (Q, Q, Q), jnp.float32)
    beta = 0.1 * jax.random.normal(ks[8], (Q, Q, Q), jnp.float32)
    params = (w1, b1, w2, b2, w3, b3, gamma, beta)

    out = cube_downsample_pallas(x, params)
    out = jax.block_until_ready(out)

    ref = cube_downsample_reference(x, params)
    ref = jax.block_until_ready(ref)

    assert out.shape == (N, Q, Q, Q), out.shape
    assert jnp.allclose(out, ref, atol=5e-3, rtol=5e-3), \
        float(jnp.max(jnp.abs(out - ref)))

    print("KERNEL_OK")
</pallas_src>

<mosaic_0001>
module attributes {stable_mosaic.version = 11 : i64} {
  func.func @_cube_downsample_kernel(%arg0: i32, %arg1: memref<1x64x8xf32, #tpu.memory_space<vmem>>, %arg2: memref<128x64xf32, #tpu.memory_space<vmem>>, %arg3: memref<128x1xf32, #tpu.memory_space<vmem>>, %arg4: memref<16x8xf32, #tpu.memory_space<vmem>>, %arg5: memref<16x1xf32, #tpu.memory_space<vmem>>, %arg6: memref<128x256xf32, #tpu.memory_space<vmem>>, %arg7: memref<1x256xf32, #tpu.memory_space<vmem>>, %arg8: memref<16x256xf32, #tpu.memory_space<vmem>>, %arg9: memref<16x256xf32, #tpu.memory_space<vmem>>, %arg10: memref<1x16x256xf32, #tpu.memory_space<vmem>>) attributes {dimension_semantics = [#tpu.dimension_semantics<parallel>], iteration_bounds = array<i64: 2>, scalar_prefetch = 0 : i64, scratch_operands = 0 : i64, tpu.core_type = #tpu.core_type<tc>, window_params = [{transform_indices = @transform_0, window_bounds = array<i64: 1, 64, 8>}, {pipeline_mode = #tpu.pipeline_mode<synchronous>, transform_indices = @transform_1, window_bounds = array<i64: 128, 64>}, {pipeline_mode = #tpu.pipeline_mode<synchronous>, transform_indices = @transform_2, window_bounds = array<i64: 128, 1>}, {pipeline_mode = #tpu.pipeline_mode<synchronous>, transform_indices = @transform_3, window_bounds = array<i64: 16, 8>}, {pipeline_mode = #tpu.pipeline_mode<synchronous>, transform_indices = @transform_4, window_bounds = array<i64: 16, 1>}, {pipeline_mode = #tpu.pipeline_mode<synchronous>, transform_indices = @transform_5, window_bounds = array<i64: 128, 256>}, {pipeline_mode = #tpu.pipeline_mode<synchronous>, transform_indices = @transform_6, window_bounds = array<i64: 1, 256>}, {pipeline_mode = #tpu.pipeline_mode<synchronous>, transform_indices = @transform_7, window_bounds = array<i64: 16, 256>}, {pipeline_mode = #tpu.pipeline_mode<synchronous>, transform_indices = @transform_8, window_bounds = array<i64: 16, 256>}, {transform_indices = @transform_9, window_bounds = array<i64: 1, 16, 256>}]} {
    %c0 = arith.constant 0 : index
    %c0_0 = arith.constant 0 : index
    %c0_1 = arith.constant 0 : index
    %0 = vector.load %arg1[%c0, %c0_0, %c0_1] : memref<1x64x8xf32, #tpu.memory_space<vmem>>, vector<1x64x8xf32>
    %1 = vector.shape_cast %0 : vector<1x64x8xf32> to vector<64x8xf32>
    %c0_2 = arith.constant 0 : index
    %c0_3 = arith.constant 0 : index
    %2 = vector.load %arg2[%c0_2, %c0_3] : memref<128x64xf32, #tpu.memory_space<vmem>>, vector<128x64xf32>
    %cst = arith.constant dense<0.000000e+00> : vector<128x8xf32>
    %3 = tpu.matmul %2, %1, %cst {dimension_numbers = #tpu.dot_dimension_numbers<[1], [0], [0], [1], [0, 0, 1, 1], [], []>, precision = #tpu.contract_precision<fp32>} : vector<128x64xf32>, vector<64x8xf32>, vector<128x8xf32> -> vector<128x8xf32>
    %c0_4 = arith.constant 0 : index
    %c0_5 = arith.constant 0 : index
    %4 = vector.load %arg3[%c0_4, %c0_5] : memref<128x1xf32, #tpu.memory_space<vmem>>, vector<128x1xf32>
    %5 = vector.broadcast %4 : vector<128x1xf32> to vector<128x8xf32>
    %6 = arith.addf %3, %5 : vector<128x8xf32>
    %cst_6 = arith.constant 0.000000e+00 : f32
    %7 = vector.broadcast %cst_6 : f32 to vector<128x8xf32>
    %8 = arith.maximumf %6, %7 : vector<128x8xf32>
    %c0_7 = arith.constant 0 : index
    %c0_8 = arith.constant 0 : index
    %9 = vector.load %arg4[%c0_7, %c0_8] : memref<16x8xf32, #tpu.memory_space<vmem>>, vector<16x8xf32>
    %cst_9 = arith.constant dense<0.000000e+00> : vector<16x128xf32>
    %10 = tpu.matmul %9, %8, %cst_9 {dimension_numbers = #tpu.dot_dimension_numbers<[1], [1], [0], [0], [0, 0, 1, 0], [], []>, precision = #tpu.contract_precision<fp32>} : vector<16x8xf32>, vector<128x8xf32>, vector<16x128xf32> -> vector<16x128xf32>
    %c0_10 = arith.constant 0 : index
    %c0_11 = arith.constant 0 : index
    %11 = vector.load %arg5[%c0_10, %c0_11] : memref<16x1xf32, #tpu.memory_space<vmem>>, vector<16x1xf32>
    %12 = vector.broadcast %11 : vector<16x1xf32> to vector<16x128xf32>
    %13 = arith.addf %10, %12 : vector<16x128xf32>
    %cst_12 = arith.constant 0.000000e+00 : f32
    %14 = vector.broadcast %cst_12 : f32 to vector<16x128xf32>
    %15 = arith.maximumf %13, %14 : vector<16x128xf32>
    %c0_13 = arith.constant 0 : index
    %c0_14 = arith.constant 0 : index
    %16 = vector.load %arg6[%c0_13, %c0_14] : memref<128x256xf32, #tpu.memory_space<vmem>>, vector<128x256xf32>
    %cst_15 = arith.constant dense<0.000000e+00> : vector<16x256xf32>
    %17 = tpu.matmul %15, %16, %cst_15 {dimension_numbers = #tpu.dot_dimension_numbers<[1], [0], [0], [1], [0, 0, 1, 1], [], []>, precision = #tpu.contract_precision<fp32>} : vector<16x128xf32>, vector<128x256xf32>, vector<16x256xf32> -> vector<16x256xf32>
    %c0_16 = arith.constant 0 : index
    %c0_17 = arith.constant 0 : index
    %18 = vector.load %arg7[%c0_16, %c0_17] : memref<1x256xf32, #tpu.memory_space<vmem>>, vector<1x256xf32>
    %19 = vector.broadcast %18 : vector<1x256xf32> to vector<16x256xf32>
    %20 = arith.addf %17, %19 : vector<16x256xf32>
    %cst_18 = arith.constant 0.000000e+00 : f32
    %21 = vector.broadcast %cst_18 : f32 to vector<16x256xf32>
    %22 = arith.maximumf %20, %21 : vector<16x256xf32>
    %23 = vector.shape_cast %22 : vector<16x256xf32> to vector<1x16x256xf32>
    %cst_19 = arith.constant dense<0.000000e+00> : vector<1xf32>
    %24 = vector.multi_reduction <add>, %23, %cst_19 [1, 2] : vector<1x16x256xf32> to vector<1xf32>
    %25 = vector.shape_cast %24 : vector<1xf32> to vector<1x1x1xf32>
    %26 = vector.extract %25[0, 0, 0] : f32 from vector<1x1x1xf32>
    %cst_20 = arith.constant 4.096000e+03 : f32
    %27 = arith.divf %26, %cst_20 : f32
    %28 = vector.broadcast %27 : f32 to vector<16x256xf32>
    %29 = arith.subf %22, %28 : vector<16x256xf32>
    %30 = arith.mulf %29, %29 : vector<16x256xf32>
    %31 = vector.shape_cast %30 : vector<16x256xf32> to vector<1x16x256xf32>
    %cst_21 = arith.constant dense<0.000000e+00> : vector<1xf32>
    %32 = vector.multi_reduction <add>, %31, %cst_21 [1, 2] : vector<1x16x256xf32> to vector<1xf32>
    %33 = vector.shape_cast %32 : vector<1xf32> to vector<1x1x1xf32>
    %34 = vector.extract %33[0, 0, 0] : f32 from vector<1x1x1xf32>
    %cst_22 = arith.constant 4.096000e+03 : f32
    %35 = arith.divf %34, %cst_22 : f32
    %cst_23 = arith.constant 9.99999974E-6 : f32
    %36 = arith.addf %35, %cst_23 : f32
    %37 = math.rsqrt %36 : f32
    %38 = vector.broadcast %37 : f32 to vector<16x256xf32>
    %39 = arith.mulf %29, %38 : vector<16x256xf32>
    %c0_24 = arith.constant 0 : index
    %c0_25 = arith.constant 0 : index
    %40 = vector.load %arg8[%c0_24, %c0_25] : memref<16x256xf32, #tpu.memory_space<vmem>>, vector<16x256xf32>
    %41 = arith.mulf %39, %40 : vector<16x256xf32>
    %c0_26 = arith.constant 0 : index
    %c0_27 = arith.constant 0 : index
    %42 = vector.load %arg9[%c0_26, %c0_27] : memref<16x256xf32, #tpu.memory_space<vmem>>, vector<16x256xf32>
    %43 = arith.addf %41, %42 : vector<16x256xf32>
    %c0_28 = arith.constant 0 : index
    %c0_29 = arith.constant 0 : index
    %c0_30 = arith.constant 0 : index
    %44 = vector.load %arg10[%c0_28, %c0_29, %c0_30] : memref<1x16x256xf32, #tpu.memory_space<vmem>>, vector<1x16x256xf32>
    %45 = vector.shape_cast %44 : vector<1x16x256xf32> to vector<16x256xf32>
    %46 = vector.shape_cast %43 : vector<16x256xf32> to vector<1x16x256xf32>
    tpu.vector_store %arg10[%c0_28, %c0_29, %c0_30], %46 {strides = array<i32>} : memref<1x16x256xf32, #tpu.memory_space<vmem>>, vector<1x16x256xf32>,
    return
  }
  func.func @transform_0(%arg0: i32) -> (i32, i32, i32) {
    %c0_i32 = arith.constant 0 : i32
    %c0_i32_0 = arith.constant 0 : i32
    %c0_i32_1 = arith.constant 0 : i32
    return %arg0, %c0_i32, %c0_i32_0 : i32, i32, i32
  }
  func.func @transform_1(%arg0: i32) -> (i32, i32) {
    %c0_i32 = arith.constant 0 : i32
    %c0_i32_0 = arith.constant 0 : i32
    %c0_i32_1 = arith.constant 0 : i32
    return %c0_i32, %c0_i32_0 : i32, i32
  }
  func.func @transform_2(%arg0: i32) -> (i32, i32) {
    %c0_i32 = arith.constant 0 : i32
    %c0_i32_0 = arith.constant 0 : i32
    %c0_i32_1 = arith.constant 0 : i32
    return %c0_i32, %c0_i32_0 : i32, i32
  }
  func.func @transform_3(%arg0: i32) -> (i32, i32) {
    %c0_i32 = arith.constant 0 : i32
    %c0_i32_0 = arith.constant 0 : i32
    %c0_i32_1 = arith.constant 0 : i32
    return %c0_i32, %c0_i32_0 : i32, i32
  }
  func.func @transform_4(%arg0: i32) -> (i32, i32) {
    %c0_i32 = arith.constant 0 : i32
    %c0_i32_0 = arith.constant 0 : i32
    %c0_i32_1 = arith.constant 0 : i32
    return %c0_i32, %c0_i32_0 : i32, i32
  }
  func.func @transform_5(%arg0: i32) -> (i32, i32) {
    %c0_i32 = arith.constant 0 : i32
    %c0_i32_0 = arith.constant 0 : i32
    %c0_i32_1 = arith.constant 0 : i32
    return %c0_i32, %c0_i32_0 : i32, i32
  }
  func.func @transform_6(%arg0: i32) -> (i32, i32) {
    %c0_i32 = arith.constant 0 : i32
    %c0_i32_0 = arith.constant 0 : i32
    %c0_i32_1 = arith.constant 0 : i32
    return %c0_i32, %c0_i32_0 : i32, i32
  }
  func.func @transform_7(%arg0: i32) -> (i32, i32) {
    %c0_i32 = arith.constant 0 : i32
    %c0_i32_0 = arith.constant 0 : i32
    %c0_i32_1 = arith.constant 0 : i32
    return %c0_i32, %c0_i32_0 : i32, i32
  }
  func.func @transform_8(%arg0: i32) -> (i32, i32) {
    %c0_i32 = arith.constant 0 : i32
    %c0_i32_0 = arith.constant 0 : i32
    %c0_i32_1 = arith.constant 0 : i32
    return %c0_i32, %c0_i32_0 : i32, i32
  }
  func.func @transform_9(%arg0: i32) -> (i32, i32, i32) {
    %c0_i32 = arith.constant 0 : i32
    %c0_i32_0 = arith.constant 0 : i32
    %c0_i32_1 = arith.constant 0 : i32
    return %arg0, %c0_i32, %c0_i32_0 : i32, i32, i32
  }
}

</mosaic_0001>

<llo_original>
// kernel: tpu_custom_call.1
$region0: #{tpu_custom_call.1}
  #allocation0 [shape = 'u32[]', space=smem, size = 0x4, offset = 0x4, fixed_abs, tag = 'smem constant byte address 0x4 - core index']
  #allocation1 [shape = 'u32[144,128]{1,0:T(1,128)}', space=vmem, size = 0x12000, scoped, tag = 'internal scratch']
  %s0 = inlined_call_operand.vmem [shape: f32[2,64,8], index: 0, kind: input, shape index: {}]
  %s1 = inlined_call_operand.vmem [shape: f32[128,64], index: 1, kind: input, shape index: {}]
  %s2 = inlined_call_operand.vmem [shape: f32[128,1], index: 2, kind: input, shape index: {}]
  %s3 = inlined_call_operand.vmem [shape: f32[16,8], index: 3, kind: input, shape index: {}]
  %s4 = inlined_call_operand.vmem [shape: f32[16,1], index: 4, kind: input, shape index: {}]
  %s5 = inlined_call_operand.vmem [shape: f32[128,256], index: 5, kind: input, shape index: {}]
  %s6 = inlined_call_operand.vmem [shape: f32[1,256], index: 6, kind: input, shape index: {}]
  %s7 = inlined_call_operand.vmem [shape: f32[16,256], index: 7, kind: input, shape index: {}]
  %s8 = inlined_call_operand.vmem [shape: f32[16,256], index: 8, kind: input, shape index: {}]
  %s9 = inlined_call_operand.hbm [shape: f32[2,16,256], index: 9, kind: output, shape index: {}]
  %s10 = sld [smem:[#allocation0]]
  $region69: #{tpu_custom_call.1} parent=0
    _
  %s12 = ssub.s32 1, %s10
  %s13 = scalar_select 0, %s12, %s10
  $region1: #{tpu_custom_call.1} parent=0
    #allocation2 [shape = 'u8[32768]{0}', space=vmem, size = 0x8000, scoped, tag = 'output window, operand 0']
    #allocation3 [shape = 's32[2]{0}', space=sflag, size = 0x8, scoped, tag = 'scoped memory for tpu_custom_call.1']
    %14 = vsyncpa [#allocation3], 0
    %s15 = scalar_lea.sflag [#allocation3], 1
    %16 = vsyncpa %s15, 0
    loop: start=0, step=1, limit=4
    $region2: #{tpu_custom_call.1} parent=1 // loop_pre_header
      _
    $region3: #{tpu_custom_call.1} parent=1 // loop_header
      %s18 = sphi 0, %s22
      %p19 = scmp.ge.s32.totalorder %s18, 4
      %s28 = sphi 0, %s30
      %s31 = sphi 0, %s28
      %s32 = sphi 0, %s31
      %s48 = sphi 0, %s32
      %s52 = sphi 0, %s52
      %s54 = sphi 0, %s52
      %s55 = sphi 0, %s54
      %s69 = sphi 0, %s55
      %s73 = sphi 0, %s73
      %s75 = sphi 0, %s73
      %s76 = sphi 0, %s75
      %s90 = sphi 0, %s76
      %s94 = sphi 0, %s94
      %s96 = sphi 0, %s94
      %s97 = sphi 0, %s96
      %s111 = sphi 0, %s97
      %s115 = sphi 0, %s115
      %s117 = sphi 0, %s115
      %s118 = sphi 0, %s117
      %s132 = sphi 0, %s118
      %s136 = sphi 0, %s136
      %s138 = sphi 0, %s136
      %s139 = sphi 0, %s138
      %s153 = sphi 0, %s139
      %s157 = sphi 0, %s157
      %s159 = sphi 0, %s157
      %s160 = sphi 0, %s159
      %s174 = sphi 0, %s160
      %s178 = sphi 0, %s178
      %s180 = sphi 0, %s178
      %s181 = sphi 0, %s180
      %s195 = sphi 0, %s181
      %s199 = sphi 0, %s199
      %s201 = sphi 0, %s199
      %s202 = sphi 0, %s201
      %s216 = sphi 0, %s202
      %s222 = sphi 0, %s224
      %s225 = sphi 0, %s222
      %s226 = sphi 0, %s225
      %s242 = sphi 0, %s226
    $region4: #{tpu_custom_call.1} parent=1 // loop_header_branch
      %21 = sbr.rel (%p19) target = $region8
    $region5: #{tpu_custom_call.1} parent=1 // loop_body
      %s23 = ssub.s32 %s18, 1
      %s24 = ssub.s32 %s18, 2
      %s25 = sadd.s32 %s18, 1
      %s26 = ssub.s32 %s18, %s25
      %p27 = scmp.eq.s32.totalorder %s26, 0
      %s29 = sadd.s32 %s28, 1
      %s30 = scalar_select %p27, %s28, %s29
      %p33 = pneg %p27
      %p34 = scmp.eq.s32.totalorder %s18, 1
      %p35 = por %p33, %p34
      %p36 = scmp.ne.s32.totalorder %s28, %s31
      %p37 = scmp.eq.s32.totalorder %s18, 0
      %p38 = por %p36, %p37
      %p39 = scmp.ne.s32.totalorder %s28, %s31
      %p40 = scmp.eq.s32.totalorder %s23, 1
      %p41 = por %p39, %p40
      %p42 = scmp.ne.s32.totalorder %s31, %s32
      %p43 = scmp.eq.s32.totalorder %s23, 0
      %p44 = por %p42, %p43
      %p45 = scmp.ne.s32.totalorder %s31, %s32
      %p46 = scmp.eq.s32.totalorder %s24, 1
      %p47 = por %p45, %p46
      %p49 = scmp.ne.s32.totalorder %s32, %s48
      %p50 = scmp.eq.s32.totalorder %s24, 0
      %p51 = por %p49, %p50
      %s53 = sadd.s32 %s52, 1
      %p56 = scmp.eq.s32.totalorder %s18, 1
      %p57 = scmp.ne.s32.totalorder %s52, %s54
      %p58 = scmp.eq.s32.totalorder %s18, 0
      %p59 = por %p57, %p58
      %p60 = scmp.ne.s32.totalorder %s52, %s54
      %p61 = scmp.eq.s32.totalorder %s23, 1
      %p62 = por %p60, %p61
      %p63 = scmp.ne.s32.totalorder %s54, %s55
      %p64 = scmp.eq.s32.totalorder %s23, 0
      %p65 = por %p63, %p64
      %p66 = scmp.ne.s32.totalorder %s54, %s55
      %p67 = scmp.eq.s32.totalorder %s24, 1
      %p68 = por %p66, %p67
      %p70 = scmp.ne.s32.totalorder %s55, %s69
      %p71 = scmp.eq.s32.totalorder %s24, 0
      %p72 = por %p70, %p71
      %s74 = sadd.s32 %s73, 1
      %p77 = scmp.eq.s32.totalorder %s18, 1
      %p78 = scmp.ne.s32.totalorder %s73, %s75
      %p79 = scmp.eq.s32.totalorder %s18, 0
      %p80 = por %p78, %p79
      %p81 = scmp.ne.s32.totalorder %s73, %s75
      %p82 = scmp.eq.s32.totalorder %s23, 1
      %p83 = por %p81, %p82
      %p84 = scmp.ne.s32.totalorder %s75, %s76
      %p85 = scmp.eq.s32.totalorder %s23, 0
      %p86 = por %p84, %p85
      %p87 = scmp.ne.s32.totalorder %s75, %s76
      %p88 = scmp.eq.s32.totalorder %s24, 1
      %p89 = por %p87, %p88
      %p91 = scmp.ne.s32.totalorder %s76, %s90
      %p92 = scmp.eq.s32.totalorder %s24, 0
      %p93 = por %p91, %p92
      %s95 = sadd.s32 %s94, 1
      %p98 = scmp.eq.s32.totalorder %s18, 1
      %p99 = scmp.ne.s32.totalorder %s94, %s96
      %p100 = scmp.eq.s32.totalorder %s18, 0
      %p101 = por %p99, %p100
      %p102 = scmp.ne.s32.totalorder %s94, %s96
      %p103 = scmp.eq.s32.totalorder %s23, 1
      %p104 = por %p102, %p103
      %p105 = scmp.ne.s32.totalorder %s96, %s97
      %p106 = scmp.eq.s32.totalorder %s23, 0
      %p107 = por %p105, %p106
      %p108 = scmp.ne.s32.totalorder %s96, %s97
      %p109 = scmp.eq.s32.totalorder %s24, 1
      %p110 = por %p108, %p109
      %p112 = scmp.ne.s32.totalorder %s97, %s111
      %p113 = scmp.eq.s32.totalorder %s24, 0
      %p114 = por %p112, %p113
      %s116 = sadd.s32 %s115, 1
      %p119 = scmp.eq.s32.totalorder %s18, 1
      %p120 = scmp.ne.s32.totalorder %s115, %s117
      %p121 = scmp.eq.s32.totalorder %s18, 0
      %p122 = por %p120, %p121
      %p123 = scmp.ne.s32.totalorder %s115, %s117
      %p124 = scmp.eq.s32.totalorder %s23, 1
      %p125 = por %p123, %p124
      %p126 = scmp.ne.s32.totalorder %s117, %s118
      %p127 = scmp.eq.s32.totalorder %s23, 0
      %p128 = por %p126, %p127
      %p129 = scmp.ne.s32.totalorder %s117, %s118
      %p130 = scmp.eq.s32.totalorder %s24, 1
      %p131 = por %p129, %p130
      %p133 = scmp.ne.s32.totalorder %s118, %s132
      %p134 = scmp.eq.s32.totalorder %s24, 0
      %p135 = por %p133, %p134
      %s137 = sadd.s32 %s136, 1
      %p140 = scmp.eq.s32.totalorder %s18, 1
      %p141 = scmp.ne.s32.totalorder %s136, %s138
      %p142 = scmp.eq.s32.totalorder %s18, 0
      %p143 = por %p141, %p142
      %p144 = scmp.ne.s32.totalorder %s136, %s138
      %p145 = scmp.eq.s32.totalorder %s23, 1
      %p146 = por %p144, %p145
      %p147 = scmp.ne.s32.totalorder %s138, %s139
      %p148 = scmp.eq.s32.totalorder %s23, 0
      %p149 = por %p147, %p148
      %p150 = scmp.ne.s32.totalorder %s138, %s139
      %p151 = scmp.eq.s32.totalorder %s24, 1
      %p152 = por %p150, %p151
      %p154 = scmp.ne.s32.totalorder %s139, %s153
      %p155 = scmp.eq.s32.totalorder %s24, 0
      %p156 = por %p154, %p155
      %s158 = sadd.s32 %s157, 1
      %p161 = scmp.eq.s32.totalorder %s18, 1
      %p162 = scmp.ne.s32.totalorder %s157, %s159
      %p163 = scmp.eq.s32.totalorder %s18, 0
      %p164 = por %p162, %p163
      %p165 = scmp.ne.s32.totalorder %s157, %s159
      %p166 = scmp.eq.s32.totalorder %s23, 1
      %p167 = por %p165, %p166
      %p168 = scmp.ne.s32.totalorder %s159, %s160
      %p169 = scmp.eq.s32.totalorder %s23, 0
      %p170 = por %p168, %p169
      %p171 = scmp.ne.s32.totalorder %s159, %s160
      %p172 = scmp.eq.s32.totalorder %s24, 1
      %p173 = por %p171, %p172
      %p175 = scmp.ne.s32.totalorder %s160, %s174
      %p176 = scmp.eq.s32.totalorder %s24, 0
      %p177 = por %p175, %p176
      %s179 = sadd.s32 %s178, 1
      %p182 = scmp.eq.s32.totalorder %s18, 1
      %p183 = scmp.ne.s32.totalorder %s178, %s180
      %p184 = scmp.eq.s32.totalorder %s18, 0
      %p185 = por %p183, %p184
      %p186 = scmp.ne.s32.totalorder %s178, %s180
      %p187 = scmp.eq.s32.totalorder %s23, 1
      %p188 = por %p186, %p187
      %p189 = scmp.ne.s32.totalorder %s180, %s181
      %p190 = scmp.eq.s32.totalorder %s23, 0
      %p191 = por %p189, %p190
      %p192 = scmp.ne.s32.totalorder %s180, %s181
      %p193 = scmp.eq.s32.totalorder %s24, 1
      %p194 = por %p192, %p193
      %p196 = scmp.ne.s32.totalorder %s181, %s195
      %p197 = scmp.eq.s32.totalorder %s24, 0
      %p198 = por %p196, %p197
      %s200 = sadd.s32 %s199, 1
      %p203 = scmp.eq.s32.totalorder %s18, 1
      %p204 = scmp.ne.s32.totalorder %s199, %s201
      %p205 = scmp.eq.s32.totalorder %s18, 0
      %p206 = por %p204, %p205
      %p207 = scmp.ne.s32.totalorder %s199, %s201
      %p208 = scmp.eq.s32.totalorder %s23, 1
      %p209 = por %p207, %p208
      %p210 = scmp.ne.s32.totalorder %s201, %s202
      %p211 = scmp.eq.s32.totalorder %s23, 0
      %p212 = por %p210, %p211
      %p213 = scmp.ne.s32.totalorder %s201, %s202
      %p214 = scmp.eq.s32.totalorder %s24, 1
      %p215 = por %p213, %p214
      %p217 = scmp.ne.s32.totalorder %s202, %s216
      %p218 = scmp.eq.s32.totalorder %s24, 0
      %p219 = por %p217, %p218
      %s220 = ssub.s32 %s18, %s25
      %p221 = scmp.eq.s32.totalorder %s220, 0
      %s223 = sadd.s32 %s222, 1
      %s224 = scalar_select %p221, %s222, %s223
      %p227 = pneg %p221
      %p228 = scmp.eq.s32.totalorder %s18, 1
      %p229 = por %p227, %p228
      %p230 = scmp.ne.s32.totalorder %s222, %s225
      %p231 = scmp.eq.s32.totalorder %s18, 0
      %p232 = por %p230, %p231
      %p233 = scmp.ne.s32.totalorder %s222, %s225
      %p234 = scmp.eq.s32.totalorder %s23, 1
      %p235 = por %p233, %p234
      %p236 = scmp.ne.s32.totalorder %s225, %s226
      %p237 = scmp.eq.s32.totalorder %s23, 0
      %p238 = por %p236, %p237
      %p239 = scmp.ne.s32.totalorder %s225, %s226
      %p240 = scmp.eq.s32.totalorder %s24, 1
      %p241 = por %p239, %p240
      %p243 = scmp.ne.s32.totalorder %s226, %s242
      %p244 = scmp.eq.s32.totalorder %s24, 0
      %p245 = por %p243, %p244
      %p246 = scmp.le.s32.totalorder 1, %s18
      %p247 = scmp.lt.s32.totalorder %s18, 3
      %p248 = pnand %p246, %p247
      %p249 = pneg %p248
      // Predicated region
      $region9: #{tpu_custom_call.1} parent=5 // pred_check
        _
      $region10: #{tpu_custom_call.1} parent=5 // pred_check_branch
        %251 = sbr.rel (%p248) target = $region12
      $region11: #{tpu_custom_call.1} parent=5 // pred_region
        %s252 = ssub.s32 %s18, 1
        // Predicated region
        $region13: #{tpu_custom_call.1} parent=11 // pred_check
          %p253 = pneg %p65
        $region14: #{tpu_custom_call.1} parent=11 // pred_check_branch
          %255 = sbr.rel (%p253) target = $region16
        $region15: #{tpu_custom_call.1} parent=11 // pred_region
          _
        $region16: #{tpu_custom_call.1} parent=11 // pred_fallthru
          _
        // Predicated region
        $region17: #{tpu_custom_call.1} parent=11 // pred_check
          %p256 = pneg %p86
        $region18: #{tpu_custom_call.1} parent=11 // pred_check_branch
          %258 = sbr.rel (%p256) target = $region20
        $region19: #{tpu_custom_call.1} parent=11 // pred_region
          _
        $region20: #{tpu_custom_call.1} parent=11 // pred_fallthru
          _
        // Predicated region
        $region21: #{tpu_custom_call.1} parent=11 // pred_check
          %p259 = pneg %p107
        $region22: #{tpu_custom_call.1} parent=11 // pred_check_branch
          %261 = sbr.rel (%p259) target = $region24
        $region23: #{tpu_custom_call.1} parent=11 // pred_region
          _
        $region24: #{tpu_custom_call.1} parent=11 // pred_fallthru
          _
        // Predicated region
        $region25: #{tpu_custom_call.1} parent=11 // pred_check
          %p262 = pneg %p128
        $region26: #{tpu_custom_call.1} parent=11 // pred_check_branch
          %264 = sbr.rel (%p262) target = $region28
        $region27: #{tpu_custom_call.1} parent=11 // pred_region
          _
        $region28: #{tpu_custom_call.1} parent=11 // pred_fallthru
          _
        // Predicated region
        $region29: #{tpu_custom_call.1} parent=11 // pred_check
          %p265 = pneg %p149
        $region30: #{tpu_custom_call.1} parent=11 // pred_check_branch
          %267 = sbr.rel (%p265) target = $region32
        $region31: #{tpu_custom_call.1} parent=11 // pred_region
          _
        $region32: #{tpu_custom_call.1} parent=11 // pred_fallthru
          _
        // Predicated region
        $region33: #{tpu_custom_call.1} parent=11 // pred_check
          %p268 = pneg %p170
        $region34: #{tpu_custom_call.1} parent=11 // pred_check_branch
          %270 = sbr.rel (%p268) target = $region36
        $region35: #{tpu_custom_call.1} parent=11 // pred_region
          _
        $region36: #{tpu_custom_call.1} parent=11 // pred_fallthru
          _
        // Predicated region
        $region37: #{tpu_custom_call.1} parent=11 // pred_check
          %p271 = pneg %p191
        $region38: #{tpu_custom_call.1} parent=11 // pred_check_branch
          %273 = sbr.rel (%p271) target = $region40
        $region39: #{tpu_custom_call.1} parent=11 // pred_region
          _
        $region40: #{tpu_custom_call.1} parent=11 // pred_fallthru
          _
        // Predicated region
        $region41: #{tpu_custom_call.1} parent=11 // pred_check
          %p274 = pneg %p212
        $region42: #{tpu_custom_call.1} parent=11 // pred_check_branch
          %276 = sbr.rel (%p274) target = $region44
        $region43: #{tpu_custom_call.1} parent=11 // pred_region
          _
        $region44: #{tpu_custom_call.1} parent=11 // pred_fallthru
          _
      $region12: #{tpu_custom_call.1} parent=5 // pred_fallthru
        _
      %p277 = scmp.lt.s32.totalorder %s18, 2
      // Predicated region
      $region45: #{tpu_custom_call.1} parent=5 // pred_check
        %p278 = pneg %p277
      $region46: #{tpu_custom_call.1} parent=5 // pred_check_branch
        %280 = sbr.rel (%p278) target = $region48
      $region47: #{tpu_custom_call.1} parent=5 // pred_region
        // Predicated region
        $region49: #{tpu_custom_call.1} parent=47 // pred_check
          %p281 = pneg %p38
        $region50: #{tpu_custom_call.1} parent=47 // pred_check_branch
          %283 = sbr.rel (%p281) target = $region52
        $region51: #{tpu_custom_call.1} parent=47 // pred_region
          %p284 = scmp.lt.s32.totalorder %s18, 1
          %s285 = scalar_select %p284, %s18, 1
          %s286 = smul.addr %s285, 8
          %s287 = smul.addr %s286, 8
          %s288 = scalar_lea.vmem %s0, %s287
        $region52: #{tpu_custom_call.1} parent=47 // pred_fallthru
          _
      $region48: #{tpu_custom_call.1} parent=5 // pred_fallthru
        _
      %p289 = scmp.le.s32.totalorder 1, %s18
      %p290 = scmp.lt.s32.totalorder %s18, 3
      %p291 = pnand %p289, %p290
      %p292 = pneg %p291
      // Predicated region
      $region53: #{tpu_custom_call.1} parent=5 // pred_check
        _
      $region54: #{tpu_custom_call.1} parent=5 // pred_check_branch
        %294 = sbr.rel (%p291) target = $region56
      $region55: #{tpu_custom_call.1} parent=5 // pred_region
        %s295 = ssub.s32 %s18, 1
        %p296 = scmp.lt.s32.totalorder %s23, 1
        %s297 = scalar_select %p296, %s23, 1
        %s298 = smul.addr %s297, 8
        %s299 = smul.addr %s298, 8
        %s300 = scalar_lea.vmem %s0, %s299
        %p301 = pneg %p44
        %p302 = pneg %p41
        %p303 = pneg %p65
        %p304 = pneg %p62
        %p305 = pneg %p86
        %p306 = pneg %p83
        %p307 = pneg %p107
        %p308 = pneg %p104
        %p309 = pneg %p128
        %p310 = pneg %p125
        %p311 = pneg %p149
        %p312 = pneg %p146
        %p313 = pneg %p170
        %p314 = pneg %p167
        %p315 = pneg %p191
        %p316 = pneg %p188
        %p317 = pneg %p212
        %p318 = pneg %p209
        %p319 = pneg %p238
        %p320 = pneg %p235
        %s321 = sand.u32 %s225, 1
        %s322 = scalar_lea.sflag [#allocation3], %s321
        %s323 = sand.u32 %s225, 1
        %s324 = smul.addr %s323, 32
        %s325 = scalar_lea.vmem [#allocation2], %s324
        %p326 = scmp.lt.s32.totalorder %s23, 1
        %s327 = scalar_select %p326, %s23, 1
        %s328 = smul.addr %s327, 8
        %s329 = smul.addr %s328, 8
        %s330 = scalar_lea.vmem %s0, %s329
        %v331 = vld [vmem:[%s330] sm:$0xff]
        %v332 = vld [vmem:[%s330 + $0x8] sm:$0xff]
        %v333 = vld [vmem:[%s330 + $0x10] sm:$0xff]
        %v334 = vld [vmem:[%s330 + $0x18] sm:$0xff]
        %v335 = vld [vmem:[%s330 + $0x20] sm:$0xff]
        %v336 = vld [vmem:[%s330 + $0x28] sm:$0xff]
        %v337 = vld [vmem:[%s330 + $0x30] sm:$0xff]
        %v338 = vld [vmem:[%s330 + $0x38] sm:$0xff]
        %v339 = vld [vmem:[%s1] sm:$0xff]
        %v340 = vld [vmem:[%s1 + $0x8] sm:$0xff]
        %v341 = vld [vmem:[%s1 + $0x10] sm:$0xff]
        %v342 = vld [vmem:[%s1 + $0x18] sm:$0xff]
        %v343 = vld [vmem:[%s1 + $0x20] sm:$0xff]
        %v344 = vld [vmem:[%s1 + $0x28] sm:$0xff]
        %v345 = vld [vmem:[%s1 + $0x30] sm:$0xff]
        %v346 = vld [vmem:[%s1 + $0x38] sm:$0xff]
        %v347 = vld [vmem:[%s1 + $0x40] sm:$0xff]
        %v348 = vld [vmem:[%s1 + $0x48] sm:$0xff]
        %v349 = vld [vmem:[%s1 + $0x50] sm:$0xff]
        %v350 = vld [vmem:[%s1 + $0x58] sm:$0xff]
        %v351 = vld [vmem:[%s1 + $0x60] sm:$0xff]
        %v352 = vld [vmem:[%s1 + $0x68] sm:$0xff]
        %v353 = vld [vmem:[%s1 + $0x70] sm:$0xff]
        %v354 = vld [vmem:[%s1 + $0x78] sm:$0xff]
        %v355 = vld [vmem:[%s2] sm:$0xff]
        %v356 = vld [vmem:[%s2 + $0x8] sm:$0xff]
        %v357 = vld [vmem:[%s2 + $0x10] sm:$0xff]
        %v358 = vld [vmem:[%s2 + $0x18] sm:$0xff]
        %v359 = vld [vmem:[%s2 + $0x20] sm:$0xff]
        %v360 = vld [vmem:[%s2 + $0x28] sm:$0xff]
        %v361 = vld [vmem:[%s2 + $0x30] sm:$0xff]
        %v362 = vld [vmem:[%s2 + $0x38] sm:$0xff]
        %v363 = vld [vmem:[%s2 + $0x40] sm:$0xff]
        %v364 = vld [vmem:[%s2 + $0x48] sm:$0xff]
        %v365 = vld [vmem:[%s2 + $0x50] sm:$0xff]
        %v366 = vld [vmem:[%s2 + $0x58] sm:$0xff]
        %v367 = vld [vmem:[%s2 + $0x60] sm:$0xff]
        %v368 = vld [vmem:[%s2 + $0x68] sm:$0xff]
        %v369 = vld [vmem:[%s2 + $0x70] sm:$0xff]
        %v370 = vld [vmem:[%s2 + $0x78] sm:$0xff]
        %372 = vset.pattern.permute.xlu0 0
        %373 = vperm.xlu0 %372, %v355
        %v374 = vpop.permute.xlu0 %373
        %377 = vset.pattern.permute.xlu0 0
        %378 = vperm.xlu0 %377, %v356
        %v379 = vpop.permute.xlu0 %378
        %382 = vset.pattern.permute.xlu0 0
        %383 = vperm.xlu0 %382, %v357
        %v384 = vpop.permute.xlu0 %383
        %387 = vset.pattern.permute.xlu0 0
        %388 = vperm.xlu0 %387, %v358
        %v389 = vpop.permute.xlu0 %388
        %392 = vset.pattern.permute.xlu0 0
        %393 = vperm.xlu0 %392, %v359
        %v394 = vpop.permute.xlu0 %393
        %397 = vset.pattern.permute.xlu0 0
        %398 = vperm.xlu0 %397, %v360
        %v399 = vpop.permute.xlu0 %398
        %402 = vset.pattern.permute.xlu0 0
        %403 = vperm.xlu0 %402, %v361
        %v404 = vpop.permute.xlu0 %403
        %407 = vset.pattern.permute.xlu0 0
        %408 = vperm.xlu0 %407, %v362
        %v409 = vpop.permute.xlu0 %408
        %412 = vset.pattern.permute.xlu0 0
        %413 = vperm.xlu0 %412, %v363
        %v414 = vpop.permute.xlu0 %413
        %417 = vset.pattern.permute.xlu0 0
        %418 = vperm.xlu0 %417, %v364
        %v419 = vpop.permute.xlu0 %418
        %422 = vset.pattern.permute.xlu0 0
        %423 = vperm.xlu0 %422, %v365
        %v424 = vpop.permute.xlu0 %423
        %427 = vset.pattern.permute.xlu0 0
        %428 = vperm.xlu0 %427, %v366
        %v429 = vpop.permute.xlu0 %428
        %432 = vset.pattern.permute.xlu0 0
        %433 = vperm.xlu0 %432, %v367
        %v434 = vpop.permute.xlu0 %433
        %437 = vset.pattern.permute.xlu0 0
        %438 = vperm.xlu0 %437, %v368
        %v439 = vpop.permute.xlu0 %438
        %442 = vset.pattern.permute.xlu0 0
        %443 = vperm.xlu0 %442, %v369
        %v444 = vpop.permute.xlu0 %443
        %447 = vset.pattern.permute.xlu0 0
        %448 = vperm.xlu0 %447, %v370
        %v449 = vpop.permute.xlu0 %448
        %vm451 = vcmask 523264
        %v453 = vsel %vm451, %v339, 0
        %v456 = vsel %vm451, %v340, 0
        %v459 = vsel %vm451, %v341, 0
        %v462 = vsel %vm451, %v342, 0
        %v465 = vsel %vm451, %v343, 0
        %v468 = vsel %vm451, %v344, 0
        %v471 = vsel %vm451, %v345, 0
        %v474 = vsel %vm451, %v346, 0
        %v477 = vsel %vm451, %v347, 0
        %v480 = vsel %vm451, %v348, 0
        %v483 = vsel %vm451, %v349, 0
        %v486 = vsel %vm451, %v350, 0
        %v489 = vsel %vm451, %v351, 0
        %v492 = vsel %vm451, %v352, 0
        %v495 = vsel %vm451, %v353, 0
        %v498 = vsel %vm451, %v354, 0
        %500 = vmatprep.subr.mxu0 0.0
        %v501 = vand.u32 %v331, 4294901760
        %502 = vmatpush1.msra.mxu0 %v501
        %503 = vmatprep.subr.mxu0 0.0
        %v504 = vand.u32 %v332, 4294901760
        %505 = vmatpush1.msra.mxu0 %v504
        %506 = vmatprep.subr.mxu0 0.0
        %v507 = vand.u32 %v333, 4294901760
        %508 = vmatpush1.msra.mxu0 %v507
        %509 = vmatprep.subr.mxu0 0.0
        %v510 = vand.u32 %v334, 4294901760
        %511 = vmatpush1.msra.mxu0 %v510
        %512 = vmatprep.subr.mxu0 0.0
        %v513 = vand.u32 %v335, 4294901760
        %514 = vmatpush1.msra.mxu0 %v513
        %515 = vmatprep.subr.mxu0 0.0
        %v516 = vand.u32 %v336, 4294901760
        %517 = vmatpush1.msra.mxu0 %v516
        %518 = vmatprep.subr.mxu0 0.0
        %v519 = vand.u32 %v337, 4294901760
        %520 = vmatpush1.msra.mxu0 %v519
        %521 = vmatprep.subr.mxu0 0.0
        %v522 = vand.u32 %v338, 4294901760
        %523 = vmatpush1.msra.mxu0 %v522
        %524 = vmatprep.subr.mxu0 0.0
        %525 = vmatpush1.msra.mxu0 0.0
        %526 = vmatprep.subr.mxu0 0.0
        %527 = vmatpush1.msra.mxu0 0.0
        %528 = vmatprep.subr.mxu0 0.0
        %529 = vmatpush1.msra.mxu0 0.0
        %530 = vmatprep.subr.mxu0 0.0
        %531 = vmatpush1.msra.mxu0 0.0
        %532 = vmatprep.subr.mxu0 0.0
        %533 = vmatpush1.msra.mxu0 0.0
        %534 = vmatprep.subr.mxu0 0.0
        %535 = vmatpush1.msra.mxu0 0.0
        %536 = vmatprep.subr.mxu0 0.0
        %537 = vmatpush1.msra.mxu0 0.0
        %538 = vmatprep.subr.mxu0 0.0
        %539 = vmatpush1.msra.mxu0 0.0
        %540 = vmatprep.subr.mxu0 0.0
        %541 = vmatpush1.msra.mxu0 0.0
        %542 = vmatprep.subr.mxu0 0.0
        %543 = vmatpush1.msra.mxu0 0.0
        %544 = vmatprep.subr.mxu0 0.0
        %545 = vmatpush1.msra.mxu0 0.0
        %546 = vmatprep.subr.mxu0 0.0
        %547 = vmatpush1.msra.mxu0 0.0
        %548 = vmatprep.subr.mxu0 0.0
        %549 = vmatpush1.msra.mxu0 0.0
        %550 = vmatprep.subr.mxu0 0.0
        %551 = vmatpush1.msra.mxu0 0.0
        %552 = vmatprep.subr.mxu0 0.0
        %553 = vmatpush1.msra.mxu0 0.0
        %554 = vmatprep.subr.mxu0 0.0
        %555 = vmatpush1.msra.mxu0 0.0
        %556 = vmatprep.subr.mxu0 0.0
        %557 = vmatpush1.msra.mxu0 0.0
        %558 = vmatprep.subr.mxu0 0.0
        %559 = vmatpush1.msra.mxu0 0.0
        %560 = vmatprep.subr.mxu0 0.0
        %561 = vmatpush1.msra.mxu0 0.0
        %562 = vmatprep.subr.mxu0 0.0
        %563 = vmatpush1.msra.mxu0 0.0
        %564 = vmatprep.subr.mxu0 0.0
        %565 = vmatpush1.msra.mxu0 0.0
        %566 = vmatprep.subr.mxu0 0.0
        %567 = vmatpush1.msra.mxu0 0.0
        %568 = vmatprep.subr.mxu0 0.0
        %569 = vmatpush1.msra.mxu0 0.0
        %570 = vmatprep.subr.mxu0 0.0
        %571 = vmatpush1.msra.mxu0 0.0
        %572 = vmatprep.mubr.f32.mxu0 0.0
        %v573 = vand.u32 %v453, 4294901760
        %v574 = vsub.f32 %v453, %v573
        %v575 = vand.u32 %v574, 4294901760
        %v576 = vsub.f32 %v574, %v575
        %v577 = vand.u32 %v576, 4294901760
        %578 = vmatmul.mubr.f32.gmra.mrb[0].mxu0 %v577
        %v579 = vpop.f32.mrb[0].mxu0
        %v580 = vadd.f32 %v374, %v579
        %v581 = vpop.f32.mrb[0].mxu0
        %582 = vmatprep.mubr.f32.mxu0 0.0
        %v583 = vand.u32 %v456, 4294901760
        %v584 = vsub.f32 %v456, %v583
        %v585 = vand.u32 %v584, 4294901760
        %v586 = vsub.f32 %v584, %v585
        %v587 = vand.u32 %v586, 4294901760
        %588 = vmatmul.mubr.f32.gmra.mrb[0].mxu0 %v587
        %v589 = vpop.f32.mrb[0].mxu0
        %v590 = vadd.f32 %v379, %v589
        %v591 = vpop.f32.mrb[0].mxu0
        %592 = vmatprep.mubr.f32.mxu0 0.0
        %v593 = vand.u32 %v459, 4294901760
        %v594 = vsub.f32 %v459, %v593
        %v595 = vand.u32 %v594, 4294901760
        %v596 = vsub.f32 %v594, %v595
        %v597 = vand.u32 %v596, 4294901760
        %598 = vmatmul.mubr.f32.gmra.mrb[0].mxu0 %v597
        %v599 = vpop.f32.mrb[0].mxu0
        %v600 = vadd.f32 %v384, %v599
        %v601 = vpop.f32.mrb[0].mxu0
        %602 = vmatprep.mubr.f32.mxu0 0.0
        %v603 = vand.u32 %v462, 4294901760
        %v604 = vsub.f32 %v462, %v603
        %v605 = vand.u32 %v604, 4294901760
        %v606 = vsub.f32 %v604, %v605
        %v607 = vand.u32 %v606, 4294901760
        %608 = vmatmul.mubr.f32.gmra.mrb[0].mxu0 %v607
        %v609 = vpop.f32.mrb[0].mxu0
        %v610 = vadd.f32 %v389, %v609
        %v611 = vpop.f32.mrb[0].mxu0
        %612 = vmatprep.mubr.f32.mxu0 0.0
        %v613 = vand.u32 %v465, 4294901760
        %v614 = vsub.f32 %v465, %v613
        %v615 = vand.u32 %v614, 4294901760
        %v616 = vsub.f32 %v614, %v615
        %v617 = vand.u32 %v616, 4294901760
        %618 = vmatmul.mubr.f32.gmra.mrb[0].mxu0 %v617
        %v619 = vpop.f32.mrb[0].mxu0
        %v620 = vadd.f32 %v394, %v619
        %v621 = vpop.f32.mrb[0].mxu0
        %622 = vmatprep.mubr.f32.mxu0 0.0
        %v623 = vand.u32 %v468, 4294901760
        %v624 = vsub.f32 %v468, %v623
        %v625 = vand.u32 %v624, 4294901760
        %v626 = vsub.f32 %v624, %v625
        %v627 = vand.u32 %v626, 4294901760
        %628 = vmatmul.mubr.f32.gmra.mrb[0].mxu0 %v627
        %v629 = vpop.f32.mrb[0].mxu0
        %v630 = vadd.f32 %v399, %v629
        %v631 = vpop.f32.mrb[0].mxu0
        %632 = vmatprep.mubr.f32.mxu0 0.0
        %v633 = vand.u32 %v471, 4294901760
        %v634 = vsub.f32 %v471, %v633
        %v635 = vand.u32 %v634, 4294901760
        %v636 = vsub.f32 %v634, %v635
        %v637 = vand.u32 %v636, 4294901760
        %638 = vmatmul.mubr.f32.gmra.mrb[0].mxu0 %v637
        %v639 = vpop.f32.mrb[0].mxu0
        %v640 = vadd.f32 %v404, %v639
        %v641 = vpop.f32.mrb[0].mxu0
        %642 = vmatprep.mubr.f32.mxu0 0.0
        %v643 = vand.u32 %v474, 4294901760
        %v644 = vsub.f32 %v474, %v643
        %v645 = vand.u32 %v644, 4294901760
        %v646 = vsub.f32 %v644, %v645
        %v647 = vand.u32 %v646, 4294901760
        %648 = vmatmul.mubr.f32.gmra.mrb[0].mxu0 %v647
        %v649 = vpop.f32.mrb[0].mxu0
        %v650 = vadd.f32 %v409, %v649
        %v651 = vpop.f32.mrb[0].mxu0
        %652 = vmatprep.mubr.f32.mxu0 0.0
        %v653 = vand.u32 %v477, 4294901760
        %v654 = vsub.f32 %v477, %v653
        %v655 = vand.u32 %v654, 4294901760
        %v656 = vsub.f32 %v654, %v655
        %v657 = vand.u32 %v656, 4294901760
        %658 = vmatmul.mubr.f32.gmra.mrb[0].mxu0 %v657
        %v659 = vpop.f32.mrb[0].mxu0
        %v660 = vadd.f32 %v414, %v659
        %v661 = vpop.f32.mrb[0].mxu0
        %662 = vmatprep.mubr.f32.mxu0 0.0
        %v663 = vand.u32 %v480, 4294901760
        %v664 = vsub.f32 %v480, %v663
        %v665 = vand.u32 %v664, 4294901760
        %v666 = vsub.f32 %v664, %v665
        %v667 = vand.u32 %v666, 4294901760
        %668 = vmatmul.mubr.f32.gmra.mrb[0].mxu0 %v667
        %v669 = vpop.f32.mrb[0].mxu0
        %v670 = vadd.f32 %v419, %v669
        %v671 = vpop.f32.mrb[0].mxu0
        %672 = vmatprep.mubr.f32.mxu0 0.0
        %v673 = vand.u32 %v483, 4294901760
        %v674 = vsub.f32 %v483, %v673
        %v675 = vand.u32 %v674, 4294901760
        %v676 = vsub.f32 %v674, %v675
        %v677 = vand.u32 %v676, 4294901760
        %678 = vmatmul.mubr.f32.gmra.mrb[0].mxu0 %v677
        %v679 = vpop.f32.mrb[0].mxu0
        %v680 = vadd.f32 %v424, %v679
        %v681 = vpop.f32.mrb[0].mxu0
        %682 = vmatprep.mubr.f32.mxu0 0.0
        %v683 = vand.u32 %v486, 4294901760
        %v684 = vsub.f32 %v486, %v683
        %v685 = vand.u32 %v684, 4294901760
        %v686 = vsub.f32 %v684, %v685
        %v687 = vand.u32 %v686, 4294901760
        %688 = vmatmul.mubr.f32.gmra.mrb[0].mxu0 %v687
        %v689 = vpop.f32.mrb[0].mxu0
        %v690 = vadd.f32 %v429, %v689
        %v691 = vpop.f32.mrb[0].mxu0
        %692 = vmatprep.mubr.f32.mxu0 0.0
        %v693 = vand.u32 %v489, 4294901760
        %v694 = vsub.f32 %v489, %v693
        %v695 = vand.u32 %v694, 4294901760
        %v696 = vsub.f32 %v694, %v695
        %v697 = vand.u32 %v696, 4294901760
        %698 = vmatmul.mubr.f32.gmra.mrb[0].mxu0 %v697
        %v699 = vpop.f32.mrb[0].mxu0
        %v700 = vadd.f32 %v434, %v699
        %v701 = vpop.f32.mrb[0].mxu0
        %702 = vmatprep.mubr.f32.mxu0 0.0
        %v703 = vand.u32 %v492, 4294901760
        %v704 = vsub.f32 %v492, %v703
        %v705 = vand.u32 %v704, 4294901760
        %v706 = vsub.f32 %v704, %v705
        %v707 = vand.u32 %v706, 4294901760
        %708 = vmatmul.mubr.f32.gmra.mrb[0].mxu0 %v707
        %v709 = vpop.f32.mrb[0].mxu0
        %v710 = vadd.f32 %v439, %v709
        %v711 = vpop.f32.mrb[0].mxu0
        %712 = vmatprep.mubr.f32.mxu0 0.0
        %v713 = vand.u32 %v495, 4294901760
        %v714 = vsub.f32 %v495, %v713
        %v715 = vand.u32 %v714, 4294901760
        %v716 = vsub.f32 %v714, %v715
        %v717 = vand.u32 %v716, 4294901760
        %718 = vmatmul.mubr.f32.gmra.mrb[0].mxu0 %v717
        %v719 = vpop.f32.mrb[0].mxu0
        %v720 = vadd.f32 %v444, %v719
        %v721 = vpop.f32.mrb[0].mxu0
        %722 = vmatprep.mubr.f32.mxu0 0.0
        %v723 = vand.u32 %v498, 4294901760
        %v724 = vsub.f32 %v498, %v723
        %v725 = vand.u32 %v724, 4294901760
        %v726 = vsub.f32 %v724, %v725
        %v727 = vand.u32 %v726, 4294901760
        %728 = vmatmul.mubr.f32.gmra.mrb[0].mxu0 %v727
        %v729 = vpop.f32.mrb[0].mxu0
        %v730 = vadd.f32 %v449, %v729
        %v731 = vpop.f32.mrb[0].mxu0
        %732 = vdwg.mxu0
        %733 = vmatprep.subr.mxu0 0.0
        %v734 = vand.u32 %v331, 4294901760
        %v735 = vsub.f32 %v331, %v734
        %v736 = vand.u32 %v735, 4294901760
        %v737 = vsub.f32 %v735, %v736
        %v738 = vand.u32 %v737, 4294901760
        %739 = vmatpush1.msra.mxu0 %v738
        %740 = vmatprep.subr.mxu0 0.0
        %v741 = vand.u32 %v332, 4294901760
        %v742 = vsub.f32 %v332, %v741
        %v743 = vand.u32 %v742, 4294901760
        %v744 = vsub.f32 %v742, %v743
        %v745 = vand.u32 %v744, 4294901760
        %746 = vmatpush1.msra.mxu0 %v745
        %747 = vmatprep.subr.mxu0 0.0
        %v748 = vand.u32 %v333, 4294901760
        %v749 = vsub.f32 %v333, %v748
        %v750 = vand.u32 %v749, 4294901760
        %v751 = vsub.f32 %v749, %v750
        %v752 = vand.u32 %v751, 4294901760
        %753 = vmatpush1.msra.mxu0 %v752
        %754 = vmatprep.subr.mxu0 0.0
        %v755 = vand.u32 %v334, 4294901760
        %v756 = vsub.f32 %v334, %v755
        %v757 = vand.u32 %v756, 4294901760
        %v758 = vsub.f32 %v756, %v757
        %v759 = vand.u32 %v758, 4294901760
        %760 = vmatpush1.msra.mxu0 %v759
        %761 = vmatprep.subr.mxu0 0.0
        %v762 = vand.u32 %v335, 4294901760
        %v763 = vsub.f32 %v335, %v762
        %v764 = vand.u32 %v763, 4294901760
        %v765 = vsub.f32 %v763, %v764
        %v766 = vand.u32 %v765, 4294901760
        %767 = vmatpush1.msra.mxu0 %v766
        %768 = vmatprep.subr.mxu0 0.0
        %v769 = vand.u32 %v336, 4294901760
        %v770 = vsub.f32 %v336, %v769
        %v771 = vand.u32 %v770, 4294901760
        %v772 = vsub.f32 %v770, %v771
        %v773 = vand.u32 %v772, 4294901760
        %774 = vmatpush1.msra.mxu0 %v773
        %775 = vmatprep.subr.mxu0 0.0
        %v776 = vand.u32 %v337, 4294901760
        %v777 = vsub.f32 %v337, %v776
        %v778 = vand.u32 %v777, 4294901760
        %v779 = vsub.f32 %v777, %v778
        %v780 = vand.u32 %v779, 4294901760
        %781 = vmatpush1.msra.mxu0 %v780
        %782 = vmatprep.subr.mxu0 0.0
        %v783 = vand.u32 %v338, 4294901760
        %v784 = vsub.f32 %v338, %v783
        %v785 = vand.u32 %v784, 4294901760
        %v786 = vsub.f32 %v784, %v785
        %v787 = vand.u32 %v786, 4294901760
        %788 = vmatpush1.msra.mxu0 %v787
        %789 = vmatprep.subr.mxu0 0.0
        %790 = vmatpush1.msra.mxu0 0.0
        %791 = vmatprep.subr.mxu0 0.0
        %792 = vmatpush1.msra.mxu0 0.0
        %793 = vmatprep.subr.mxu0 0.0
        %794 = vmatpush1.msra.mxu0 0.0
        %795 = vmatprep.subr.mxu0 0.0
        %796 = vmatpush1.msra.mxu0 0.0
        %797 = vmatprep.subr.mxu0 0.0
        %798 = vmatpush1.msra.mxu0 0.0
        %799 = vmatprep.subr.mxu0 0.0
        %800 = vmatpush1.msra.mxu0 0.0
        %801 = vmatprep.subr.mxu0 0.0
        %802 = vmatpush1.msra.mxu0 0.0
        %803 = vmatprep.subr.mxu0 0.0
        %804 = vmatpush1.msra.mxu0 0.0
        %805 = vmatprep.subr.mxu0 0.0
        %806 = vmatpush1.msra.mxu0 0.0
        %807 = vmatprep.subr.mxu0 0.0
        %808 = vmatpush1.msra.mxu0 0.0
        %809 = vmatprep.subr.mxu0 0.0
        %810 = vmatpush1.msra.mxu0 0.0
        %811 = vmatprep.subr.mxu0 0.0
        %812 = vmatpush1.msra.mxu0 0.0
        %813 = vmatprep.subr.mxu0 0.0
        %814 = vmatpush1.msra.mxu0 0.0
        %815 = vmatprep.subr.mxu0 0.0
        %816 = vmatpush1.msra.mxu0 0.0
        %817 = vmatprep.subr.mxu0 0.0
        %818 = vmatpush1.msra.mxu0 0.0
        %819 = vmatprep.subr.mxu0 0.0
        %820 = vmatpush1.msra.mxu0 0.0
        %821 = vmatprep.subr.mxu0 0.0
        %822 = vmatpush1.msra.mxu0 0.0
        %823 = vmatprep.subr.mxu0 0.0
        %824 = vmatpush1.msra.mxu0 0.0
        %825 = vmatprep.subr.mxu0 0.0
        %826 = vmatpush1.msra.mxu0 0.0
        %827 = vmatprep.subr.mxu0 0.0
        %828 = vmatpush1.msra.mxu0 0.0
        %829 = vmatprep.subr.mxu0 0.0
        %830 = vmatpush1.msra.mxu0 0.0
        %831 = vmatprep.subr.mxu0 0.0
        %832 = vmatpush1.msra.mxu0 0.0
        %833 = vmatprep.subr.mxu0 0.0
        %834 = vmatpush1.msra.mxu0 0.0
        %835 = vmatprep.subr.mxu0 0.0
        %836 = vmatpush1.msra.mxu0 0.0
        %837 = vmatprep.mubr.f32.mxu0 0.0
        %v838 = vand.u32 %v453, 4294901760
        %839 = vmatmul.mubr.f32.gmra.mrb[0].mxu0 %v838
        %v840 = vpop.f32.mrb[0].mxu0
        %v841 = vadd.f32 %v580, %v840
        %v842 = vpop.f32.mrb[0].mxu0
        %843 = vmatprep.mubr.f32.mxu0 0.0
        %v844 = vand.u32 %v456, 4294901760
        %845 = vmatmul.mubr.f32.gmra.mrb[0].mxu0 %v844
        %v846 = vpop.f32.mrb[0].mxu0
        %v847 = vadd.f32 %v590, %v846
        %v848 = vpop.f32.mrb[0].mxu0
        %849 = vmatprep.mubr.f32.mxu0 0.0
        %v850 = vand.u32 %v459, 4294901760
        %851 = vmatmul.mubr.f32.gmra.mrb[0].mxu0 %v850
        %v852 = vpop.f32.mrb[0].mxu0
        %v853 = vadd.f32 %v600, %v852
        %v854 = vpop.f32.mrb[0].mxu0
        %855 = vmatprep.mubr.f32.mxu0 0.0
        %v856 = vand.u32 %v462, 4294901760
        %857 = vmatmul.mubr.f32.gmra.mrb[0].mxu0 %v856
        %v858 = vpop.f32.mrb[0].mxu0
        %v859 = vadd.f32 %v610, %v858
        %v860 = vpop.f32.mrb[0].mxu0
        %861 = vmatprep.mubr.f32.mxu0 0.0
        %v862 = vand.u32 %v465, 4294901760
        %863 = vmatmul.mubr.f32.gmra.mrb[0].mxu0 %v862
        %v864 = vpop.f32.mrb[0].mxu0
        %v865 = vadd.f32 %v620, %v864
        %v866 = vpop.f32.mrb[0].mxu0
        %867 = vmatprep.mubr.f32.mxu0 0.0
        %v868 = vand.u32 %v468, 4294901760
        %869 = vmatmul.mubr.f32.gmra.mrb[0].mxu0 %v868
        %v870 = vpop.f32.mrb[0].mxu0
        %v871 = vadd.f32 %v630, %v870
        %v872 = vpop.f32.mrb[0].mxu0
        %873 = vmatprep.mubr.f32.mxu0 0.0
        %v874 = vand.u32 %v471, 4294901760
        %875 = vmatmul.mubr.f32.gmra.mrb[0].mxu0 %v874
        %v876 = vpop.f32.mrb[0].mxu0
        %v877 = vadd.f32 %v640, %v876
        %v878 = vpop.f32.mrb[0].mxu0
        %879 = vmatprep.mubr.f32.mxu0 0.0
        %v880 = vand.u32 %v474, 4294901760
        %881 = vmatmul.mubr.f32.gmra.mrb[0].mxu0 %v880
        %v882 = vpop.f32.mrb[0].mxu0
        %v883 = vadd.f32 %v650, %v882
        %v884 = vpop.f32.mrb[0].mxu0
        %885 = vmatprep.mubr.f32.mxu0 0.0
        %v886 = vand.u32 %v477, 4294901760
        %887 = vmatmul.mubr.f32.gmra.mrb[0].mxu0 %v886
        %v888 = vpop.f32.mrb[0].mxu0
        %v889 = vadd.f32 %v660, %v888
        %v890 = vpop.f32.mrb[0].mxu0
        %891 = vmatprep.mubr.f32.mxu0 0.0
        %v892 = vand.u32 %v480, 4294901760
        %893 = vmatmul.mubr.f32.gmra.mrb[0].mxu0 %v892
        %v894 = vpop.f32.mrb[0].mxu0
        %v895 = vadd.f32 %v670, %v894
        %v896 = vpop.f32.mrb[0].mxu0
        %897 = vmatprep.mubr.f32.mxu0 0.0
        %v898 = vand.u32 %v483, 4294901760
        %899 = vmatmul.mubr.f32.gmra.mrb[0].mxu0 %v898
        %v900 = vpop.f32.mrb[0].mxu0
        %v901 = vadd.f32 %v680, %v900
        %v902 = vpop.f32.mrb[0].mxu0
        %903 = vmatprep.mubr.f32.mxu0 0.0
        %v904 = vand.u32 %v486, 4294901760
        %905 = vmatmul.mubr.f32.gmra.mrb[0].mxu0 %v904
        %v906 = vpop.f32.mrb[0].mxu0
        %v907 = vadd.f32 %v690, %v906
        %v908 = vpop.f32.mrb[0].mxu0
        %909 = vmatprep.mubr.f32.mxu0 0.0
        %v910 = vand.u32 %v489, 4294901760
        %911 = vmatmul.mubr.f32.gmra.mrb[0].mxu0 %v910
        %v912 = vpop.f32.mrb[0].mxu0
        %v913 = vadd.f32 %v700, %v912
        %v914 = vpop.f32.mrb[0].mxu0
        %915 = vmatprep.mubr.f32.mxu0 0.0
        %v916 = vand.u32 %v492, 4294901760
        %917 = vmatmul.mubr.f32.gmra.mrb[0].mxu0 %v916
        %v918 = vpop.f32.mrb[0].mxu0
        %v919 = vadd.f32 %v710, %v918
        %v920 = vpop.f32.mrb[0].mxu0
        %921 = vmatprep.mubr.f32.mxu0 0.0
        %v922 = vand.u32 %v495, 4294901760
        %923 = vmatmul.mubr.f32.gmra.mrb[0].mxu0 %v922
        %v924 = vpop.f32.mrb[0].mxu0
        %v925 = vadd.f32 %v720, %v924
        %v926 = vpop.f32.mrb[0].mxu0
        %927 = vmatprep.mubr.f32.mxu0 0.0
        %v928 = vand.u32 %v498, 4294901760
        %929 = vmatmul.mubr.f32.gmra.mrb[0].mxu0 %v928
        %v930 = vpop.f32.mrb[0].mxu0
        %v931 = vadd.f32 %v730, %v930
        %v932 = vpop.f32.mrb[0].mxu0
        %933 = vdwg.mxu0
        %934 = vmatprep.subr.mxu0 0.0
        %v935 = vand.u32 %v331, 4294901760
        %v936 = vsub.f32 %v331, %v935
        %937 = vmatpush1.msra.mxu0 %v936
        %938 = vmatprep.subr.mxu0 0.0
        %v939 = vand.u32 %v332, 4294901760
        %v940 = vsub.f32 %v332, %v939
        %941 = vmatpush1.msra.mxu0 %v940
        %942 = vmatprep.subr.mxu0 0.0
        %v943 = vand.u32 %v333, 4294901760
        %v944 = vsub.f32 %v333, %v943
        %945 = vmatpush1.msra.mxu0 %v944
        %946 = vmatprep.subr.mxu0 0.0
        %v947 = vand.u32 %v334, 4294901760
        %v948 = vsub.f32 %v334, %v947
        %949 = vmatpush1.msra.mxu0 %v948
        %950 = vmatprep.subr.mxu0 0.0
        %v951 = vand.u32 %v335, 4294901760
        %v952 = vsub.f32 %v335, %v951
        %953 = vmatpush1.msra.mxu0 %v952
        %954 = vmatprep.subr.mxu0 0.0
        %v955 = vand.u32 %v336, 4294901760
        %v956 = vsub.f32 %v336, %v955
        %957 = vmatpush1.msra.mxu0 %v956
        %958 = vmatprep.subr.mxu0 0.0
        %v959 = vand.u32 %v337, 4294901760
        %v960 = vsub.f32 %v337, %v959
        %961 = vmatpush1.msra.mxu0 %v960
        %962 = vmatprep.subr.mxu0 0.0
        %v963 = vand.u32 %v338, 4294901760
        %v964 = vsub.f32 %v338, %v963
        %965 = vmatpush1.msra.mxu0 %v964
        %966 = vmatprep.subr.mxu0 0.0
        %967 = vmatpush1.msra.mxu0 0.0
        %968 = vmatprep.subr.mxu0 0.0
        %969 = vmatpush1.msra.mxu0 0.0
        %970 = vmatprep.subr.mxu0 0.0
        %971 = vmatpush1.msra.mxu0 0.0
        %972 = vmatprep.subr.mxu0 0.0
        %973 = vmatpush1.msra.mxu0 0.0
        %974 = vmatprep.subr.mxu0 0.0
        %975 = vmatpush1.msra.mxu0 0.0
        %976 = vmatprep.subr.mxu0 0.0
        %977 = vmatpush1.msra.mxu0 0.0
        %978 = vmatprep.subr.mxu0 0.0
        %979 = vmatpush1.msra.mxu0 0.0
        %980 = vmatprep.subr.mxu0 0.0
        %981 = vmatpush1.msra.mxu0 0.0
        %982 = vmatprep.subr.mxu0 0.0
        %983 = vmatpush1.msra.mxu0 0.0
        %984 = vmatprep.subr.mxu0 0.0
        %985 = vmatpush1.msra.mxu0 0.0
        %986 = vmatprep.subr.mxu0 0.0
        %987 = vmatpush1.msra.mxu0 0.0
        %988 = vmatprep.subr.mxu0 0.0
        %989 = vmatpush1.msra.mxu0 0.0
        %990 = vmatprep.subr.mxu0 0.0
        %991 = vmatpush1.msra.mxu0 0.0
        %992 = vmatprep.subr.mxu0 0.0
        %993 = vmatpush1.msra.mxu0 0.0
        %994 = vmatprep.subr.mxu0 0.0
        %995 = vmatpush1.msra.mxu0 0.0
        %996 = vmatprep.subr.mxu0 0.0
        %997 = vmatpush1.msra.mxu0 0.0
        %998 = vmatprep.subr.mxu0 0.0
        %999 = vmatpush1.msra.mxu0 0.0
        %1000 = vmatprep.subr.mxu0 0.0
        %1001 = vmatpush1.msra.mxu0 0.0
        %1002 = vmatprep.subr.mxu0 0.0
        %1003 = vmatpush1.msra.mxu0 0.0
        %1004 = vmatprep.subr.mxu0 0.0
        %1005 = vmatpush1.msra.mxu0 0.0
        %1006 = vmatprep.subr.mxu0 0.0
        %1007 = vmatpush1.msra.mxu0 0.0
        %1008 = vmatprep.subr.mxu0 0.0
        %1009 = vmatpush1.msra.mxu0 0.0
        %1010 = vmatprep.subr.mxu0 0.0
        %1011 = vmatpush1.msra.mxu0 0.0
        %1012 = vmatprep.subr.mxu0 0.0
        %1013 = vmatpush1.msra.mxu0 0.0
        %1014 = vmatprep.mubr.f32.mxu0 0.0
        %v1015 = vand.u32 %v453, 4294901760
        %v1016 = vsub.f32 %v453, %v1015
        %1017 = vmatmul.mubr.f32.gmra.mrb[0].mxu0 %v1016
        %v1018 = vpop.f32.mrb[0].mxu0
        %v1019 = vadd.f32 %v841, %v1018
        %v1020 = vpop.f32.mrb[0].mxu0
        %1021 = vmatprep.mubr.f32.mxu0 0.0
        %v1022 = vand.u32 %v456, 4294901760
        %v1023 = vsub.f32 %v456, %v1022
        %1024 = vmatmul.mubr.f32.gmra.mrb[0].mxu0 %v1023
        %v1025 = vpop.f32.mrb[0].mxu0
        %v1026 = vadd.f32 %v847, %v1025
        %v1027 = vpop.f32.mrb[0].mxu0
        %1028 = vmatprep.mubr.f32.mxu0 0.0
        %v1029 = vand.u32 %v459, 4294901760
        %v1030 = vsub.f32 %v459, %v1029
        %1031 = vmatmul.mubr.f32.gmra.mrb[0].mxu0 %v1030
        %v1032 = vpop.f32.mrb[0].mxu0
        %v1033 = vadd.f32 %v853, %v1032
        %v1034 = vpop.f32.mrb[0].mxu0
        %1035 = vmatprep.mubr.f32.mxu0 0.0
        %v1036 = vand.u32 %v462, 4294901760
        %v1037 = vsub.f32 %v462, %v1036
        %1038 = vmatmul.mubr.f32.gmra.mrb[0].mxu0 %v1037
        %v1039 = vpop.f32.mrb[0].mxu0
        %v1040 = vadd.f32 %v859, %v1039
        %v1041 = vpop.f32.mrb[0].mxu0
        %1042 = vmatprep.mubr.f32.mxu0 0.0
        %v1043 = vand.u32 %v465, 4294901760
        %v1044 = vsub.f32 %v465, %v1043
        %1045 = vmatmul.mubr.f32.gmra.mrb[0].mxu0 %v1044
        %v1046 = vpop.f32.mrb[0].mxu0
        %v1047 = vadd.f32 %v865, %v1046
        %v1048 = vpop.f32.mrb[0].mxu0
        %1049 = vmatprep.mubr.f32.mxu0 0.0
        %v1050 = vand.u32 %v468, 4294901760
        %v1051 = vsub.f32 %v468, %v1050
        %1052 = vmatmul.mubr.f32.gmra.mrb[0].mxu0 %v1051
        %v1053 = vpop.f32.mrb[0].mxu0
        %v1054 = vadd.f32 %v871, %v1053
        %v1055 = vpop.f32.mrb[0].mxu0
        %1056 = vmatprep.mubr.f32.mxu0 0.0
        %v1057 = vand.u32 %v471, 4294901760
        %v1058 = vsub.f32 %v471, %v1057
        %1059 = vmatmul.mubr.f32.gmra.mrb[0].mxu0 %v1058
        %v1060 = vpop.f32.mrb[0].mxu0
        %v1061 = vadd.f32 %v877, %v1060
        %v1062 = vpop.f32.mrb[0].mxu0
        %1063 = vmatprep.mubr.f32.mxu0 0.0
        %v1064 = vand.u32 %v474, 4294901760
        %v1065 = vsub.f32 %v474, %v1064
        %1066 = vmatmul.mubr.f32.gmra.mrb[0].mxu0 %v1065
        %v1067 = vpop.f32.mrb[0].mxu0
        %v1068 = vadd.f32 %v883, %v1067
        %v1069 = vpop.f32.mrb[0].mxu0
        %1070 = vmatprep.mubr.f32.mxu0 0.0
        %v1071 = vand.u32 %v477, 4294901760
        %v1072 = vsub.f32 %v477, %v1071
        %1073 = vmatmul.mubr.f32.gmra.mrb[0].mxu0 %v1072
        %v1074 = vpop.f32.mrb[0].mxu0
        %v1075 = vadd.f32 %v889, %v1074
        %v1076 = vpop.f32.mrb[0].mxu0
        %1077 = vmatprep.mubr.f32.mxu0 0.0
        %v1078 = vand.u32 %v480, 4294901760
        %v1079 = vsub.f32 %v480, %v1078
        %1080 = vmatmul.mubr.f32.gmra.mrb[0].mxu0 %v1079
        %v1081 = vpop.f32.mrb[0].mxu0
        %v1082 = vadd.f32 %v895, %v1081
        %v1083 = vpop.f32.mrb[0].mxu0
        %1084 = vmatprep.mubr.f32.mxu0 0.0
        %v1085 = vand.u32 %v483, 4294901760
        %v1086 = vsub.f32 %v483, %v1085
        %1087 = vmatmul.mubr.f32.gmra.mrb[0].mxu0 %v1086
        %v1088 = vpop.f32.mrb[0].mxu0
        %v1089 = vadd.f32 %v901, %v1088
        %v1090 = vpop.f32.mrb[0].mxu0
        %1091 = vmatprep.mubr.f32.mxu0 0.0
        %v1092 = vand.u32 %v486, 4294901760
        %v1093 = vsub.f32 %v486, %v1092
        %1094 = vmatmul.mubr.f32.gmra.mrb[0].mxu0 %v1093
        %v1095 = vpop.f32.mrb[0].mxu0
        %v1096 = vadd.f32 %v907, %v1095
        %v1097 = vpop.f32.mrb[0].mxu0
        %1098 = vmatprep.mubr.f32.mxu0 0.0
        %v1099 = vand.u32 %v489, 4294901760
        %v1100 = vsub.f32 %v489, %v1099
        %1101 = vmatmul.mubr.f32.gmra.mrb[0].mxu0 %v1100
        %v1102 = vpop.f32.mrb[0].mxu0
        %v1103 = vadd.f32 %v913, %v1102
        %v1104 = vpop.f32.mrb[0].mxu0
        %1105 = vmatprep.mubr.f32.mxu0 0.0
        %v1106 = vand.u32 %v492, 4294901760
        %v1107 = vsub.f32 %v492, %v1106
        %1108 = vmatmul.mubr.f32.gmra.mrb[0].mxu0 %v1107
        %v1109 = vpop.f32.mrb[0].mxu0
        %v1110 = vadd.f32 %v919, %v1109
        %v1111 = vpop.f32.mrb[0].mxu0
        %1112 = vmatprep.mubr.f32.mxu0 0.0
        %v1113 = vand.u32 %v495, 4294901760
        %v1114 = vsub.f32 %v495, %v1113
        %1115 = vmatmul.mubr.f32.gmra.mrb[0].mxu0 %v1114
        %v1116 = vpop.f32.mrb[0].mxu0
        %v1117 = vadd.f32 %v925, %v1116
        %v1118 = vpop.f32.mrb[0].mxu0
        %1119 = vmatprep.mubr.f32.mxu0 0.0
        %v1120 = vand.u32 %v498, 4294901760
        %v1121 = vsub.f32 %v498, %v1120
        %1122 = vmatmul.mubr.f32.gmra.mrb[0].mxu0 %v1121
        %v1123 = vpop.f32.mrb[0].mxu0
        %v1124 = vadd.f32 %v931, %v1123
        %v1125 = vpop.f32.mrb[0].mxu0
        %1126 = vdwg.mxu0
        %1127 = vmatprep.subr.mxu0 0.0
        %v1128 = vand.u32 %v331, 4294901760
        %1129 = vmatpush1.msra.mxu0 %v1128
        %1130 = vmatprep.subr.mxu0 0.0
        %v1131 = vand.u32 %v332, 4294901760
        %1132 = vmatpush1.msra.mxu0 %v1131
        %1133 = vmatprep.subr.mxu0 0.0
        %v1134 = vand.u32 %v333, 4294901760
        %1135 = vmatpush1.msra.mxu0 %v1134
        %1136 = vmatprep.subr.mxu0 0.0
        %v1137 = vand.u32 %v334, 4294901760
        %1138 = vmatpush1.msra.mxu0 %v1137
        %1139 = vmatprep.subr.mxu0 0.0
        %v1140 = vand.u32 %v335, 4294901760
        %1141 = vmatpush1.msra.mxu0 %v1140
        %1142 = vmatprep.subr.mxu0 0.0
        %v1143 = vand.u32 %v336, 4294901760
        %1144 = vmatpush1.msra.mxu0 %v1143
        %1145 = vmatprep.subr.mxu0 0.0
        %v1146 = vand.u32 %v337, 4294901760
        %1147 = vmatpush1.msra.mxu0 %v1146
        %1148 = vmatprep.subr.mxu0 0.0
        %v1149 = vand.u32 %v338, 4294901760
        %1150 = vmatpush1.msra.mxu0 %v1149
        %1151 = vmatprep.subr.mxu0 0.0
        %1152 = vmatpush1.msra.mxu0 0.0
        %1153 = vmatprep.subr.mxu0 0.0
        %1154 = vmatpush1.msra.mxu0 0.0
        %1155 = vmatprep.subr.mxu0 0.0
        %1156 = vmatpush1.msra.mxu0 0.0
        %1157 = vmatprep.subr.mxu0 0.0
        %1158 = vmatpush1.msra.mxu0 0.0
        %1159 = vmatprep.subr.mxu0 0.0
        %1160 = vmatpush1.msra.mxu0 0.0
        %1161 = vmatprep.subr.mxu0 0.0
        %1162 = vmatpush1.msra.mxu0 0.0
        %1163 = vmatprep.subr.mxu0 0.0
        %1164 = vmatpush1.msra.mxu0 0.0
        %1165 = vmatprep.subr.mxu0 0.0
        %1166 = vmatpush1.msra.mxu0 0.0
        %1167 = vmatprep.subr.mxu0 0.0
        %1168 = vmatpush1.msra.mxu0 0.0
        %1169 = vmatprep.subr.mxu0 0.0
        %1170 = vmatpush1.msra.mxu0 0.0
        %1171 = vmatprep.subr.mxu0 0.0
        %1172 = vmatpush1.msra.mxu0 0.0
        %1173 = vmatprep.subr.mxu0 0.0
        %1174 = vmatpush1.msra.mxu0 0.0
        %1175 = vmatprep.subr.mxu0 0.0
        %1176 = vmatpush1.msra.mxu0 0.0
        %1177 = vmatprep.subr.mxu0 0.0
        %1178 = vmatpush1.msra.mxu0 0.0
        %1179 = vmatprep.subr.mxu0 0.0
        %1180 = vmatpush1.msra.mxu0 0.0
        %1181 = vmatprep.subr.mxu0 0.0
        %1182 = vmatpush1.msra.mxu0 0.0
        %1183 = vmatprep.subr.mxu0 0.0
        %1184 = vmatpush1.msra.mxu0 0.0
        %1185 = vmatprep.subr.mxu0 0.0
        %1186 = vmatpush1.msra.mxu0 0.0
        %1187 = vmatprep.subr.mxu0 0.0
        %1188 = vmatpush1.msra.mxu0 0.0
        %1189 = vmatprep.subr.mxu0 0.0
        %1190 = vmatpush1.msra.mxu0 0.0
        %1191 = vmatprep.subr.mxu0 0.0
        %1192 = vmatpush1.msra.mxu0 0.0
        %1193 = vmatprep.subr.mxu0 0.0
        %1194 = vmatpush1.msra.mxu0 0.0
        %1195 = vmatprep.subr.mxu0 0.0
        %1196 = vmatpush1.msra.mxu0 0.0
        %1197 = vmatprep.subr.mxu0 0.0
        %1198 = vmatpush1.msra.mxu0 0.0
        %1199 = vmatprep.mubr.f32.mxu0 0.0
        %v1200 = vand.u32 %v453, 4294901760
        %v1201 = vsub.f32 %v453, %v1200
        %v1202 = vand.u32 %v1201, 4294901760
        %1203 = vmatmul.mubr.f32.gmra.mrb[0].mxu0 %v1202
        %v1204 = vpop.f32.mrb[0].mxu0
        %v1205 = vadd.f32 %v1019, %v1204
        %v1206 = vpop.f32.mrb[0].mxu0
        %1207 = vmatprep.mubr.f32.mxu0 0.0
        %v1208 = vand.u32 %v456, 4294901760
        %v1209 = vsub.f32 %v456, %v1208
        %v1210 = vand.u32 %v1209, 4294901760
        %1211 = vmatmul.mubr.f32.gmra.mrb[0].mxu0 %v1210
        %v1212 = vpop.f32.mrb[0].mxu0
        %v1213 = vadd.f32 %v1026, %v1212
        %v1214 = vpop.f32.mrb[0].mxu0
        %1215 = vmatprep.mubr.f32.mxu0 0.0
        %v1216 = vand.u32 %v459, 4294901760
        %v1217 = vsub.f32 %v459, %v1216
        %v1218 = vand.u32 %v1217, 4294901760
        %1219 = vmatmul.mubr.f32.gmra.mrb[0].mxu0 %v1218
        %v1220 = vpop.f32.mrb[0].mxu0
        %v1221 = vadd.f32 %v1033, %v1220
        %v1222 = vpop.f32.mrb[0].mxu0
        %1223 = vmatprep.mubr.f32.mxu0 0.0
        %v1224 = vand.u32 %v462, 4294901760
        %v1225 = vsub.f32 %v462, %v1224
        %v1226 = vand.u32 %v1225, 4294901760
        %1227 = vmatmul.mubr.f32.gmra.mrb[0].mxu0 %v1226
        %v1228 = vpop.f32.mrb[0].mxu0
        %v1229 = vadd.f32 %v1040, %v1228
        %v1230 = vpop.f32.mrb[0].mxu0
        %1231 = vmatprep.mubr.f32.mxu0 0.0
        %v1232 = vand.u32 %v465, 4294901760
        %v1233 = vsub.f32 %v465, %v1232
        %v1234 = vand.u32 %v1233, 4294901760
        %1235 = vmatmul.mubr.f32.gmra.mrb[0].mxu0 %v1234
        %v1236 = vpop.f32.mrb[0].mxu0
        %v1237 = vadd.f32 %v1047, %v1236
        %v1238 = vpop.f32.mrb[0].mxu0
        %1239 = vmatprep.mubr.f32.mxu0 0.0
        %v1240 = vand.u32 %v468, 4294901760
        %v1241 = vsub.f32 %v468, %v1240
        %v1242 = vand.u32 %v1241, 4294901760
        %1243 = vmatmul.mubr.f32.gmra.mrb[0].mxu0 %v1242
        %v1244 = vpop.f32.mrb[0].mxu0
        %v1245 = vadd.f32 %v1054, %v1244
        %v1246 = vpop.f32.mrb[0].mxu0
        %1247 = vmatprep.mubr.f32.mxu0 0.0
        %v1248 = vand.u32 %v471, 4294901760
        %v1249 = vsub.f32 %v471, %v1248
        %v1250 = vand.u32 %v1249, 4294901760
        %1251 = vmatmul.mubr.f32.gmra.mrb[0].mxu0 %v1250
        %v1252 = vpop.f32.mrb[0].mxu0
        %v1253 = vadd.f32 %v1061, %v1252
        %v1254 = vpop.f32.mrb[0].mxu0
        %1255 = vmatprep.mubr.f32.mxu0 0.0
        %v1256 = vand.u32 %v474, 4294901760
        %v1257 = vsub.f32 %v474, %v1256
        %v1258 = vand.u32 %v1257, 4294901760
        %1259 = vmatmul.mubr.f32.gmra.mrb[0].mxu0 %v1258
        %v1260 = vpop.f32.mrb[0].mxu0
        %v1261 = vadd.f32 %v1068, %v1260
        %v1262 = vpop.f32.mrb[0].mxu0
        %1263 = vmatprep.mubr.f32.mxu0 0.0
        %v1264 = vand.u32 %v477, 4294901760
        %v1265 = vsub.f32 %v477, %v1264
        %v1266 = vand.u32 %v1265, 4294901760
        %1267 = vmatmul.mubr.f32.gmra.mrb[0].mxu0 %v1266
        %v1268 = vpop.f32.mrb[0].mxu0
        %v1269 = vadd.f32 %v1075, %v1268
        %v1270 = vpop.f32.mrb[0].mxu0
        %1271 = vmatprep.mubr.f32.mxu0 0.0
        %v1272 = vand.u32 %v480, 4294901760
        %v1273 = vsub.f32 %v480, %v1272
        %v1274 = vand.u32 %v1273, 4294901760
        %1275 = vmatmul.mubr.f32.gmra.mrb[0].mxu0 %v1274
        %v1276 = vpop.f32.mrb[0].mxu0
        %v1277 = vadd.f32 %v1082, %v1276
        %v1278 = vpop.f32.mrb[0].mxu0
        %1279 = vmatprep.mubr.f32.mxu0 0.0
        %v1280 = vand.u32 %v483, 4294901760
        %v1281 = vsub.f32 %v483, %v1280
        %v1282 = vand.u32 %v1281, 4294901760
        %1283 = vmatmul.mubr.f32.gmra.mrb[0].mxu0 %v1282
        %v1284 = vpop.f32.mrb[0].mxu0
        %v1285 = vadd.f32 %v1089, %v1284
        %v1286 = vpop.f32.mrb[0].mxu0
        %1287 = vmatprep.mubr.f32.mxu0 0.0
        %v1288 = vand.u32 %v486, 4294901760
        %v1289 = vsub.f32 %v486, %v1288
        %v1290 = vand.u32 %v1289, 4294901760
        %1291 = vmatmul.mubr.f32.gmra.mrb[0].mxu0 %v1290
        %v1292 = vpop.f32.mrb[0].mxu0
        %v1293 = vadd.f32 %v1096, %v1292
        %v1294 = vpop.f32.mrb[0].mxu0
        %1295 = vmatprep.mubr.f32.mxu0 0.0
        %v1296 = vand.u32 %v489, 4294901760
        %v1297 = vsub.f32 %v489, %v1296
        %v1298 = vand.u32 %v1297, 4294901760
        %1299 = vmatmul.mubr.f32.gmra.mrb[0].mxu0 %v1298
        %v1300 = vpop.f32.mrb[0].mxu0
        %v1301 = vadd.f32 %v1103, %v1300
        %v1302 = vpop.f32.mrb[0].mxu0
        %1303 = vmatprep.mubr.f32.mxu0 0.0
        %v1304 = vand.u32 %v492, 4294901760
        %v1305 = vsub.f32 %v492, %v1304
        %v1306 = vand.u32 %v1305, 4294901760
        %1307 = vmatmul.mubr.f32.gmra.mrb[0].mxu0 %v1306
        %v1308 = vpop.f32.mrb[0].mxu0
        %v1309 = vadd.f32 %v1110, %v1308
        %v1310 = vpop.f32.mrb[0].mxu0
        %1311 = vmatprep.mubr.f32.mxu0 0.0
        %v1312 = vand.u32 %v495, 4294901760
        %v1313 = vsub.f32 %v495, %v1312
        %v1314 = vand.u32 %v1313, 4294901760
        %1315 = vmatmul.mubr.f32.gmra.mrb[0].mxu0 %v1314
        %v1316 = vpop.f32.mrb[0].mxu0
        %v1317 = vadd.f32 %v1117, %v1316
        %v1318 = vpop.f32.mrb[0].mxu0
        %1319 = vmatprep.mubr.f32.mxu0 0.0
        %v1320 = vand.u32 %v498, 4294901760
        %v1321 = vsub.f32 %v498, %v1320
        %v1322 = vand.u32 %v1321, 4294901760
        %1323 = vmatmul.mubr.f32.gmra.mrb[0].mxu0 %v1322
        %v1324 = vpop.f32.mrb[0].mxu0
        %v1325 = vadd.f32 %v1124, %v1324
        %v1326 = vpop.f32.mrb[0].mxu0
        %1327 = vdwg.mxu0
        %1328 = vmatprep.subr.mxu0 0.0
        %v1329 = vand.u32 %v331, 4294901760
        %v1330 = vsub.f32 %v331, %v1329
        %v1331 = vand.u32 %v1330, 4294901760
        %1332 = vmatpush1.msra.mxu0 %v1331
        %1333 = vmatprep.subr.mxu0 0.0
        %v1334 = vand.u32 %v332, 4294901760
        %v1335 = vsub.f32 %v332, %v1334
        %v1336 = vand.u32 %v1335, 4294901760
        %1337 = vmatpush1.msra.mxu0 %v1336
        %1338 = vmatprep.subr.mxu0 0.0
        %v1339 = vand.u32 %v333, 4294901760
        %v1340 = vsub.f32 %v333, %v1339
        %v1341 = vand.u32 %v1340, 4294901760
        %1342 = vmatpush1.msra.mxu0 %v1341
        %1343 = vmatprep.subr.mxu0 0.0
        %v1344 = vand.u32 %v334, 4294901760
        %v1345 = vsub.f32 %v334, %v1344
        %v1346 = vand.u32 %v1345, 4294901760
        %1347 = vmatpush1.msra.mxu0 %v1346
        %1348 = vmatprep.subr.mxu0 0.0
        %v1349 = vand.u32 %v335, 4294901760
        %v1350 = vsub.f32 %v335, %v1349
        %v1351 = vand.u32 %v1350, 4294901760
        %1352 = vmatpush1.msra.mxu0 %v1351
        %1353 = vmatprep.subr.mxu0 0.0
        %v1354 = vand.u32 %v336, 4294901760
        %v1355 = vsub.f32 %v336, %v1354
        %v1356 = vand.u32 %v1355, 4294901760
        %1357 = vmatpush1.msra.mxu0 %v1356
        %1358 = vmatprep.subr.mxu0 0.0
        %v1359 = vand.u32 %v337, 4294901760
        %v1360 = vsub.f32 %v337, %v1359
        %v1361 = vand.u32 %v1360, 4294901760
        %1362 = vmatpush1.msra.mxu0 %v1361
        %1363 = vmatprep.subr.mxu0 0.0
        %v1364 = vand.u32 %v338, 4294901760
        %v1365 = vsub.f32 %v338, %v1364
        %v1366 = vand.u32 %v1365, 4294901760
        %1367 = vmatpush1.msra.mxu0 %v1366
        %1368 = vmatprep.subr.mxu0 0.0
        %1369 = vmatpush1.msra.mxu0 0.0
        %1370 = vmatprep.subr.mxu0 0.0
        %1371 = vmatpush1.msra.mxu0 0.0
        %1372 = vmatprep.subr.mxu0 0.0
        %1373 = vmatpush1.msra.mxu0 0.0
        %1374 = vmatprep.subr.mxu0 0.0
        %1375 = vmatpush1.msra.mxu0 0.0
        %1376 = vmatprep.subr.mxu0 0.0
        %1377 = vmatpush1.msra.mxu0 0.0
        %1378 = vmatprep.subr.mxu0 0.0
        %1379 = vmatpush1.msra.mxu0 0.0
        %1380 = vmatprep.subr.mxu0 0.0
        %1381 = vmatpush1.msra.mxu0 0.0
        %1382 = vmatprep.subr.mxu0 0.0
        %1383 = vmatpush1.msra.mxu0 0.0
        %1384 = vmatprep.subr.mxu0 0.0
        %1385 = vmatpush1.msra.mxu0 0.0
        %1386 = vmatprep.subr.mxu0 0.0
        %1387 = vmatpush1.msra.mxu0 0.0
        %1388 = vmatprep.subr.mxu0 0.0
        %1389 = vmatpush1.msra.mxu0 0.0
        %1390 = vmatprep.subr.mxu0 0.0
        %1391 = vmatpush1.msra.mxu0 0.0
        %1392 = vmatprep.subr.mxu0 0.0
        %1393 = vmatpush1.msra.mxu0 0.0
        %1394 = vmatprep.subr.mxu0 0.0
        %1395 = vmatpush1.msra.mxu0 0.0
        %1396 = vmatprep.subr.mxu0 0.0
        %1397 = vmatpush1.msra.mxu0 0.0
        %1398 = vmatprep.subr.mxu0 0.0
        %1399 = vmatpush1.msra.mxu0 0.0
        %1400 = vmatprep.subr.mxu0 0.0
        %1401 = vmatpush1.msra.mxu0 0.0
        %1402 = vmatprep.subr.mxu0 0.0
        %1403 = vmatpush1.msra.mxu0 0.0
        %1404 = vmatprep.subr.mxu0 0.0
        %1405 = vmatpush1.msra.mxu0 0.0
        %1406 = vmatprep.subr.mxu0 0.0
        %1407 = vmatpush1.msra.mxu0 0.0
        %1408 = vmatprep.subr.mxu0 0.0
        %1409 = vmatpush1.msra.mxu0 0.0
        %1410 = vmatprep.subr.mxu0 0.0
        %1411 = vmatpush1.msra.mxu0 0.0
        %1412 = vmatprep.subr.mxu0 0.0
        %1413 = vmatpush1.msra.mxu0 0.0
        %1414 = vmatprep.subr.mxu0 0.0
        %1415 = vmatpush1.msra.mxu0 0.0
        %1416 = vmatprep.mubr.f32.mxu0 0.0
        %v1417 = vand.u32 %v453, 4294901760
        %1418 = vmatmul.mubr.f32.gmra.mrb[0].mxu0 %v1417
        %v1419 = vpop.f32.mrb[0].mxu0
        %v1420 = vadd.f32 %v1205, %v1419
        %v1421 = vpop.f32.mrb[0].mxu0
        %1422 = vmatprep.mubr.f32.mxu0 0.0
        %v1423 = vand.u32 %v456, 4294901760
        %1424 = vmatmul.mubr.f32.gmra.mrb[0].mxu0 %v1423
        %v1425 = vpop.f32.mrb[0].mxu0
        %v1426 = vadd.f32 %v1213, %v1425
        %v1427 = vpop.f32.mrb[0].mxu0
        %1428 = vmatprep.mubr.f32.mxu0 0.0
        %v1429 = vand.u32 %v459, 4294901760
        %1430 = vmatmul.mubr.f32.gmra.mrb[0].mxu0 %v1429
        %v1431 = vpop.f32.mrb[0].mxu0
        %v1432 = vadd.f32 %v1221, %v1431
        %v1433 = vpop.f32.mrb[0].mxu0
        %1434 = vmatprep.mubr.f32.mxu0 0.0
        %v1435 = vand.u32 %v462, 4294901760
        %1436 = vmatmul.mubr.f32.gmra.mrb[0].mxu0 %v1435
        %v1437 = vpop.f32.mrb[0].mxu0
        %v1438 = vadd.f32 %v1229, %v1437
        %v1439 = vpop.f32.mrb[0].mxu0
        %1440 = vmatprep.mubr.f32.mxu0 0.0
        %v1441 = vand.u32 %v465, 4294901760
        %1442 = vmatmul.mubr.f32.gmra.mrb[0].mxu0 %v1441
        %v1443 = vpop.f32.mrb[0].mxu0
        %v1444 = vadd.f32 %v1237, %v1443
        %v1445 = vpop.f32.mrb[0].mxu0
        %1446 = vmatprep.mubr.f32.mxu0 0.0
        %v1447 = vand.u32 %v468, 4294901760
        %1448 = vmatmul.mubr.f32.gmra.mrb[0].mxu0 %v1447
        %v1449 = vpop.f32.mrb[0].mxu0
        %v1450 = vadd.f32 %v1245, %v1449
        %v1451 = vpop.f32.mrb[0].mxu0
        %1452 = vmatprep.mubr.f32.mxu0 0.0
        %v1453 = vand.u32 %v471, 4294901760
        %1454 = vmatmul.mubr.f32.gmra.mrb[0].mxu0 %v1453
        %v1455 = vpop.f32.mrb[0].mxu0
        %v1456 = vadd.f32 %v1253, %v1455
        %v1457 = vpop.f32.mrb[0].mxu0
        %1458 = vmatprep.mubr.f32.mxu0 0.0
        %v1459 = vand.u32 %v474, 4294901760
        %1460 = vmatmul.mubr.f32.gmra.mrb[0].mxu0 %v1459
        %v1461 = vpop.f32.mrb[0].mxu0
        %v1462 = vadd.f32 %v1261, %v1461
        %v1463 = vpop.f32.mrb[0].mxu0
        %1464 = vmatprep.mubr.f32.mxu0 0.0
        %v1465 = vand.u32 %v477, 4294901760
        %1466 = vmatmul.mubr.f32.gmra.mrb[0].mxu0 %v1465
        %v1467 = vpop.f32.mrb[0].mxu0
        %v1468 = vadd.f32 %v1269, %v1467
        %v1469 = vpop.f32.mrb[0].mxu0
        %1470 = vmatprep.mubr.f32.mxu0 0.0
        %v1471 = vand.u32 %v480, 4294901760
        %1472 = vmatmul.mubr.f32.gmra.mrb[0].mxu0 %v1471
        %v1473 = vpop.f32.mrb[0].mxu0
        %v1474 = vadd.f32 %v1277, %v1473
        %v1475 = vpop.f32.mrb[0].mxu0
        %1476 = vmatprep.mubr.f32.mxu0 0.0
        %v1477 = vand.u32 %v483, 4294901760
        %1478 = vmatmul.mubr.f32.gmra.mrb[0].mxu0 %v1477
        %v1479 = vpop.f32.mrb[0].mxu0
        %v1480 = vadd.f32 %v1285, %v1479
        %v1481 = vpop.f32.mrb[0].mxu0
        %1482 = vmatprep.mubr.f32.mxu0 0.0
        %v1483 = vand.u32 %v486, 4294901760
        %1484 = vmatmul.mubr.f32.gmra.mrb[0].mxu0 %v1483
        %v1485 = vpop.f32.mrb[0].mxu0
        %v1486 = vadd.f32 %v1293, %v1485
        %v1487 = vpop.f32.mrb[0].mxu0
        %1488 = vmatprep.mubr.f32.mxu0 0.0
        %v1489 = vand.u32 %v489, 4294901760
        %1490 = vmatmul.mubr.f32.gmra.mrb[0].mxu0 %v1489
        %v1491 = vpop.f32.mrb[0].mxu0
        %v1492 = vadd.f32 %v1301, %v1491
        %v1493 = vpop.f32.mrb[0].mxu0
        %1494 = vmatprep.mubr.f32.mxu0 0.0
        %v1495 = vand.u32 %v492, 4294901760
        %1496 = vmatmul.mubr.f32.gmra.mrb[0].mxu0 %v1495
        %v1497 = vpop.f32.mrb[0].mxu0
        %v1498 = vadd.f32 %v1309, %v1497
        %v1499 = vpop.f32.mrb[0].mxu0
        %1500 = vmatprep.mubr.f32.mxu0 0.0
        %v1501 = vand.u32 %v495, 4294901760
        %1502 = vmatmul.mubr.f32.gmra.mrb[0].mxu0 %v1501
        %v1503 = vpop.f32.mrb[0].mxu0
        %v1504 = vadd.f32 %v1317, %v1503
        %v1505 = vpop.f32.mrb[0].mxu0
        %1506 = vmatprep.mubr.f32.mxu0 0.0
        %v1507 = vand.u32 %v498, 4294901760
        %1508 = vmatmul.mubr.f32.gmra.mrb[0].mxu0 %v1507
        %v1509 = vpop.f32.mrb[0].mxu0
        %v1510 = vadd.f32 %v1325, %v1509
        %v1511 = vpop.f32.mrb[0].mxu0
        %1512 = vdwg.mxu0
        %1513 = vmatprep.subr.mxu0 0.0
        %v1514 = vand.u32 %v331, 4294901760
        %1515 = vmatpush1.msra.mxu0 %v1514
        %1516 = vmatprep.subr.mxu0 0.0
        %v1517 = vand.u32 %v332, 4294901760
        %1518 = vmatpush1.msra.mxu0 %v1517
        %1519 = vmatprep.subr.mxu0 0.0
        %v1520 = vand.u32 %v333, 4294901760
        %1521 = vmatpush1.msra.mxu0 %v1520
        %1522 = vmatprep.subr.mxu0 0.0
        %v1523 = vand.u32 %v334, 4294901760
        %1524 = vmatpush1.msra.mxu0 %v1523
        %1525 = vmatprep.subr.mxu0 0.0
        %v1526 = vand.u32 %v335, 4294901760
        %1527 = vmatpush1.msra.mxu0 %v1526
        %1528 = vmatprep.subr.mxu0 0.0
        %v1529 = vand.u32 %v336, 4294901760
        %1530 = vmatpush1.msra.mxu0 %v1529
        %1531 = vmatprep.subr.mxu0 0.0
        %v1532 = vand.u32 %v337, 4294901760
        %1533 = vmatpush1.msra.mxu0 %v1532
        %1534 = vmatprep.subr.mxu0 0.0
        %v1535 = vand.u32 %v338, 4294901760
        %1536 = vmatpush1.msra.mxu0 %v1535
        %1537 = vmatprep.subr.mxu0 0.0
        %1538 = vmatpush1.msra.mxu0 0.0
        %1539 = vmatprep.subr.mxu0 0.0
        %1540 = vmatpush1.msra.mxu0 0.0
        %1541 = vmatprep.subr.mxu0 0.0
        %1542 = vmatpush1.msra.mxu0 0.0
        %1543 = vmatprep.subr.mxu0 0.0
        %1544 = vmatpush1.msra.mxu0 0.0
        %1545 = vmatprep.subr.mxu0 0.0
        %1546 = vmatpush1.msra.mxu0 0.0
        %1547 = vmatprep.subr.mxu0 0.0
        %1548 = vmatpush1.msra.mxu0 0.0
        %1549 = vmatprep.subr.mxu0 0.0
        %1550 = vmatpush1.msra.mxu0 0.0
        %1551 = vmatprep.subr.mxu0 0.0
        %1552 = vmatpush1.msra.mxu0 0.0
        %1553 = vmatprep.subr.mxu0 0.0
        %1554 = vmatpush1.msra.mxu0 0.0
        %1555 = vmatprep.subr.mxu0 0.0
        %1556 = vmatpush1.msra.mxu0 0.0
        %1557 = vmatprep.subr.mxu0 0.0
        %1558 = vmatpush1.msra.mxu0 0.0
        %1559 = vmatprep.subr.mxu0 0.0
        %1560 = vmatpush1.msra.mxu0 0.0
        %1561 = vmatprep.subr.mxu0 0.0
        %1562 = vmatpush1.msra.mxu0 0.0
        %1563 = vmatprep.subr.mxu0 0.0
        %1564 = vmatpush1.msra.mxu0 0.0
        %1565 = vmatprep.subr.mxu0 0.0
        %1566 = vmatpush1.msra.mxu0 0.0
        %1567 = vmatprep.subr.mxu0 0.0
        %1568 = vmatpush1.msra.mxu0 0.0
        %1569 = vmatprep.subr.mxu0 0.0
        %1570 = vmatpush1.msra.mxu0 0.0
        %1571 = vmatprep.subr.mxu0 0.0
        %1572 = vmatpush1.msra.mxu0 0.0
        %1573 = vmatprep.subr.mxu0 0.0
        %1574 = vmatpush1.msra.mxu0 0.0
        %1575 = vmatprep.subr.mxu0 0.0
        %1576 = vmatpush1.msra.mxu0 0.0
        %1577 = vmatprep.subr.mxu0 0.0
        %1578 = vmatpush1.msra.mxu0 0.0
        %1579 = vmatprep.subr.mxu0 0.0
        %1580 = vmatpush1.msra.mxu0 0.0
        %1581 = vmatprep.subr.mxu0 0.0
        %1582 = vmatpush1.msra.mxu0 0.0
        %1583 = vmatprep.subr.mxu0 0.0
        %1584 = vmatpush1.msra.mxu0 0.0
        %1585 = vmatprep.mubr.f32.mxu0 0.0
        %v1586 = vand.u32 %v453, 4294901760
        %1587 = vmatmul.mubr.f32.gmra.mrb[0].mxu0 %v1586
        %v1588 = vpop.f32.mrb[0].mxu0
        %v1589 = vadd.f32 %v1420, %v1588
        %v1590 = vpop.f32.mrb[0].mxu0
        %1591 = vmatprep.mubr.f32.mxu0 0.0
        %v1592 = vand.u32 %v456, 4294901760
        %1593 = vmatmul.mubr.f32.gmra.mrb[0].mxu0 %v1592
        %v1594 = vpop.f32.mrb[0].mxu0
        %v1595 = vadd.f32 %v1426, %v1594
        %v1596 = vpop.f32.mrb[0].mxu0
        %1597 = vmatprep.mubr.f32.mxu0 0.0
        %v1598 = vand.u32 %v459, 4294901760
        %1599 = vmatmul.mubr.f32.gmra.mrb[0].mxu0 %v1598
        %v1600 = vpop.f32.mrb[0].mxu0
        %v1601 = vadd.f32 %v1432, %v1600
        %v1602 = vpop.f32.mrb[0].mxu0
        %1603 = vmatprep.mubr.f32.mxu0 0.0
        %v1604 = vand.u32 %v462, 4294901760
        %1605 = vmatmul.mubr.f32.gmra.mrb[0].mxu0 %v1604
        %v1606 = vpop.f32.mrb[0].mxu0
        %v1607 = vadd.f32 %v1438, %v1606
        %v1608 = vpop.f32.mrb[0].mxu0
        %1609 = vmatprep.mubr.f32.mxu0 0.0
        %v1610 = vand.u32 %v465, 4294901760
        %1611 = vmatmul.mubr.f32.gmra.mrb[0].mxu0 %v1610
        %v1612 = vpop.f32.mrb[0].mxu0
        %v1613 = vadd.f32 %v1444, %v1612
        %v1614 = vpop.f32.mrb[0].mxu0
        %1615 = vmatprep.mubr.f32.mxu0 0.0
        %v1616 = vand.u32 %v468, 4294901760
        %1617 = vmatmul.mubr.f32.gmra.mrb[0].mxu0 %v1616
        %v1618 = vpop.f32.mrb[0].mxu0
        %v1619 = vadd.f32 %v1450, %v1618
        %v1620 = vpop.f32.mrb[0].mxu0
        %1621 = vmatprep.mubr.f32.mxu0 0.0
        %v1622 = vand.u32 %v471, 4294901760
        %1623 = vmatmul.mubr.f32.gmra.mrb[0].mxu0 %v1622
        %v1624 = vpop.f32.mrb[0].mxu0
        %v1625 = vadd.f32 %v1456, %v1624
        %v1626 = vpop.f32.mrb[0].mxu0
        %1627 = vmatprep.mubr.f32.mxu0 0.0
        %v1628 = vand.u32 %v474, 4294901760
        %1629 = vmatmul.mubr.f32.gmra.mrb[0].mxu0 %v1628
        %v1630 = vpop.f32.mrb[0].mxu0
        %v1631 = vadd.f32 %v1462, %v1630
        %v1632 = vpop.f32.mrb[0].mxu0
        %1633 = vmatprep.mubr.f32.mxu0 0.0
        %v1634 = vand.u32 %v477, 4294901760
        %1635 = vmatmul.mubr.f32.gmra.mrb[0].mxu0 %v1634
        %v1636 = vpop.f32.mrb[0].mxu0
        %v1637 = vadd.f32 %v1468, %v1636
        %v1638 = vpop.f32.mrb[0].mxu0
        %1639 = vmatprep.mubr.f32.mxu0 0.0
        %v1640 = vand.u32 %v480, 4294901760
        %1641 = vmatmul.mubr.f32.gmra.mrb[0].mxu0 %v1640
        %v1642 = vpop.f32.mrb[0].mxu0
        %v1643 = vadd.f32 %v1474, %v1642
        %v1644 = vpop.f32.mrb[0].mxu0
        %1645 = vmatprep.mubr.f32.mxu0 0.0
        %v1646 = vand.u32 %v483, 4294901760
        %1647 = vmatmul.mubr.f32.gmra.mrb[0].mxu0 %v1646
        %v1648 = vpop.f32.mrb[0].mxu0
        %v1649 = vadd.f32 %v1480, %v1648
        %v1650 = vpop.f32.mrb[0].mxu0
        %1651 = vmatprep.mubr.f32.mxu0 0.0
        %v1652 = vand.u32 %v486, 4294901760
        %1653 = vmatmul.mubr.f32.gmra.mrb[0].mxu0 %v1652
        %v1654 = vpop.f32.mrb[0].mxu0
        %v1655 = vadd.f32 %v1486, %v1654
        %v1656 = vpop.f32.mrb[0].mxu0
        %1657 = vmatprep.mubr.f32.mxu0 0.0
        %v1658 = vand.u32 %v489, 4294901760
        %1659 = vmatmul.mubr.f32.gmra.mrb[0].mxu0 %v1658
        %v1660 = vpop.f32.mrb[0].mxu0
        %v1661 = vadd.f32 %v1492, %v1660
        %v1662 = vpop.f32.mrb[0].mxu0
        %1663 = vmatprep.mubr.f32.mxu0 0.0
        %v1664 = vand.u32 %v492, 4294901760
        %1665 = vmatmul.mubr.f32.gmra.mrb[0].mxu0 %v1664
        %v1666 = vpop.f32.mrb[0].mxu0
        %v1667 = vadd.f32 %v1498, %v1666
        %v1668 = vpop.f32.mrb[0].mxu0
        %1669 = vmatprep.mubr.f32.mxu0 0.0
        %v1670 = vand.u32 %v495, 4294901760
        %1671 = vmatmul.mubr.f32.gmra.mrb[0].mxu0 %v1670
        %v1672 = vpop.f32.mrb[0].mxu0
        %v1673 = vadd.f32 %v1504, %v1672
        %v1674 = vpop.f32.mrb[0].mxu0
        %1675 = vmatprep.mubr.f32.mxu0 0.0
        %v1676 = vand.u32 %v498, 4294901760
        %1677 = vmatmul.mubr.f32.gmra.mrb[0].mxu0 %v1676
        %v1678 = vpop.f32.mrb[0].mxu0
        %v1679 = vadd.f32 %v1510, %v1678
        %v1680 = vpop.f32.mrb[0].mxu0
        %1681 = vdwg.mxu0
        %v1682 = vmax.f32 %v1589, 0.0
        %v1683 = vmax.f32 %v1595, 0.0
        %v1684 = vmax.f32 %v1601, 0.0
        %v1685 = vmax.f32 %v1607, 0.0
        %v1686 = vmax.f32 %v1613, 0.0
        %v1687 = vmax.f32 %v1619, 0.0
        %v1688 = vmax.f32 %v1625, 0.0
        %v1689 = vmax.f32 %v1631, 0.0
        %v1690 = vmax.f32 %v1637, 0.0
        %v1691 = vmax.f32 %v1643, 0.0
        %v1692 = vmax.f32 %v1649, 0.0
        %v1693 = vmax.f32 %v1655, 0.0
        %v1694 = vmax.f32 %v1661, 0.0
        %v1695 = vmax.f32 %v1667, 0.0
        %v1696 = vmax.f32 %v1673, 0.0
        %v1697 = vmax.f32 %v1679, 0.0
        %v1698 = vld [vmem:[%s3] sm:$0xff]
        %v1699 = vld [vmem:[%s3 + $0x8] sm:$0xff]
        %v1700 = vld [vmem:[%s4] sm:$0xff]
        %v1701 = vld [vmem:[%s4 + $0x8] sm:$0xff]
        %1703 = vset.pattern.permute.xlu0 0
        %1704 = vperm.xlu0 %1703, %v1700
        %v1705 = vpop.permute.xlu0 %1704
        %1708 = vset.pattern.permute.xlu0 0
        %1709 = vperm.xlu0 %1708, %v1701
        %v1710 = vpop.permute.xlu0 %1709
        %vm1712 = vcmask 64512
        %v1714 = vsel %vm1712, %v1698, 0
        %v1717 = vsel %vm1712, %v1699, 0
        %v1720 = vsel %vm1712, %v1682, 0
        %v1723 = vsel %vm1712, %v1683, 0
        %v1726 = vsel %vm1712, %v1684, 0
        %v1729 = vsel %vm1712, %v1685, 0
        %v1732 = vsel %vm1712, %v1686, 0
        %v1735 = vsel %vm1712, %v1687, 0
        %v1738 = vsel %vm1712, %v1688, 0
        %v1741 = vsel %vm1712, %v1689, 0
        %v1744 = vsel %vm1712, %v1690, 0
        %v1747 = vsel %vm1712, %v1691, 0
        %v1750 = vsel %vm1712, %v1692, 0
        %v1753 = vsel %vm1712, %v1693, 0
        %v1756 = vsel %vm1712, %v1694, 0
        %v1759 = vsel %vm1712, %v1695, 0
        %v1762 = vsel %vm1712, %v1696, 0
        %v1765 = vsel %vm1712, %v1697, 0
        %1767 = vmatprep.subr.mxu0 0.0
        %v1768 = vand.u32 %v1720, 4294901760
        %1769 = vmatpush1.xpose.msra.mxu0 %v1768
        %1770 = vmatprep.subr.mxu0 0.0
        %v1771 = vand.u32 %v1723, 4294901760
        %1772 = vmatpush1.xpose.msra.mxu0 %v1771
        %1773 = vmatprep.subr.mxu0 0.0
        %v1774 = vand.u32 %v1726, 4294901760
        %1775 = vmatpush1.xpose.msra.mxu0 %v1774
        %1776 = vmatprep.subr.mxu0 0.0
        %v1777 = vand.u32 %v1729, 4294901760
        %1778 = vmatpush1.xpose.msra.mxu0 %v1777
        %1779 = vmatprep.subr.mxu0 0.0
        %v1780 = vand.u32 %v1732, 4294901760
        %1781 = vmatpush1.xpose.msra.mxu0 %v1780
        %1782 = vmatprep.subr.mxu0 0.0
        %v1783 = vand.u32 %v1735, 4294901760
        %1784 = vmatpush1.xpose.msra.mxu0 %v1783
        %1785 = vmatprep.subr.mxu0 0.0
        %v1786 = vand.u32 %v1738, 4294901760
        %1787 = vmatpush1.xpose.msra.mxu0 %v1786
        %1788 = vmatprep.subr.mxu0 0.0
        %v1789 = vand.u32 %v1741, 4294901760
        %1790 = vmatpush1.xpose.msra.mxu0 %v1789
        %1791 = vmatprep.subr.mxu0 0.0
        %v1792 = vand.u32 %v1744, 4294901760
        %1793 = vmatpush1.xpose.msra.mxu0 %v1792
        %1794 = vmatprep.subr.mxu0 0.0
        %v1795 = vand.u32 %v1747, 4294901760
        %1796 = vmatpush1.xpose.msra.mxu0 %v1795
        %1797 = vmatprep.subr.mxu0 0.0
        %v1798 = vand.u32 %v1750, 4294901760
        %1799 = vmatpush1.xpose.msra.mxu0 %v1798
        %1800 = vmatprep.subr.mxu0 0.0
        %v1801 = vand.u32 %v1753, 4294901760
        %1802 = vmatpush1.xpose.msra.mxu0 %v1801
        %1803 = vmatprep.subr.mxu0 0.0
        %v1804 = vand.u32 %v1756, 4294901760
        %1805 = vmatpush1.xpose.msra.mxu0 %v1804
        %1806 = vmatprep.subr.mxu0 0.0
        %v1807 = vand.u32 %v1759, 4294901760
        %1808 = vmatpush1.xpose.msra.mxu0 %v1807
        %1809 = vmatprep.subr.mxu0 0.0
        %v1810 = vand.u32 %v1762, 4294901760
        %1811 = vmatpush1.xpose.msra.mxu0 %v1810
        %1812 = vmatprep.subr.mxu0 0.0
        %v1813 = vand.u32 %v1765, 4294901760
        %1814 = vmatpush1.xpose.msra.mxu0 %v1813
        %1815 = vmatprep.subr.mxu0 0.0
        %1816 = vmatpush1.xpose.msra.mxu0 0.0
        %1817 = vmatprep.subr.mxu0 0.0
        %1818 = vmatpush1.xpose.msra.mxu0 0.0
        %1819 = vmatprep.subr.mxu0 0.0
        %1820 = vmatpush1.xpose.msra.mxu0 0.0
        %1821 = vmatprep.subr.mxu0 0.0
        %1822 = vmatpush1.xpose.msra.mxu0 0.0
        %1823 = vmatprep.subr.mxu0 0.0
        %1824 = vmatpush1.xpose.msra.mxu0 0.0
        %1825 = vmatprep.subr.mxu0 0.0
        %1826 = vmatpush1.xpose.msra.mxu0 0.0
        %1827 = vmatprep.subr.mxu0 0.0
        %1828 = vmatpush1.xpose.msra.mxu0 0.0
        %1829 = vmatprep.subr.mxu0 0.0
        %1830 = vmatpush1.xpose.msra.mxu0 0.0
        %1831 = vmatprep.subr.mxu0 0.0
        %1832 = vmatpush1.xpose.msra.mxu0 0.0
        %1833 = vmatprep.subr.mxu0 0.0
        %1834 = vmatpush1.xpose.msra.mxu0 0.0
        %1835 = vmatprep.subr.mxu0 0.0
        %1836 = vmatpush1.xpose.msra.mxu0 0.0
        %1837 = vmatprep.subr.mxu0 0.0
        %1838 = vmatpush1.xpose.msra.mxu0 0.0
        %1839 = vmatprep.subr.mxu0 0.0
        %1840 = vmatpush1.xpose.msra.mxu0 0.0
        %1841 = vmatprep.subr.mxu0 0.0
        %1842 = vmatpush1.xpose.msra.mxu0 0.0
        %1843 = vmatprep.subr.mxu0 0.0
        %1844 = vmatpush1.xpose.msra.mxu0 0.0
        %1845 = vmatprep.subr.mxu0 0.0
        %1846 = vmatpush1.xpose.msra.mxu0 0.0
        %1847 = vmatprep.mubr.f32.mxu0 0.0
        %v1848 = vand.u32 %v1714, 4294901760
        %v1849 = vsub.f32 %v1714, %v1848
        %v1850 = vand.u32 %v1849, 4294901760
        %v1851 = vsub.f32 %v1849, %v1850
        %v1852 = vand.u32 %v1851, 4294901760
        %1853 = vmatmul.mubr.f32.gmra.mrb[0].mxu0 %v1852
        %v1854 = vpop.f32.mrb[0].mxu0
        %v1855 = vadd.f32 %v1705, %v1854
        %v1856 = vpop.f32.mrb[0].mxu0
        %1857 = vmatprep.mubr.f32.mxu0 0.0
        %v1858 = vand.u32 %v1717, 4294901760
        %v1859 = vsub.f32 %v1717, %v1858
        %v1860 = vand.u32 %v1859, 4294901760
        %v1861 = vsub.f32 %v1859, %v1860
        %v1862 = vand.u32 %v1861, 4294901760
        %1863 = vmatmul.mubr.f32.gmra.mrb[0].mxu0 %v1862
        %v1864 = vpop.f32.mrb[0].mxu0
        %v1865 = vadd.f32 %v1710, %v1864
        %v1866 = vpop.f32.mrb[0].mxu0
        %1867 = vdwg.mxu0
        %1868 = vmatprep.subr.mxu0 0.0
        %v1869 = vand.u32 %v1720, 4294901760
        %v1870 = vsub.f32 %v1720, %v1869
        %v1871 = vand.u32 %v1870, 4294901760
        %v1872 = vsub.f32 %v1870, %v1871
        %v1873 = vand.u32 %v1872, 4294901760
        %1874 = vmatpush1.xpose.msra.mxu0 %v1873
        %1875 = vmatprep.subr.mxu0 0.0
        %v1876 = vand.u32 %v1723, 4294901760
        %v1877 = vsub.f32 %v1723, %v1876
        %v1878 = vand.u32 %v1877, 4294901760
        %v1879 = vsub.f32 %v1877, %v1878
        %v1880 = vand.u32 %v1879, 4294901760
        %1881 = vmatpush1.xpose.msra.mxu0 %v1880
        %1882 = vmatprep.subr.mxu0 0.0
        %v1883 = vand.u32 %v1726, 4294901760
        %v1884 = vsub.f32 %v1726, %v1883
        %v1885 = vand.u32 %v1884, 4294901760
        %v1886 = vsub.f32 %v1884, %v1885
        %v1887 = vand.u32 %v1886, 4294901760
        %1888 = vmatpush1.xpose.msra.mxu0 %v1887
        %1889 = vmatprep.subr.mxu0 0.0
        %v1890 = vand.u32 %v1729, 4294901760
        %v1891 = vsub.f32 %v1729, %v1890
        %v1892 = vand.u32 %v1891, 4294901760
        %v1893 = vsub.f32 %v1891, %v1892
        %v1894 = vand.u32 %v1893, 4294901760
        %1895 = vmatpush1.xpose.msra.mxu0 %v1894
        %1896 = vmatprep.subr.mxu0 0.0
        %v1897 = vand.u32 %v1732, 4294901760
        %v1898 = vsub.f32 %v1732, %v1897
        %v1899 = vand.u32 %v1898, 4294901760
        %v1900 = vsub.f32 %v1898, %v1899
        %v1901 = vand.u32 %v1900, 4294901760
        %1902 = vmatpush1.xpose.msra.mxu0 %v1901
        %1903 = vmatprep.subr.mxu0 0.0
        %v1904 = vand.u32 %v1735, 4294901760
        %v1905 = vsub.f32 %v1735, %v1904
        %v1906 = vand.u32 %v1905, 4294901760
        %v1907 = vsub.f32 %v1905, %v1906
        %v1908 = vand.u32 %v1907, 4294901760
        %1909 = vmatpush1.xpose.msra.mxu0 %v1908
        %1910 = vmatprep.subr.mxu0 0.0
        %v1911 = vand.u32 %v1738, 4294901760
        %v1912 = vsub.f32 %v1738, %v1911
        %v1913 = vand.u32 %v1912, 4294901760
        %v1914 = vsub.f32 %v1912, %v1913
        %v1915 = vand.u32 %v1914, 4294901760
        %1916 = vmatpush1.xpose.msra.mxu0 %v1915
        %1917 = vmatprep.subr.mxu0 0.0
        %v1918 = vand.u32 %v1741, 4294901760
        %v1919 = vsub.f32 %v1741, %v1918
        %v1920 = vand.u32 %v1919, 4294901760
        %v1921 = vsub.f32 %v1919, %v1920
        %v1922 = vand.u32 %v1921, 4294901760
        %1923 = vmatpush1.xpose.msra.mxu0 %v1922
        %1924 = vmatprep.subr.mxu0 0.0
        %v1925 = vand.u32 %v1744, 4294901760
        %v1926 = vsub.f32 %v1744, %v1925
        %v1927 = vand.u32 %v1926, 4294901760
        %v1928 = vsub.f32 %v1926, %v1927
        %v1929 = vand.u32 %v1928, 4294901760
        %1930 = vmatpush1.xpose.msra.mxu0 %v1929
        %1931 = vmatprep.subr.mxu0 0.0
        %v1932 = vand.u32 %v1747, 4294901760
        %v1933 = vsub.f32 %v1747, %v1932
        %v1934 = vand.u32 %v1933, 4294901760
        %v1935 = vsub.f32 %v1933, %v1934
        %v1936 = vand.u32 %v1935, 4294901760
        %1937 = vmatpush1.xpose.msra.mxu0 %v1936
        %1938 = vmatprep.subr.mxu0 0.0
        %v1939 = vand.u32 %v1750, 4294901760
        %v1940 = vsub.f32 %v1750, %v1939
        %v1941 = vand.u32 %v1940, 4294901760
        %v1942 = vsub.f32 %v1940, %v1941
        %v1943 = vand.u32 %v1942, 4294901760
        %1944 = vmatpush1.xpose.msra.mxu0 %v1943
        %1945 = vmatprep.subr.mxu0 0.0
        %v1946 = vand.u32 %v1753, 4294901760
        %v1947 = vsub.f32 %v1753, %v1946
        %v1948 = vand.u32 %v1947, 4294901760
        %v1949 = vsub.f32 %v1947, %v1948
        %v1950 = vand.u32 %v1949, 4294901760
        %1951 = vmatpush1.xpose.msra.mxu0 %v1950
        %1952 = vmatprep.subr.mxu0 0.0
        %v1953 = vand.u32 %v1756, 4294901760
        %v1954 = vsub.f32 %v1756, %v1953
        %v1955 = vand.u32 %v1954, 4294901760
        %v1956 = vsub.f32 %v1954, %v1955
        %v1957 = vand.u32 %v1956, 4294901760
        %1958 = vmatpush1.xpose.msra.mxu0 %v1957
        %1959 = vmatprep.subr.mxu0 0.0
        %v1960 = vand.u32 %v1759, 4294901760
        %v1961 = vsub.f32 %v1759, %v1960
        %v1962 = vand.u32 %v1961, 4294901760
        %v1963 = vsub.f32 %v1961, %v1962
        %v1964 = vand.u32 %v1963, 4294901760
        %1965 = vmatpush1.xpose.msra.mxu0 %v1964
        %1966 = vmatprep.subr.mxu0 0.0
        %v1967 = vand.u32 %v1762, 4294901760
        %v1968 = vsub.f32 %v1762, %v1967
        %v1969 = vand.u32 %v1968, 4294901760
        %v1970 = vsub.f32 %v1968, %v1969
        %v1971 = vand.u32 %v1970, 4294901760
        %1972 = vmatpush1.xpose.msra.mxu0 %v1971
        %1973 = vmatprep.subr.mxu0 0.0
        %v1974 = vand.u32 %v1765, 4294901760
        %v1975 = vsub.f32 %v1765, %v1974
        %v1976 = vand.u32 %v1975, 4294901760
        %v1977 = vsub.f32 %v1975, %v1976
        %v1978 = vand.u32 %v1977, 4294901760
        %1979 = vmatpush1.xpose.msra.mxu0 %v1978
        %1980 = vmatprep.subr.mxu0 0.0
        %1981 = vmatpush1.xpose.msra.mxu0 0.0
        %1982 = vmatprep.subr.mxu0 0.0
        %1983 = vmatpush1.xpose.msra.mxu0 0.0
        %1984 = vmatprep.subr.mxu0 0.0
        %1985 = vmatpush1.xpose.msra.mxu0 0.0
        %1986 = vmatprep.subr.mxu0 0.0
        %1987 = vmatpush1.xpose.msra.mxu0 0.0
        %1988 = vmatprep.subr.mxu0 0.0
        %1989 = vmatpush1.xpose.msra.mxu0 0.0
        %1990 = vmatprep.subr.mxu0 0.0
        %1991 = vmatpush1.xpose.msra.mxu0 0.0
        %1992 = vmatprep.subr.mxu0 0.0
        %1993 = vmatpush1.xpose.msra.mxu0 0.0
        %1994 = vmatprep.subr.mxu0 0.0
        %1995 = vmatpush1.xpose.msra.mxu0 0.0
        %1996 = vmatprep.subr.mxu0 0.0
        %1997 = vmatpush1.xpose.msra.mxu0 0.0
        %1998 = vmatprep.subr.mxu0 0.0
        %1999 = vmatpush1.xpose.msra.mxu0 0.0
        %2000 = vmatprep.subr.mxu0 0.0
        %2001 = vmatpush1.xpose.msra.mxu0 0.0
        %2002 = vmatprep.subr.mxu0 0.0
        %2003 = vmatpush1.xpose.msra.mxu0 0.0
        %2004 = vmatprep.subr.mxu0 0.0
        %2005 = vmatpush1.xpose.msra.mxu0 0.0
        %2006 = vmatprep.subr.mxu0 0.0
        %2007 = vmatpush1.xpose.msra.mxu0 0.0
        %2008 = vmatprep.subr.mxu0 0.0
        %2009 = vmatpush1.xpose.msra.mxu0 0.0
        %2010 = vmatprep.subr.mxu0 0.0
        %2011 = vmatpush1.xpose.msra.mxu0 0.0
        %2012 = vmatprep.mubr.f32.mxu0 0.0
        %v2013 = vand.u32 %v1714, 4294901760
        %2014 = vmatmul.mubr.f32.gmra.mrb[0].mxu0 %v2013
        %v2015 = vpop.f32.mrb[0].mxu0
        %v2016 = vadd.f32 %v1855, %v2015
        %v2017 = vpop.f32.mrb[0].mxu0
        %2018 = vmatprep.mubr.f32.mxu0 0.0
        %v2019 = vand.u32 %v1717, 4294901760
        %2020 = vmatmul.mubr.f32.gmra.mrb[0].mxu0 %v2019
        %v2021 = vpop.f32.mrb[0].mxu0
        %v2022 = vadd.f32 %v1865, %v2021
        %v2023 = vpop.f32.mrb[0].mxu0
        %2024 = vdwg.mxu0
        %2025 = vmatprep.subr.mxu0 0.0
        %v2026 = vand.u32 %v1720, 4294901760
        %v2027 = vsub.f32 %v1720, %v2026
        %2028 = vmatpush1.xpose.msra.mxu0 %v2027
        %2029 = vmatprep.subr.mxu0 0.0
        %v2030 = vand.u32 %v1723, 4294901760
        %v2031 = vsub.f32 %v1723, %v2030
        %2032 = vmatpush1.xpose.msra.mxu0 %v2031
        %2033 = vmatprep.subr.mxu0 0.0
        %v2034 = vand.u32 %v1726, 4294901760
        %v2035 = vsub.f32 %v1726, %v2034
        %2036 = vmatpush1.xpose.msra.mxu0 %v2035
        %2037 = vmatprep.subr.mxu0 0.0
        %v2038 = vand.u32 %v1729, 4294901760
        %v2039 = vsub.f32 %v1729, %v2038
        %2040 = vmatpush1.xpose.msra.mxu0 %v2039
        %2041 = vmatprep.subr.mxu0 0.0
        %v2042 = vand.u32 %v1732, 4294901760
        %v2043 = vsub.f32 %v1732, %v2042
        %2044 = vmatpush1.xpose.msra.mxu0 %v2043
        %2045 = vmatprep.subr.mxu0 0.0
        %v2046 = vand.u32 %v1735, 4294901760
        %v2047 = vsub.f32 %v1735, %v2046
        %2048 = vmatpush1.xpose.msra.mxu0 %v2047
        %2049 = vmatprep.subr.mxu0 0.0
        %v2050 = vand.u32 %v1738, 4294901760
        %v2051 = vsub.f32 %v1738, %v2050
        %2052 = vmatpush1.xpose.msra.mxu0 %v2051
        %2053 = vmatprep.subr.mxu0 0.0
        %v2054 = vand.u32 %v1741, 4294901760
        %v2055 = vsub.f32 %v1741, %v2054
        %2056 = vmatpush1.xpose.msra.mxu0 %v2055
        %2057 = vmatprep.subr.mxu0 0.0
        %v2058 = vand.u32 %v1744, 4294901760
        %v2059 = vsub.f32 %v1744, %v2058
        %2060 = vmatpush1.xpose.msra.mxu0 %v2059
        %2061 = vmatprep.subr.mxu0 0.0
        %v2062 = vand.u32 %v1747, 4294901760
        %v2063 = vsub.f32 %v1747, %v2062
        %2064 = vmatpush1.xpose.msra.mxu0 %v2063
        %2065 = vmatprep.subr.mxu0 0.0
        %v2066 = vand.u32 %v1750, 4294901760
        %v2067 = vsub.f32 %v1750, %v2066
        %2068 = vmatpush1.xpose.msra.mxu0 %v2067
        %2069 = vmatprep.subr.mxu0 0.0
        %v2070 = vand.u32 %v1753, 4294901760
        %v2071 = vsub.f32 %v1753, %v2070
        %2072 = vmatpush1.xpose.msra.mxu0 %v2071
        %2073 = vmatprep.subr.mxu0 0.0
        %v2074 = vand.u32 %v1756, 4294901760
        %v2075 = vsub.f32 %v1756, %v2074
        %2076 = vmatpush1.xpose.msra.mxu0 %v2075
        %2077 = vmatprep.subr.mxu0 0.0
        %v2078 = vand.u32 %v1759, 4294901760
        %v2079 = vsub.f32 %v1759, %v2078
        %2080 = vmatpush1.xpose.msra.mxu0 %v2079
        %2081 = vmatprep.subr.mxu0 0.0
        %v2082 = vand.u32 %v1762, 4294901760
        %v2083 = vsub.f32 %v1762, %v2082
        %2084 = vmatpush1.xpose.msra.mxu0 %v2083
        %2085 = vmatprep.subr.mxu0 0.0
        %v2086 = vand.u32 %v1765, 4294901760
        %v2087 = vsub.f32 %v1765, %v2086
        %2088 = vmatpush1.xpose.msra.mxu0 %v2087
        %2089 = vmatprep.subr.mxu0 0.0
        %2090 = vmatpush1.xpose.msra.mxu0 0.0
        %2091 = vmatprep.subr.mxu0 0.0
        %2092 = vmatpush1.xpose.msra.mxu0 0.0
        %2093 = vmatprep.subr.mxu0 0.0
        %2094 = vmatpush1.xpose.msra.mxu0 0.0
        %2095 = vmatprep.subr.mxu0 0.0
        %2096 = vmatpush1.xpose.msra.mxu0 0.0
        %2097 = vmatprep.subr.mxu0 0.0
        %2098 = vmatpush1.xpose.msra.mxu0 0.0
        %2099 = vmatprep.subr.mxu0 0.0
        %2100 = vmatpush1.xpose.msra.mxu0 0.0
        %2101 = vmatprep.subr.mxu0 0.0
        %2102 = vmatpush1.xpose.msra.mxu0 0.0
        %2103 = vmatprep.subr.mxu0 0.0
        %2104 = vmatpush1.xpose.msra.mxu0 0.0
        %2105 = vmatprep.subr.mxu0 0.0
        %2106 = vmatpush1.xpose.msra.mxu0 0.0
        %2107 = vmatprep.subr.mxu0 0.0
        %2108 = vmatpush1.xpose.msra.mxu0 0.0
        %2109 = vmatprep.subr.mxu0 0.0
        %2110 = vmatpush1.xpose.msra.mxu0 0.0
        %2111 = vmatprep.subr.mxu0 0.0
        %2112 = vmatpush1.xpose.msra.mxu0 0.0
        %2113 = vmatprep.subr.mxu0 0.0
        %2114 = vmatpush1.xpose.msra.mxu0 0.0
        %2115 = vmatprep.subr.mxu0 0.0
        %2116 = vmatpush1.xpose.msra.mxu0 0.0
        %2117 = vmatprep.subr.mxu0 0.0
        %2118 = vmatpush1.xpose.msra.mxu0 0.0
        %2119 = vmatprep.subr.mxu0 0.0
        %2120 = vmatpush1.xpose.msra.mxu0 0.0
        %2121 = vmatprep.mubr.f32.mxu0 0.0
        %v2122 = vand.u32 %v1714, 4294901760
        %v2123 = vsub.f32 %v1714, %v2122
        %2124 = vmatmul.mubr.f32.gmra.mrb[0].mxu0 %v2123
        %v2125 = vpop.f32.mrb[0].mxu0
        %v2126 = vadd.f32 %v2016, %v2125
        %v2127 = vpop.f32.mrb[0].mxu0
        %2128 = vmatprep.mubr.f32.mxu0 0.0
        %v2129 = vand.u32 %v1717, 4294901760
        %v2130 = vsub.f32 %v1717, %v2129
        %2131 = vmatmul.mubr.f32.gmra.mrb[0].mxu0 %v2130
        %v2132 = vpop.f32.mrb[0].mxu0
        %v2133 = vadd.f32 %v2022, %v2132
        %v2134 = vpop.f32.mrb[0].mxu0
        %2135 = vdwg.mxu0
        %2136 = vmatprep.subr.mxu0 0.0
        %v2137 = vand.u32 %v1720, 4294901760
        %2138 = vmatpush1.xpose.msra.mxu0 %v2137
        %2139 = vmatprep.subr.mxu0 0.0
        %v2140 = vand.u32 %v1723, 4294901760
        %2141 = vmatpush1.xpose.msra.mxu0 %v2140
        %2142 = vmatprep.subr.mxu0 0.0
        %v2143 = vand.u32 %v1726, 4294901760
        %2144 = vmatpush1.xpose.msra.mxu0 %v2143
        %2145 = vmatprep.subr.mxu0 0.0
        %v2146 = vand.u32 %v1729, 4294901760
        %2147 = vmatpush1.xpose.msra.mxu0 %v2146
        %2148 = vmatprep.subr.mxu0 0.0
        %v2149 = vand.u32 %v1732, 4294901760
        %2150 = vmatpush1.xpose.msra.mxu0 %v2149
        %2151 = vmatprep.subr.mxu0 0.0
        %v2152 = vand.u32 %v1735, 4294901760
        %2153 = vmatpush1.xpose.msra.mxu0 %v2152
        %2154 = vmatprep.subr.mxu0 0.0
        %v2155 = vand.u32 %v1738, 4294901760
        %2156 = vmatpush1.xpose.msra.mxu0 %v2155
        %2157 = vmatprep.subr.mxu0 0.0
        %v2158 = vand.u32 %v1741, 4294901760
        %2159 = vmatpush1.xpose.msra.mxu0 %v2158
        %2160 = vmatprep.subr.mxu0 0.0
        %v2161 = vand.u32 %v1744, 4294901760
        %2162 = vmatpush1.xpose.msra.mxu0 %v2161
        %2163 = vmatprep.subr.mxu0 0.0
        %v2164 = vand.u32 %v1747, 4294901760
        %2165 = vmatpush1.xpose.msra.mxu0 %v2164
        %2166 = vmatprep.subr.mxu0 0.0
        %v2167 = vand.u32 %v1750, 4294901760
        %2168 = vmatpush1.xpose.msra.mxu0 %v2167
        %2169 = vmatprep.subr.mxu0 0.0
        %v2170 = vand.u32 %v1753, 4294901760
        %2171 = vmatpush1.xpose.msra.mxu0 %v2170
        %2172 = vmatprep.subr.mxu0 0.0
        %v2173 = vand.u32 %v1756, 4294901760
        %2174 = vmatpush1.xpose.msra.mxu0 %v2173
        %2175 = vmatprep.subr.mxu0 0.0
        %v2176 = vand.u32 %v1759, 4294901760
        %2177 = vmatpush1.xpose.msra.mxu0 %v2176
        %2178 = vmatprep.subr.mxu0 0.0
        %v2179 = vand.u32 %v1762, 4294901760
        %2180 = vmatpush1.xpose.msra.mxu0 %v2179
        %2181 = vmatprep.subr.mxu0 0.0
        %v2182 = vand.u32 %v1765, 4294901760
        %2183 = vmatpush1.xpose.msra.mxu0 %v2182
        %2184 = vmatprep.subr.mxu0 0.0
        %2185 = vmatpush1.xpose.msra.mxu0 0.0
        %2186 = vmatprep.subr.mxu0 0.0
        %2187 = vmatpush1.xpose.msra.mxu0 0.0
        %2188 = vmatprep.subr.mxu0 0.0
        %2189 = vmatpush1.xpose.msra.mxu0 0.0
        %2190 = vmatprep.subr.mxu0 0.0
        %2191 = vmatpush1.xpose.msra.mxu0 0.0
        %2192 = vmatprep.subr.mxu0 0.0
        %2193 = vmatpush1.xpose.msra.mxu0 0.0
        %2194 = vmatprep.subr.mxu0 0.0
        %2195 = vmatpush1.xpose.msra.mxu0 0.0
        %2196 = vmatprep.subr.mxu0 0.0
        %2197 = vmatpush1.xpose.msra.mxu0 0.0
        %2198 = vmatprep.subr.mxu0 0.0
        %2199 = vmatpush1.xpose.msra.mxu0 0.0
        %2200 = vmatprep.subr.mxu0 0.0
        %2201 = vmatpush1.xpose.msra.mxu0 0.0
        %2202 = vmatprep.subr.mxu0 0.0
        %2203 = vmatpush1.xpose.msra.mxu0 0.0
        %2204 = vmatprep.subr.mxu0 0.0
        %2205 = vmatpush1.xpose.msra.mxu0 0.0
        %2206 = vmatprep.subr.mxu0 0.0
        %2207 = vmatpush1.xpose.msra.mxu0 0.0
        %2208 = vmatprep.subr.mxu0 0.0
        %2209 = vmatpush1.xpose.msra.mxu0 0.0
        %2210 = vmatprep.subr.mxu0 0.0
        %2211 = vmatpush1.xpose.msra.mxu0 0.0
        %2212 = vmatprep.subr.mxu0 0.0
        %2213 = vmatpush1.xpose.msra.mxu0 0.0
        %2214 = vmatprep.subr.mxu0 0.0
        %2215 = vmatpush1.xpose.msra.mxu0 0.0
        %2216 = vmatprep.mubr.f32.mxu0 0.0
        %v2217 = vand.u32 %v1714, 4294901760
        %v2218 = vsub.f32 %v1714, %v2217
        %v2219 = vand.u32 %v2218, 4294901760
        %2220 = vmatmul.mubr.f32.gmra.mrb[0].mxu0 %v2219
        %v2221 = vpop.f32.mrb[0].mxu0
        %v2222 = vadd.f32 %v2126, %v2221
        %v2223 = vpop.f32.mrb[0].mxu0
        %2224 = vmatprep.mubr.f32.mxu0 0.0
        %v2225 = vand.u32 %v1717, 4294901760
        %v2226 = vsub.f32 %v1717, %v2225
        %v2227 = vand.u32 %v2226, 4294901760
        %2228 = vmatmul.mubr.f32.gmra.mrb[0].mxu0 %v2227
        %v2229 = vpop.f32.mrb[0].mxu0
        %v2230 = vadd.f32 %v2133, %v2229
        %v2231 = vpop.f32.mrb[0].mxu0
        %2232 = vdwg.mxu0
        %2233 = vmatprep.subr.mxu0 0.0
        %v2234 = vand.u32 %v1720, 4294901760
        %v2235 = vsub.f32 %v1720, %v2234
        %v2236 = vand.u32 %v2235, 4294901760
        %2237 = vmatpush1.xpose.msra.mxu0 %v2236
        %2238 = vmatprep.subr.mxu0 0.0
        %v2239 = vand.u32 %v1723, 4294901760
        %v2240 = vsub.f32 %v1723, %v2239
        %v2241 = vand.u32 %v2240, 4294901760
        %2242 = vmatpush1.xpose.msra.mxu0 %v2241
        %2243 = vmatprep.subr.mxu0 0.0
        %v2244 = vand.u32 %v1726, 4294901760
        %v2245 = vsub.f32 %v1726, %v2244
        %v2246 = vand.u32 %v2245, 4294901760
        %2247 = vmatpush1.xpose.msra.mxu0 %v2246
        %2248 = vmatprep.subr.mxu0 0.0
        %v2249 = vand.u32 %v1729, 4294901760
        %v2250 = vsub.f32 %v1729, %v2249
        %v2251 = vand.u32 %v2250, 4294901760
        %2252 = vmatpush1.xpose.msra.mxu0 %v2251
        %2253 = vmatprep.subr.mxu0 0.0
        %v2254 = vand.u32 %v1732, 4294901760
        %v2255 = vsub.f32 %v1732, %v2254
        %v2256 = vand.u32 %v2255, 4294901760
        %2257 = vmatpush1.xpose.msra.mxu0 %v2256
        %2258 = vmatprep.subr.mxu0 0.0
        %v2259 = vand.u32 %v1735, 4294901760
        %v2260 = vsub.f32 %v1735, %v2259
        %v2261 = vand.u32 %v2260, 4294901760
        %2262 = vmatpush1.xpose.msra.mxu0 %v2261
        %2263 = vmatprep.subr.mxu0 0.0
        %v2264 = vand.u32 %v1738, 4294901760
        %v2265 = vsub.f32 %v1738, %v2264
        %v2266 = vand.u32 %v2265, 4294901760
        %2267 = vmatpush1.xpose.msra.mxu0 %v2266
        %2268 = vmatprep.subr.mxu0 0.0
        %v2269 = vand.u32 %v1741, 4294901760
        %v2270 = vsub.f32 %v1741, %v2269
        %v2271 = vand.u32 %v2270, 4294901760
        %2272 = vmatpush1.xpose.msra.mxu0 %v2271
        %2273 = vmatprep.subr.mxu0 0.0
        %v2274 = vand.u32 %v1744, 4294901760
        %v2275 = vsub.f32 %v1744, %v2274
        %v2276 = vand.u32 %v2275, 4294901760
        %2277 = vmatpush1.xpose.msra.mxu0 %v2276
        %2278 = vmatprep.subr.mxu0 0.0
        %v2279 = vand.u32 %v1747, 4294901760
        %v2280 = vsub.f32 %v1747, %v2279
        %v2281 = vand.u32 %v2280, 4294901760
        %2282 = vmatpush1.xpose.msra.mxu0 %v2281
        %2283 = vmatprep.subr.mxu0 0.0
        %v2284 = vand.u32 %v1750, 4294901760
        %v2285 = vsub.f32 %v1750, %v2284
        %v2286 = vand.u32 %v2285, 4294901760
        %2287 = vmatpush1.xpose.msra.mxu0 %v2286
        %2288 = vmatprep.subr.mxu0 0.0
        %v2289 = vand.u32 %v1753, 4294901760
        %v2290 = vsub.f32 %v1753, %v2289
        %v2291 = vand.u32 %v2290, 4294901760
        %2292 = vmatpush1.xpose.msra.mxu0 %v2291
        %2293 = vmatprep.subr.mxu0 0.0
        %v2294 = vand.u32 %v1756, 4294901760
        %v2295 = vsub.f32 %v1756, %v2294
        %v2296 = vand.u32 %v2295, 4294901760
        %2297 = vmatpush1.xpose.msra.mxu0 %v2296
        %2298 = vmatprep.subr.mxu0 0.0
        %v2299 = vand.u32 %v1759, 4294901760
        %v2300 = vsub.f32 %v1759, %v2299
        %v2301 = vand.u32 %v2300, 4294901760
        %2302 = vmatpush1.xpose.msra.mxu0 %v2301
        %2303 = vmatprep.subr.mxu0 0.0
        %v2304 = vand.u32 %v1762, 4294901760
        %v2305 = vsub.f32 %v1762, %v2304
        %v2306 = vand.u32 %v2305, 4294901760
        %2307 = vmatpush1.xpose.msra.mxu0 %v2306
        %2308 = vmatprep.subr.mxu0 0.0
        %v2309 = vand.u32 %v1765, 4294901760
        %v2310 = vsub.f32 %v1765, %v2309
        %v2311 = vand.u32 %v2310, 4294901760
        %2312 = vmatpush1.xpose.msra.mxu0 %v2311
        %2313 = vmatprep.subr.mxu0 0.0
        %2314 = vmatpush1.xpose.msra.mxu0 0.0
        %2315 = vmatprep.subr.mxu0 0.0
        %2316 = vmatpush1.xpose.msra.mxu0 0.0
        %2317 = vmatprep.subr.mxu0 0.0
        %2318 = vmatpush1.xpose.msra.mxu0 0.0
        %2319 = vmatprep.subr.mxu0 0.0
        %2320 = vmatpush1.xpose.msra.mxu0 0.0
        %2321 = vmatprep.subr.mxu0 0.0
        %2322 = vmatpush1.xpose.msra.mxu0 0.0
        %2323 = vmatprep.subr.mxu0 0.0
        %2324 = vmatpush1.xpose.msra.mxu0 0.0
        %2325 = vmatprep.subr.mxu0 0.0
        %2326 = vmatpush1.xpose.msra.mxu0 0.0
        %2327 = vmatprep.subr.mxu0 0.0
        %2328 = vmatpush1.xpose.msra.mxu0 0.0
        %2329 = vmatprep.subr.mxu0 0.0
        %2330 = vmatpush1.xpose.msra.mxu0 0.0
        %2331 = vmatprep.subr.mxu0 0.0
        %2332 = vmatpush1.xpose.msra.mxu0 0.0
        %2333 = vmatprep.subr.mxu0 0.0
        %2334 = vmatpush1.xpose.msra.mxu0 0.0
        %2335 = vmatprep.subr.mxu0 0.0
        %2336 = vmatpush1.xpose.msra.mxu0 0.0
        %2337 = vmatprep.subr.mxu0 0.0
        %2338 = vmatpush1.xpose.msra.mxu0 0.0
        %2339 = vmatprep.subr.mxu0 0.0
        %2340 = vmatpush1.xpose.msra.mxu0 0.0
        %2341 = vmatprep.subr.mxu0 0.0
        %2342 = vmatpush1.xpose.msra.mxu0 0.0
        %2343 = vmatprep.subr.mxu0 0.0
        %2344 = vmatpush1.xpose.msra.mxu0 0.0
        %2345 = vmatprep.mubr.f32.mxu0 0.0
        %v2346 = vand.u32 %v1714, 4294901760
        %2347 = vmatmul.mubr.f32.gmra.mrb[0].mxu0 %v2346
        %v2348 = vpop.f32.mrb[0].mxu0
        %v2349 = vadd.f32 %v2222, %v2348
        %v2350 = vpop.f32.mrb[0].mxu0
        %2351 = vmatprep.mubr.f32.mxu0 0.0
        %v2352 = vand.u32 %v1717, 4294901760
        %2353 = vmatmul.mubr.f32.gmra.mrb[0].mxu0 %v2352
        %v2354 = vpop.f32.mrb[0].mxu0
        %v2355 = vadd.f32 %v2230, %v2354
        %v2356 = vpop.f32.mrb[0].mxu0
        %2357 = vdwg.mxu0
        %2358 = vmatprep.subr.mxu0 0.0
        %v2359 = vand.u32 %v1720, 4294901760
        %2360 = vmatpush1.xpose.msra.mxu0 %v2359
        %2361 = vmatprep.subr.mxu0 0.0
        %v2362 = vand.u32 %v1723, 4294901760
        %2363 = vmatpush1.xpose.msra.mxu0 %v2362
        %2364 = vmatprep.subr.mxu0 0.0
        %v2365 = vand.u32 %v1726, 4294901760
        %2366 = vmatpush1.xpose.msra.mxu0 %v2365
        %2367 = vmatprep.subr.mxu0 0.0
        %v2368 = vand.u32 %v1729, 4294901760
        %2369 = vmatpush1.xpose.msra.mxu0 %v2368
        %2370 = vmatprep.subr.mxu0 0.0
        %v2371 = vand.u32 %v1732, 4294901760
        %2372 = vmatpush1.xpose.msra.mxu0 %v2371
        %2373 = vmatprep.subr.mxu0 0.0
        %v2374 = vand.u32 %v1735, 4294901760
        %2375 = vmatpush1.xpose.msra.mxu0 %v2374
        %2376 = vmatprep.subr.mxu0 0.0
        %v2377 = vand.u32 %v1738, 4294901760
        %2378 = vmatpush1.xpose.msra.mxu0 %v2377
        %2379 = vmatprep.subr.mxu0 0.0
        %v2380 = vand.u32 %v1741, 4294901760
        %2381 = vmatpush1.xpose.msra.mxu0 %v2380
        %2382 = vmatprep.subr.mxu0 0.0
        %v2383 = vand.u32 %v1744, 4294901760
        %2384 = vmatpush1.xpose.msra.mxu0 %v2383
        %2385 = vmatprep.subr.mxu0 0.0
        %v2386 = vand.u32 %v1747, 4294901760
        %2387 = vmatpush1.xpose.msra.mxu0 %v2386
        %2388 = vmatprep.subr.mxu0 0.0
        %v2389 = vand.u32 %v1750, 4294901760
        %2390 = vmatpush1.xpose.msra.mxu0 %v2389
        %2391 = vmatprep.subr.mxu0 0.0
        %v2392 = vand.u32 %v1753, 4294901760
        %2393 = vmatpush1.xpose.msra.mxu0 %v2392
        %2394 = vmatprep.subr.mxu0 0.0
        %v2395 = vand.u32 %v1756, 4294901760
        %2396 = vmatpush1.xpose.msra.mxu0 %v2395
        %2397 = vmatprep.subr.mxu0 0.0
        %v2398 = vand.u32 %v1759, 4294901760
        %2399 = vmatpush1.xpose.msra.mxu0 %v2398
        %2400 = vmatprep.subr.mxu0 0.0
        %v2401 = vand.u32 %v1762, 4294901760
        %2402 = vmatpush1.xpose.msra.mxu0 %v2401
        %2403 = vmatprep.subr.mxu0 0.0
        %v2404 = vand.u32 %v1765, 4294901760
        %2405 = vmatpush1.xpose.msra.mxu0 %v2404
        %2406 = vmatprep.subr.mxu0 0.0
        %2407 = vmatpush1.xpose.msra.mxu0 0.0
        %2408 = vmatprep.subr.mxu0 0.0
        %2409 = vmatpush1.xpose.msra.mxu0 0.0
        %2410 = vmatprep.subr.mxu0 0.0
        %2411 = vmatpush1.xpose.msra.mxu0 0.0
        %2412 = vmatprep.subr.mxu0 0.0
        %2413 = vmatpush1.xpose.msra.mxu0 0.0
        %2414 = vmatprep.subr.mxu0 0.0
        %2415 = vmatpush1.xpose.msra.mxu0 0.0
        %2416 = vmatprep.subr.mxu0 0.0
        %2417 = vmatpush1.xpose.msra.mxu0 0.0
        %2418 = vmatprep.subr.mxu0 0.0
        %2419 = vmatpush1.xpose.msra.mxu0 0.0
        %2420 = vmatprep.subr.mxu0 0.0
        %2421 = vmatpush1.xpose.msra.mxu0 0.0
        %2422 = vmatprep.subr.mxu0 0.0
        %2423 = vmatpush1.xpose.msra.mxu0 0.0
        %2424 = vmatprep.subr.mxu0 0.0
        %2425 = vmatpush1.xpose.msra.mxu0 0.0
        %2426 = vmatprep.subr.mxu0 0.0
        %2427 = vmatpush1.xpose.msra.mxu0 0.0
        %2428 = vmatprep.subr.mxu0 0.0
        %2429 = vmatpush1.xpose.msra.mxu0 0.0
        %2430 = vmatprep.subr.mxu0 0.0
        %2431 = vmatpush1.xpose.msra.mxu0 0.0
        %2432 = vmatprep.subr.mxu0 0.0
        %2433 = vmatpush1.xpose.msra.mxu0 0.0
        %2434 = vmatprep.subr.mxu0 0.0
        %2435 = vmatpush1.xpose.msra.mxu0 0.0
        %2436 = vmatprep.subr.mxu0 0.0
        %2437 = vmatpush1.xpose.msra.mxu0 0.0
        %2438 = vmatprep.mubr.f32.mxu0 0.0
        %v2439 = vand.u32 %v1714, 4294901760
        %2440 = vmatmul.mubr.f32.gmra.mrb[0].mxu0 %v2439
        %v2441 = vpop.f32.mrb[0].mxu0
        %v2442 = vadd.f32 %v2349, %v2441
        %v2443 = vpop.f32.mrb[0].mxu0
        %2444 = vmatprep.mubr.f32.mxu0 0.0
        %v2445 = vand.u32 %v1717, 4294901760
        %2446 = vmatmul.mubr.f32.gmra.mrb[0].mxu0 %v2445
        %v2447 = vpop.f32.mrb[0].mxu0
        %v2448 = vadd.f32 %v2355, %v2447
        %v2449 = vpop.f32.mrb[0].mxu0
        %2450 = vdwg.mxu0
        %v2451 = vmax.f32 %v2442, 0.0
        %v2452 = vmax.f32 %v2448, 0.0
        %v2453 = vld [vmem:[%s5] sm:$0xff]
        %v2454 = vld [vmem:[%s5 + $0x8] sm:$0xff]
        %v2455 = vld [vmem:[%s5 + $0x10] sm:$0xff]
        %v2456 = vld [vmem:[%s5 + $0x18] sm:$0xff]
        %v2457 = vld [vmem:[%s5 + $0x20] sm:$0xff]
        %v2458 = vld [vmem:[%s5 + $0x28] sm:$0xff]
        %v2459 = vld [vmem:[%s5 + $0x30] sm:$0xff]
        %v2460 = vld [vmem:[%s5 + $0x38] sm:$0xff]
        %v2461 = vld [vmem:[%s5 + $0x40] sm:$0xff]
        %v2462 = vld [vmem:[%s5 + $0x48] sm:$0xff]
        %v2463 = vld [vmem:[%s5 + $0x50] sm:$0xff]
        %v2464 = vld [vmem:[%s5 + $0x58] sm:$0xff]
        %v2465 = vld [vmem:[%s5 + $0x60] sm:$0xff]
        %v2466 = vld [vmem:[%s5 + $0x68] sm:$0xff]
        %v2467 = vld [vmem:[%s5 + $0x70] sm:$0xff]
        %v2468 = vld [vmem:[%s5 + $0x78] sm:$0xff]
        %v2469 = vld [vmem:[%s5 + $0x80] sm:$0xff]
        %v2470 = vld [vmem:[%s5 + $0x88] sm:$0xff]
        %v2471 = vld [vmem:[%s5 + $0x90] sm:$0xff]
        %v2472 = vld [vmem:[%s5 + $0x98] sm:$0xff]
        %v2473 = vld [vmem:[%s5 + $0xa0] sm:$0xff]
        %v2474 = vld [vmem:[%s5 + $0xa8] sm:$0xff]
        %v2475 = vld [vmem:[%s5 + $0xb0] sm:$0xff]
        %v2476 = vld [vmem:[%s5 + $0xb8] sm:$0xff]
        %v2477 = vld [vmem:[%s5 + $0xc0] sm:$0xff]
        %v2478 = vld [vmem:[%s5 + $0xc8] sm:$0xff]
        %v2479 = vld [vmem:[%s5 + $0xd0] sm:$0xff]
        %v2480 = vld [vmem:[%s5 + $0xd8] sm:$0xff]
        %v2481 = vld [vmem:[%s5 + $0xe0] sm:$0xff]
        %v2482 = vld [vmem:[%s5 + $0xe8] sm:$0xff]
        %v2483 = vld [vmem:[%s5 + $0xf0] sm:$0xff]
        %v2484 = vld [vmem:[%s5 + $0xf8] sm:$0xff]
        %v2485 = vld [vmem:[%s6] sm:$0x3]
        %v2487 = vlaneseq
        %v2488 = vshrl.u32 %v2487, 7
        %v2489 = vsub.s32 0, %v2488
        %v2490 = vrot.slane %v2485, %v2489
        %v2491 = vlaneseq
        %v2492 = vshrl.u32 %v2491, 7
        %v2493 = vsub.s32 1, %v2492
        %v2494 = vrot.slane %v2485, %v2493
        %v2497 = vand.u32 %v2454, 4294901760
        %2498 = vmatprep.subr.mxu0 %v2497
        %v2499 = vand.u32 %v2453, 4294901760
        %2500 = vmatpush1.msra.mxu0 %v2499
        %v2501 = vand.u32 %v2456, 4294901760
        %2502 = vmatprep.subr.mxu0 %v2501
        %v2503 = vand.u32 %v2455, 4294901760
        %2504 = vmatpush1.msra.mxu0 %v2503
        %v2505 = vand.u32 %v2458, 4294901760
        %2506 = vmatprep.subr.mxu0 %v2505
        %v2507 = vand.u32 %v2457, 4294901760
        %2508 = vmatpush1.msra.mxu0 %v2507
        %v2509 = vand.u32 %v2460, 4294901760
        %2510 = vmatprep.subr.mxu0 %v2509
        %v2511 = vand.u32 %v2459, 4294901760
        %2512 = vmatpush1.msra.mxu0 %v2511
        %v2513 = vand.u32 %v2462, 4294901760
        %2514 = vmatprep.subr.mxu0 %v2513
        %v2515 = vand.u32 %v2461, 4294901760
        %2516 = vmatpush1.msra.mxu0 %v2515
        %v2517 = vand.u32 %v2464, 4294901760
        %2518 = vmatprep.subr.mxu0 %v2517
        %v2519 = vand.u32 %v2463, 4294901760
        %2520 = vmatpush1.msra.mxu0 %v2519
        %v2521 = vand.u32 %v2466, 4294901760
        %2522 = vmatprep.subr.mxu0 %v2521
        %v2523 = vand.u32 %v2465, 4294901760
        %2524 = vmatpush1.msra.mxu0 %v2523
        %v2525 = vand.u32 %v2468, 4294901760
        %2526 = vmatprep.subr.mxu0 %v2525
        %v2527 = vand.u32 %v2467, 4294901760
        %2528 = vmatpush1.msra.mxu0 %v2527
        %v2529 = vand.u32 %v2470, 4294901760
        %2530 = vmatprep.subr.mxu0 %v2529
        %v2531 = vand.u32 %v2469, 4294901760
        %2532 = vmatpush1.msra.mxu0 %v2531
        %v2533 = vand.u32 %v2472, 4294901760
        %2534 = vmatprep.subr.mxu0 %v2533
        %v2535 = vand.u32 %v2471, 4294901760
        %2536 = vmatpush1.msra.mxu0 %v2535
        %v2537 = vand.u32 %v2474, 4294901760
        %2538 = vmatprep.subr.mxu0 %v2537
        %v2539 = vand.u32 %v2473, 4294901760
        %2540 = vmatpush1.msra.mxu0 %v2539
        %v2541 = vand.u32 %v2476, 4294901760
        %2542 = vmatprep.subr.mxu0 %v2541
        %v2543 = vand.u32 %v2475, 4294901760
        %2544 = vmatpush1.msra.mxu0 %v2543
        %v2545 = vand.u32 %v2478, 4294901760
        %2546 = vmatprep.subr.mxu0 %v2545
        %v2547 = vand.u32 %v2477, 4294901760
        %2548 = vmatpush1.msra.mxu0 %v2547
        %v2549 = vand.u32 %v2480, 4294901760
        %2550 = vmatprep.subr.mxu0 %v2549
        %v2551 = vand.u32 %v2479, 4294901760
        %2552 = vmatpush1.msra.mxu0 %v2551
        %v2553 = vand.u32 %v2482, 4294901760
        %2554 = vmatprep.subr.mxu0 %v2553
        %v2555 = vand.u32 %v2481, 4294901760
        %2556 = vmatpush1.msra.mxu0 %v2555
        %v2557 = vand.u32 %v2484, 4294901760
        %2558 = vmatprep.subr.mxu0 %v2557
        %v2559 = vand.u32 %v2483, 4294901760
        %2560 = vmatpush1.msra.mxu0 %v2559
        %2561 = vmatprep.subr.mxu0 0.0
        %2562 = vmatpush1.msra.mxu0 0.0
        %2563 = vmatprep.subr.mxu0 0.0
        %2564 = vmatpush1.msra.mxu0 0.0
        %2565 = vmatprep.subr.mxu0 0.0
        %2566 = vmatpush1.msra.mxu0 0.0
        %2567 = vmatprep.subr.mxu0 0.0
        %2568 = vmatpush1.msra.mxu0 0.0
        %2569 = vmatprep.subr.mxu0 0.0
        %2570 = vmatpush1.msra.mxu0 0.0
        %2571 = vmatprep.subr.mxu0 0.0
        %2572 = vmatpush1.msra.mxu0 0.0
        %2573 = vmatprep.subr.mxu0 0.0
        %2574 = vmatpush1.msra.mxu0 0.0
        %2575 = vmatprep.subr.mxu0 0.0
        %2576 = vmatpush1.msra.mxu0 0.0
        %2577 = vmatprep.subr.mxu0 0.0
        %2578 = vmatpush1.msra.mxu0 0.0
        %2579 = vmatprep.subr.mxu0 0.0
        %2580 = vmatpush1.msra.mxu0 0.0
        %2581 = vmatprep.subr.mxu0 0.0
        %2582 = vmatpush1.msra.mxu0 0.0
        %2583 = vmatprep.subr.mxu0 0.0
        %2584 = vmatpush1.msra.mxu0 0.0
        %2585 = vmatprep.subr.mxu0 0.0
        %2586 = vmatpush1.msra.mxu0 0.0
        %2587 = vmatprep.subr.mxu0 0.0
        %2588 = vmatpush1.msra.mxu0 0.0
        %2589 = vmatprep.subr.mxu0 0.0
        %2590 = vmatpush1.msra.mxu0 0.0
        %2591 = vmatprep.subr.mxu0 0.0
        %2592 = vmatpush1.msra.mxu0 0.0
        %2593 = vmatprep.mubr.f32.mxu0 0.0
        %v2594 = vand.u32 %v2451, 4294901760
        %v2595 = vsub.f32 %v2451, %v2594
        %v2596 = vand.u32 %v2595, 4294901760
        %v2597 = vsub.f32 %v2595, %v2596
        %v2598 = vand.u32 %v2597, 4294901760
        %2599 = vmatmul.mubr.f32.gmra.mrb[0].mxu0 %v2598
        %v2600 = vpop.f32.mrb[0].mxu0
        %v2601 = vadd.f32 %v2490, %v2600
        %v2602 = vpop.f32.mrb[0].mxu0
        %v2603 = vadd.f32 %v2494, %v2602
        %2604 = vmatprep.mubr.f32.mxu0 0.0
        %v2605 = vand.u32 %v2452, 4294901760
        %v2606 = vsub.f32 %v2452, %v2605
        %v2607 = vand.u32 %v2606, 4294901760
        %v2608 = vsub.f32 %v2606, %v2607
        %v2609 = vand.u32 %v2608, 4294901760
        %2610 = vmatmul.mubr.f32.gmra.mrb[0].mxu0 %v2609
        %v2611 = vpop.f32.mrb[0].mxu0
        %v2612 = vadd.f32 %v2490, %v2611
        %v2613 = vpop.f32.mrb[0].mxu0
        %v2614 = vadd.f32 %v2494, %v2613
        %2615 = vdwg.mxu0
        %v2616 = vand.u32 %v2454, 4294901760
        %v2617 = vsub.f32 %v2454, %v2616
        %v2618 = vand.u32 %v2617, 4294901760
        %v2619 = vsub.f32 %v2617, %v2618
        %v2620 = vand.u32 %v2619, 4294901760
        %2621 = vmatprep.subr.mxu0 %v2620
        %v2622 = vand.u32 %v2453, 4294901760
        %v2623 = vsub.f32 %v2453, %v2622
        %v2624 = vand.u32 %v2623, 4294901760
        %v2625 = vsub.f32 %v2623, %v2624
        %v2626 = vand.u32 %v2625, 4294901760
        %2627 = vmatpush1.msra.mxu0 %v2626
        %v2628 = vand.u32 %v2456, 4294901760
        %v2629 = vsub.f32 %v2456, %v2628
        %v2630 = vand.u32 %v2629, 4294901760
        %v2631 = vsub.f32 %v2629, %v2630
        %v2632 = vand.u32 %v2631, 4294901760
        %2633 = vmatprep.subr.mxu0 %v2632
        %v2634 = vand.u32 %v2455, 4294901760
        %v2635 = vsub.f32 %v2455, %v2634
        %v2636 = vand.u32 %v2635, 4294901760
        %v2637 = vsub.f32 %v2635, %v2636
        %v2638 = vand.u32 %v2637, 4294901760
        %2639 = vmatpush1.msra.mxu0 %v2638
        %v2640 = vand.u32 %v2458, 4294901760
        %v2641 = vsub.f32 %v2458, %v2640
        %v2642 = vand.u32 %v2641, 4294901760
        %v2643 = vsub.f32 %v2641, %v2642
        %v2644 = vand.u32 %v2643, 4294901760
        %2645 = vmatprep.subr.mxu0 %v2644
        %v2646 = vand.u32 %v2457, 4294901760
        %v2647 = vsub.f32 %v2457, %v2646
        %v2648 = vand.u32 %v2647, 4294901760
        %v2649 = vsub.f32 %v2647, %v2648
        %v2650 = vand.u32 %v2649, 4294901760
        %2651 = vmatpush1.msra.mxu0 %v2650
        %v2652 = vand.u32 %v2460, 4294901760
        %v2653 = vsub.f32 %v2460, %v2652
        %v2654 = vand.u32 %v2653, 4294901760
        %v2655 = vsub.f32 %v2653, %v2654
        %v2656 = vand.u32 %v2655, 4294901760
        %2657 = vmatprep.subr.mxu0 %v2656
        %v2658 = vand.u32 %v2459, 4294901760
        %v2659 = vsub.f32 %v2459, %v2658
        %v2660 = vand.u32 %v2659, 4294901760
        %v2661 = vsub.f32 %v2659, %v2660
        %v2662 = vand.u32 %v2661, 4294901760
        %2663 = vmatpush1.msra.mxu0 %v2662
        %v2664 = vand.u32 %v2462, 4294901760
        %v2665 = vsub.f32 %v2462, %v2664
        %v2666 = vand.u32 %v2665, 4294901760
        %v2667 = vsub.f32 %v2665, %v2666
        %v2668 = vand.u32 %v2667, 4294901760
        %2669 = vmatprep.subr.mxu0 %v2668
        %v2670 = vand.u32 %v2461, 4294901760
        %v2671 = vsub.f32 %v2461, %v2670
        %v2672 = vand.u32 %v2671, 4294901760
        %v2673 = vsub.f32 %v2671, %v2672
        %v2674 = vand.u32 %v2673, 4294901760
        %2675 = vmatpush1.msra.mxu0 %v2674
        %v2676 = vand.u32 %v2464, 4294901760
        %v2677 = vsub.f32 %v2464, %v2676
        %v2678 = vand.u32 %v2677, 4294901760
        %v2679 = vsub.f32 %v2677, %v2678
        %v2680 = vand.u32 %v2679, 4294901760
        %2681 = vmatprep.subr.mxu0 %v2680
        %v2682 = vand.u32 %v2463, 4294901760
        %v2683 = vsub.f32 %v2463, %v2682
        %v2684 = vand.u32 %v2683, 4294901760
        %v2685 = vsub.f32 %v2683, %v2684
        %v2686 = vand.u32 %v2685, 4294901760
        %2687 = vmatpush1.msra.mxu0 %v2686
        %v2688 = vand.u32 %v2466, 4294901760
        %v2689 = vsub.f32 %v2466, %v2688
        %v2690 = vand.u32 %v2689, 4294901760
        %v2691 = vsub.f32 %v2689, %v2690
        %v2692 = vand.u32 %v2691, 4294901760
        %2693 = vmatprep.subr.mxu0 %v2692
        %v2694 = vand.u32 %v2465, 4294901760
        %v2695 = vsub.f32 %v2465, %v2694
        %v2696 = vand.u32 %v2695, 4294901760
        %v2697 = vsub.f32 %v2695, %v2696
        %v2698 = vand.u32 %v2697, 4294901760
        %2699 = vmatpush1.msra.mxu0 %v2698
        %v2700 = vand.u32 %v2468, 4294901760
        %v2701 = vsub.f32 %v2468, %v2700
        %v2702 = vand.u32 %v2701, 4294901760
        %v2703 = vsub.f32 %v2701, %v2702
        %v2704 = vand.u32 %v2703, 4294901760
        %2705 = vmatprep.subr.mxu0 %v2704
        %v2706 = vand.u32 %v2467, 4294901760
        %v2707 = vsub.f32 %v2467, %v2706
        %v2708 = vand.u32 %v2707, 4294901760
        %v2709 = vsub.f32 %v2707, %v2708
        %v2710 = vand.u32 %v2709, 4294901760
        %2711 = vmatpush1.msra.mxu0 %v2710
        %v2712 = vand.u32 %v2470, 4294901760
        %v2713 = vsub.f32 %v2470, %v2712
        %v2714 = vand.u32 %v2713, 4294901760
        %v2715 = vsub.f32 %v2713, %v2714
        %v2716 = vand.u32 %v2715, 4294901760
        %2717 = vmatprep.subr.mxu0 %v2716
        %v2718 = vand.u32 %v2469, 4294901760
        %v2719 = vsub.f32 %v2469, %v2718
        %v2720 = vand.u32 %v2719, 4294901760
        %v2721 = vsub.f32 %v2719, %v2720
        %v2722 = vand.u32 %v2721, 4294901760
        %2723 = vmatpush1.msra.mxu0 %v2722
        %v2724 = vand.u32 %v2472, 4294901760
        %v2725 = vsub.f32 %v2472, %v2724
        %v2726 = vand.u32 %v2725, 4294901760
        %v2727 = vsub.f32 %v2725, %v2726
        %v2728 = vand.u32 %v2727, 4294901760
        %2729 = vmatprep.subr.mxu0 %v2728
        %v2730 = vand.u32 %v2471, 4294901760
        %v2731 = vsub.f32 %v2471, %v2730
        %v2732 = vand.u32 %v2731, 4294901760
        %v2733 = vsub.f32 %v2731, %v2732
        %v2734 = vand.u32 %v2733, 4294901760
        %2735 = vmatpush1.msra.mxu0 %v2734
        %v2736 = vand.u32 %v2474, 4294901760
        %v2737 = vsub.f32 %v2474, %v2736
        %v2738 = vand.u32 %v2737, 4294901760
        %v2739 = vsub.f32 %v2737, %v2738
        %v2740 = vand.u32 %v2739, 4294901760
        %2741 = vmatprep.subr.mxu0 %v2740
        %v2742 = vand.u32 %v2473, 4294901760
        %v2743 = vsub.f32 %v2473, %v2742
        %v2744 = vand.u32 %v2743, 4294901760
        %v2745 = vsub.f32 %v2743, %v2744
        %v2746 = vand.u32 %v2745, 4294901760
        %2747 = vmatpush1.msra.mxu0 %v2746
        %v2748 = vand.u32 %v2476, 4294901760
        %v2749 = vsub.f32 %v2476, %v2748
        %v2750 = vand.u32 %v2749, 4294901760
        %v2751 = vsub.f32 %v2749, %v2750
        %v2752 = vand.u32 %v2751, 4294901760
        %2753 = vmatprep.subr.mxu0 %v2752
        %v2754 = vand.u32 %v2475, 4294901760
        %v2755 = vsub.f32 %v2475, %v2754
        %v2756 = vand.u32 %v2755, 4294901760
        %v2757 = vsub.f32 %v2755, %v2756
        %v2758 = vand.u32 %v2757, 4294901760
        %2759 = vmatpush1.msra.mxu0 %v2758
        %v2760 = vand.u32 %v2478, 4294901760
        %v2761 = vsub.f32 %v2478, %v2760
        %v2762 = vand.u32 %v2761, 4294901760
        %v2763 = vsub.f32 %v2761, %v2762
        %v2764 = vand.u32 %v2763, 4294901760
        %2765 = vmatprep.subr.mxu0 %v2764
        %v2766 = vand.u32 %v2477, 4294901760
        %v2767 = vsub.f32 %v2477, %v2766
        %v2768 = vand.u32 %v2767, 4294901760
        %v2769 = vsub.f32 %v2767, %v2768
        %v2770 = vand.u32 %v2769, 4294901760
        %2771 = vmatpush1.msra.mxu0 %v2770
        %v2772 = vand.u32 %v2480, 4294901760
        %v2773 = vsub.f32 %v2480, %v2772
        %v2774 = vand.u32 %v2773, 4294901760
        %v2775 = vsub.f32 %v2773, %v2774
        %v2776 = vand.u32 %v2775, 4294901760
        %2777 = vmatprep.subr.mxu0 %v2776
        %v2778 = vand.u32 %v2479, 4294901760
        %v2779 = vsub.f32 %v2479, %v2778
        %v2780 = vand.u32 %v2779, 4294901760
        %v2781 = vsub.f32 %v2779, %v2780
        %v2782 = vand.u32 %v2781, 4294901760
        %2783 = vmatpush1.msra.mxu0 %v2782
        %v2784 = vand.u32 %v2482, 4294901760
        %v2785 = vsub.f32 %v2482, %v2784
        %v2786 = vand.u32 %v2785, 4294901760
        %v2787 = vsub.f32 %v2785, %v2786
        %v2788 = vand.u32 %v2787, 4294901760
        %2789 = vmatprep.subr.mxu0 %v2788
        %v2790 = vand.u32 %v2481, 4294901760
        %v2791 = vsub.f32 %v2481, %v2790
        %v2792 = vand.u32 %v2791, 4294901760
        %v2793 = vsub.f32 %v2791, %v2792
        %v2794 = vand.u32 %v2793, 4294901760
        %2795 = vmatpush1.msra.mxu0 %v2794
        %v2796 = vand.u32 %v2484, 4294901760
        %v2797 = vsub.f32 %v2484, %v2796
        %v2798 = vand.u32 %v2797, 4294901760
        %v2799 = vsub.f32 %v2797, %v2798
        %v2800 = vand.u32 %v2799, 4294901760
        %2801 = vmatprep.subr.mxu0 %v2800
        %v2802 = vand.u32 %v2483, 4294901760
        %v2803 = vsub.f32 %v2483, %v2802
        %v2804 = vand.u32 %v2803, 4294901760
        %v2805 = vsub.f32 %v2803, %v2804
        %v2806 = vand.u32 %v2805, 4294901760
        %2807 = vmatpush1.msra.mxu0 %v2806
        %2808 = vmatprep.subr.mxu0 0.0
        %2809 = vmatpush1.msra.mxu0 0.0
        %2810 = vmatprep.subr.mxu0 0.0
        %2811 = vmatpush1.msra.mxu0 0.0
        %2812 = vmatprep.subr.mxu0 0.0
        %2813 = vmatpush1.msra.mxu0 0.0
        %2814 = vmatprep.subr.mxu0 0.0
        %2815 = vmatpush1.msra.mxu0 0.0
        %2816 = vmatprep.subr.mxu0 0.0
        %2817 = vmatpush1.msra.mxu0 0.0
        %2818 = vmatprep.subr.mxu0 0.0
        %2819 = vmatpush1.msra.mxu0 0.0
        %2820 = vmatprep.subr.mxu0 0.0
        %2821 = vmatpush1.msra.mxu0 0.0
        %2822 = vmatprep.subr.mxu0 0.0
        %2823 = vmatpush1.msra.mxu0 0.0
        %2824 = vmatprep.subr.mxu0 0.0
        %2825 = vmatpush1.msra.mxu0 0.0
        %2826 = vmatprep.subr.mxu0 0.0
        %2827 = vmatpush1.msra.mxu0 0.0
        %2828 = vmatprep.subr.mxu0 0.0
        %2829 = vmatpush1.msra.mxu0 0.0
        %2830 = vmatprep.subr.mxu0 0.0
        %2831 = vmatpush1.msra.mxu0 0.0
        %2832 = vmatprep.subr.mxu0 0.0
        %2833 = vmatpush1.msra.mxu0 0.0
        %2834 = vmatprep.subr.mxu0 0.0
        %2835 = vmatpush1.msra.mxu0 0.0
        %2836 = vmatprep.subr.mxu0 0.0
        %2837 = vmatpush1.msra.mxu0 0.0
        %2838 = vmatprep.subr.mxu0 0.0
        %2839 = vmatpush1.msra.mxu0 0.0
        %2840 = vmatprep.mubr.f32.mxu0 0.0
        %v2841 = vand.u32 %v2451, 4294901760
        %2842 = vmatmul.mubr.f32.gmra.mrb[0].mxu0 %v2841
        %v2843 = vpop.f32.mrb[0].mxu0
        %v2844 = vadd.f32 %v2601, %v2843
        %v2845 = vpop.f32.mrb[0].mxu0
        %v2846 = vadd.f32 %v2603, %v2845
        %2847 = vmatprep.mubr.f32.mxu0 0.0
        %v2848 = vand.u32 %v2452, 4294901760
        %2849 = vmatmul.mubr.f32.gmra.mrb[0].mxu0 %v2848
        %v2850 = vpop.f32.mrb[0].mxu0
        %v2851 = vadd.f32 %v2612, %v2850
        %v2852 = vpop.f32.mrb[0].mxu0
        %v2853 = vadd.f32 %v2614, %v2852
        %2854 = vdwg.mxu0
        %v2855 = vand.u32 %v2454, 4294901760
        %v2856 = vsub.f32 %v2454, %v2855
        %2857 = vmatprep.subr.mxu0 %v2856
        %v2858 = vand.u32 %v2453, 4294901760
        %v2859 = vsub.f32 %v2453, %v2858
        %2860 = vmatpush1.msra.mxu0 %v2859
        %v2861 = vand.u32 %v2456, 4294901760
        %v2862 = vsub.f32 %v2456, %v2861
        %2863 = vmatprep.subr.mxu0 %v2862
        %v2864 = vand.u32 %v2455, 4294901760
        %v2865 = vsub.f32 %v2455, %v2864
        %2866 = vmatpush1.msra.mxu0 %v2865
        %v2867 = vand.u32 %v2458, 4294901760
        %v2868 = vsub.f32 %v2458, %v2867
        %2869 = vmatprep.subr.mxu0 %v2868
        %v2870 = vand.u32 %v2457, 4294901760
        %v2871 = vsub.f32 %v2457, %v2870
        %2872 = vmatpush1.msra.mxu0 %v2871
        %v2873 = vand.u32 %v2460, 4294901760
        %v2874 = vsub.f32 %v2460, %v2873
        %2875 = vmatprep.subr.mxu0 %v2874
        %v2876 = vand.u32 %v2459, 4294901760
        %v2877 = vsub.f32 %v2459, %v2876
        %2878 = vmatpush1.msra.mxu0 %v2877
        %v2879 = vand.u32 %v2462, 4294901760
        %v2880 = vsub.f32 %v2462, %v2879
        %2881 = vmatprep.subr.mxu0 %v2880
        %v2882 = vand.u32 %v2461, 4294901760
        %v2883 = vsub.f32 %v2461, %v2882
        %2884 = vmatpush1.msra.mxu0 %v2883
        %v2885 = vand.u32 %v2464, 4294901760
        %v2886 = vsub.f32 %v2464, %v2885
        %2887 = vmatprep.subr.mxu0 %v2886
        %v2888 = vand.u32 %v2463, 4294901760
        %v2889 = vsub.f32 %v2463, %v2888
        %2890 = vmatpush1.msra.mxu0 %v2889
        %v2891 = vand.u32 %v2466, 4294901760
        %v2892 = vsub.f32 %v2466, %v2891
        %2893 = vmatprep.subr.mxu0 %v2892
        %v2894 = vand.u32 %v2465, 4294901760
        %v2895 = vsub.f32 %v2465, %v2894
        %2896 = vmatpush1.msra.mxu0 %v2895
        %v2897 = vand.u32 %v2468, 4294901760
        %v2898 = vsub.f32 %v2468, %v2897
        %2899 = vmatprep.subr.mxu0 %v2898
        %v2900 = vand.u32 %v2467, 4294901760
        %v2901 = vsub.f32 %v2467, %v2900
        %2902 = vmatpush1.msra.mxu0 %v2901
        %v2903 = vand.u32 %v2470, 4294901760
        %v2904 = vsub.f32 %v2470, %v2903
        %2905 = vmatprep.subr.mxu0 %v2904
        %v2906 = vand.u32 %v2469, 4294901760
        %v2907 = vsub.f32 %v2469, %v2906
        %2908 = vmatpush1.msra.mxu0 %v2907
        %v2909 = vand.u32 %v2472, 4294901760
        %v2910 = vsub.f32 %v2472, %v2909
        %2911 = vmatprep.subr.mxu0 %v2910
        %v2912 = vand.u32 %v2471, 4294901760
        %v2913 = vsub.f32 %v2471, %v2912
        %2914 = vmatpush1.msra.mxu0 %v2913
        %v2915 = vand.u32 %v2474, 4294901760
        %v2916 = vsub.f32 %v2474, %v2915
        %2917 = vmatprep.subr.mxu0 %v2916
        %v2918 = vand.u32 %v2473, 4294901760
        %v2919 = vsub.f32 %v2473, %v2918
        %2920 = vmatpush1.msra.mxu0 %v2919
        %v2921 = vand.u32 %v2476, 4294901760
        %v2922 = vsub.f32 %v2476, %v2921
        %2923 = vmatprep.subr.mxu0 %v2922
        %v2924 = vand.u32 %v2475, 4294901760
        %v2925 = vsub.f32 %v2475, %v2924
        %2926 = vmatpush1.msra.mxu0 %v2925
        %v2927 = vand.u32 %v2478, 4294901760
        %v2928 = vsub.f32 %v2478, %v2927
        %2929 = vmatprep.subr.mxu0 %v2928
        %v2930 = vand.u32 %v2477, 4294901760
        %v2931 = vsub.f32 %v2477, %v2930
        %2932 = vmatpush1.msra.mxu0 %v2931
        %v2933 = vand.u32 %v2480, 4294901760
        %v2934 = vsub.f32 %v2480, %v2933
        %2935 = vmatprep.subr.mxu0 %v2934
        %v2936 = vand.u32 %v2479, 4294901760
        %v2937 = vsub.f32 %v2479, %v2936
        %2938 = vmatpush1.msra.mxu0 %v2937
        %v2939 = vand.u32 %v2482, 4294901760
        %v2940 = vsub.f32 %v2482, %v2939
        %2941 = vmatprep.subr.mxu0 %v2940
        %v2942 = vand.u32 %v2481, 4294901760
        %v2943 = vsub.f32 %v2481, %v2942
        %2944 = vmatpush1.msra.mxu0 %v2943
        %v2945 = vand.u32 %v2484, 4294901760
        %v2946 = vsub.f32 %v2484, %v2945
        %2947 = vmatprep.subr.mxu0 %v2946
        %v2948 = vand.u32 %v2483, 4294901760
        %v2949 = vsub.f32 %v2483, %v2948
        %2950 = vmatpush1.msra.mxu0 %v2949
        %2951 = vmatprep.subr.mxu0 0.0
        %2952 = vmatpush1.msra.mxu0 0.0
        %2953 = vmatprep.subr.mxu0 0.0
        %2954 = vmatpush1.msra.mxu0 0.0
        %2955 = vmatprep.subr.mxu0 0.0
        %2956 = vmatpush1.msra.mxu0 0.0
        %2957 = vmatprep.subr.mxu0 0.0
        %2958 = vmatpush1.msra.mxu0 0.0
        %2959 = vmatprep.subr.mxu0 0.0
        %2960 = vmatpush1.msra.mxu0 0.0
        %2961 = vmatprep.subr.mxu0 0.0
        %2962 = vmatpush1.msra.mxu0 0.0
        %2963 = vmatprep.subr.mxu0 0.0
        %2964 = vmatpush1.msra.mxu0 0.0
        %2965 = vmatprep.subr.mxu0 0.0
        %2966 = vmatpush1.msra.mxu0 0.0
        %2967 = vmatprep.subr.mxu0 0.0
        %2968 = vmatpush1.msra.mxu0 0.0
        %2969 = vmatprep.subr.mxu0 0.0
        %2970 = vmatpush1.msra.mxu0 0.0
        %2971 = vmatprep.subr.mxu0 0.0
        %2972 = vmatpush1.msra.mxu0 0.0
        %2973 = vmatprep.subr.mxu0 0.0
        %2974 = vmatpush1.msra.mxu0 0.0
        %2975 = vmatprep.subr.mxu0 0.0
        %2976 = vmatpush1.msra.mxu0 0.0
        %2977 = vmatprep.subr.mxu0 0.0
        %2978 = vmatpush1.msra.mxu0 0.0
        %2979 = vmatprep.subr.mxu0 0.0
        %2980 = vmatpush1.msra.mxu0 0.0
        %2981 = vmatprep.subr.mxu0 0.0
        %2982 = vmatpush1.msra.mxu0 0.0
        %2983 = vmatprep.mubr.f32.mxu0 0.0
        %v2984 = vand.u32 %v2451, 4294901760
        %v2985 = vsub.f32 %v2451, %v2984
        %2986 = vmatmul.mubr.f32.gmra.mrb[0].mxu0 %v2985
        %v2987 = vpop.f32.mrb[0].mxu0
        %v2988 = vadd.f32 %v2844, %v2987
        %v2989 = vpop.f32.mrb[0].mxu0
        %v2990 = vadd.f32 %v2846, %v2989
        %2991 = vmatprep.mubr.f32.mxu0 0.0
        %v2992 = vand.u32 %v2452, 4294901760
        %v2993 = vsub.f32 %v2452, %v2992
        %2994 = vmatmul.mubr.f32.gmra.mrb[0].mxu0 %v2993
        %v2995 = vpop.f32.mrb[0].mxu0
        %v2996 = vadd.f32 %v2851, %v2995
        %v2997 = vpop.f32.mrb[0].mxu0
        %v2998 = vadd.f32 %v2853, %v2997
        %2999 = vdwg.mxu0
        %v3000 = vand.u32 %v2454, 4294901760
        %3001 = vmatprep.subr.mxu0 %v3000
        %v3002 = vand.u32 %v2453, 4294901760
        %3003 = vmatpush1.msra.mxu0 %v3002
        %v3004 = vand.u32 %v2456, 4294901760
        %3005 = vmatprep.subr.mxu0 %v3004
        %v3006 = vand.u32 %v2455, 4294901760
        %3007 = vmatpush1.msra.mxu0 %v3006
        %v3008 = vand.u32 %v2458, 4294901760
        %3009 = vmatprep.subr.mxu0 %v3008
        %v3010 = vand.u32 %v2457, 4294901760
        %3011 = vmatpush1.msra.mxu0 %v3010
        %v3012 = vand.u32 %v2460, 4294901760
        %3013 = vmatprep.subr.mxu0 %v3012
        %v3014 = vand.u32 %v2459, 4294901760
        %3015 = vmatpush1.msra.mxu0 %v3014
        %v3016 = vand.u32 %v2462, 4294901760
        %3017 = vmatprep.subr.mxu0 %v3016
        %v3018 = vand.u32 %v2461, 4294901760
        %3019 = vmatpush1.msra.mxu0 %v3018
        %v3020 = vand.u32 %v2464, 4294901760
        %3021 = vmatprep.subr.mxu0 %v3020
        %v3022 = vand.u32 %v2463, 4294901760
        %3023 = vmatpush1.msra.mxu0 %v3022
        %v3024 = vand.u32 %v2466, 4294901760
        %3025 = vmatprep.subr.mxu0 %v3024
        %v3026 = vand.u32 %v2465, 4294901760
        %3027 = vmatpush1.msra.mxu0 %v3026
        %v3028 = vand.u32 %v2468, 4294901760
        %3029 = vmatprep.subr.mxu0 %v3028
        %v3030 = vand.u32 %v2467, 4294901760
        %3031 = vmatpush1.msra.mxu0 %v3030
        %v3032 = vand.u32 %v2470, 4294901760
        %3033 = vmatprep.subr.mxu0 %v3032
        %v3034 = vand.u32 %v2469, 4294901760
        %3035 = vmatpush1.msra.mxu0 %v3034
        %v3036 = vand.u32 %v2472, 4294901760
        %3037 = vmatprep.subr.mxu0 %v3036
        %v3038 = vand.u32 %v2471, 4294901760
        %3039 = vmatpush1.msra.mxu0 %v3038
        %v3040 = vand.u32 %v2474, 4294901760
        %3041 = vmatprep.subr.mxu0 %v3040
        %v3042 = vand.u32 %v2473, 4294901760
        %3043 = vmatpush1.msra.mxu0 %v3042
        %v3044 = vand.u32 %v2476, 4294901760
        %3045 = vmatprep.subr.mxu0 %v3044
        %v3046 = vand.u32 %v2475, 4294901760
        %3047 = vmatpush1.msra.mxu0 %v3046
        %v3048 = vand.u32 %v2478, 4294901760
        %3049 = vmatprep.subr.mxu0 %v3048
        %v3050 = vand.u32 %v2477, 4294901760
        %3051 = vmatpush1.msra.mxu0 %v3050
        %v3052 = vand.u32 %v2480, 4294901760
        %3053 = vmatprep.subr.mxu0 %v3052
        %v3054 = vand.u32 %v2479, 4294901760
        %3055 = vmatpush1.msra.mxu0 %v3054
        %v3056 = vand.u32 %v2482, 4294901760
        %3057 = vmatprep.subr.mxu0 %v3056
        %v3058 = vand.u32 %v2481, 4294901760
        %3059 = vmatpush1.msra.mxu0 %v3058
        %v3060 = vand.u32 %v2484, 4294901760
        %3061 = vmatprep.subr.mxu0 %v3060
        %v3062 = vand.u32 %v2483, 4294901760
        %3063 = vmatpush1.msra.mxu0 %v3062
        %3064 = vmatprep.subr.mxu0 0.0
        %3065 = vmatpush1.msra.mxu0 0.0
        %3066 = vmatprep.subr.mxu0 0.0
        %3067 = vmatpush1.msra.mxu0 0.0
        %3068 = vmatprep.subr.mxu0 0.0
        %3069 = vmatpush1.msra.mxu0 0.0
        %3070 = vmatprep.subr.mxu0 0.0
        %3071 = vmatpush1.msra.mxu0 0.0
        %3072 = vmatprep.subr.mxu0 0.0
        %3073 = vmatpush1.msra.mxu0 0.0
        %3074 = vmatprep.subr.mxu0 0.0
        %3075 = vmatpush1.msra.mxu0 0.0
        %3076 = vmatprep.subr.mxu0 0.0
        %3077 = vmatpush1.msra.mxu0 0.0
        %3078 = vmatprep.subr.mxu0 0.0
        %3079 = vmatpush1.msra.mxu0 0.0
        %3080 = vmatprep.subr.mxu0 0.0
        %3081 = vmatpush1.msra.mxu0 0.0
        %3082 = vmatprep.subr.mxu0 0.0
        %3083 = vmatpush1.msra.mxu0 0.0
        %3084 = vmatprep.subr.mxu0 0.0
        %3085 = vmatpush1.msra.mxu0 0.0
        %3086 = vmatprep.subr.mxu0 0.0
        %3087 = vmatpush1.msra.mxu0 0.0
        %3088 = vmatprep.subr.mxu0 0.0
        %3089 = vmatpush1.msra.mxu0 0.0
        %3090 = vmatprep.subr.mxu0 0.0
        %3091 = vmatpush1.msra.mxu0 0.0
        %3092 = vmatprep.subr.mxu0 0.0
        %3093 = vmatpush1.msra.mxu0 0.0
        %3094 = vmatprep.subr.mxu0 0.0
        %3095 = vmatpush1.msra.mxu0 0.0
        %3096 = vmatprep.mubr.f32.mxu0 0.0
        %v3097 = vand.u32 %v2451, 4294901760
        %v3098 = vsub.f32 %v2451, %v3097
        %v3099 = vand.u32 %v3098, 4294901760
        %3100 = vmatmul.mubr.f32.gmra.mrb[0].mxu0 %v3099
        %v3101 = vpop.f32.mrb[0].mxu0
        %v3102 = vadd.f32 %v2988, %v3101
        %v3103 = vpop.f32.mrb[0].mxu0
        %v3104 = vadd.f32 %v2990, %v3103
        %3105 = vmatprep.mubr.f32.mxu0 0.0
        %v3106 = vand.u32 %v2452, 4294901760
        %v3107 = vsub.f32 %v2452, %v3106
        %v3108 = vand.u32 %v3107, 4294901760
        %3109 = vmatmul.mubr.f32.gmra.mrb[0].mxu0 %v3108
        %v3110 = vpop.f32.mrb[0].mxu0
        %v3111 = vadd.f32 %v2996, %v3110
        %v3112 = vpop.f32.mrb[0].mxu0
        %v3113 = vadd.f32 %v2998, %v3112
        %3114 = vdwg.mxu0
        %v3115 = vand.u32 %v2454, 4294901760
        %v3116 = vsub.f32 %v2454, %v3115
        %v3117 = vand.u32 %v3116, 4294901760
        %3118 = vmatprep.subr.mxu0 %v3117
        %v3119 = vand.u32 %v2453, 4294901760
        %v3120 = vsub.f32 %v2453, %v3119
        %v3121 = vand.u32 %v3120, 4294901760
        %3122 = vmatpush1.msra.mxu0 %v3121
        %v3123 = vand.u32 %v2456, 4294901760
        %v3124 = vsub.f32 %v2456, %v3123
        %v3125 = vand.u32 %v3124, 4294901760
        %3126 = vmatprep.subr.mxu0 %v3125
        %v3127 = vand.u32 %v2455, 4294901760
        %v3128 = vsub.f32 %v2455, %v3127
        %v3129 = vand.u32 %v3128, 4294901760
        %3130 = vmatpush1.msra.mxu0 %v3129
        %v3131 = vand.u32 %v2458, 4294901760
        %v3132 = vsub.f32 %v2458, %v3131
        %v3133 = vand.u32 %v3132, 4294901760
        %3134 = vmatprep.subr.mxu0 %v3133
        %v3135 = vand.u32 %v2457, 4294901760
        %v3136 = vsub.f32 %v2457, %v3135
        %v3137 = vand.u32 %v3136, 4294901760
        %3138 = vmatpush1.msra.mxu0 %v3137
        %v3139 = vand.u32 %v2460, 4294901760
        %v3140 = vsub.f32 %v2460, %v3139
        %v3141 = vand.u32 %v3140, 4294901760
        %3142 = vmatprep.subr.mxu0 %v3141
        %v3143 = vand.u32 %v2459, 4294901760
        %v3144 = vsub.f32 %v2459, %v3143
        %v3145 = vand.u32 %v3144, 4294901760
        %3146 = vmatpush1.msra.mxu0 %v3145
        %v3147 = vand.u32 %v2462, 4294901760
        %v3148 = vsub.f32 %v2462, %v3147
        %v3149 = vand.u32 %v3148, 4294901760
        %3150 = vmatprep.subr.mxu0 %v3149
        %v3151 = vand.u32 %v2461, 4294901760
        %v3152 = vsub.f32 %v2461, %v3151
        %v3153 = vand.u32 %v3152, 4294901760
        %3154 = vmatpush1.msra.mxu0 %v3153
        %v3155 = vand.u32 %v2464, 4294901760
        %v3156 = vsub.f32 %v2464, %v3155
        %v3157 = vand.u32 %v3156, 4294901760
        %3158 = vmatprep.subr.mxu0 %v3157
        %v3159 = vand.u32 %v2463, 4294901760
        %v3160 = vsub.f32 %v2463, %v3159
        %v3161 = vand.u32 %v3160, 4294901760
        %3162 = vmatpush1.msra.mxu0 %v3161
        %v3163 = vand.u32 %v2466, 4294901760
        %v3164 = vsub.f32 %v2466, %v3163
        %v3165 = vand.u32 %v3164, 4294901760
        %3166 = vmatprep.subr.mxu0 %v3165
        %v3167 = vand.u32 %v2465, 4294901760
        %v3168 = vsub.f32 %v2465, %v3167
        %v3169 = vand.u32 %v3168, 4294901760
        %3170 = vmatpush1.msra.mxu0 %v3169
        %v3171 = vand.u32 %v2468, 4294901760
        %v3172 = vsub.f32 %v2468, %v3171
        %v3173 = vand.u32 %v3172, 4294901760
        %3174 = vmatprep.subr.mxu0 %v3173
        %v3175 = vand.u32 %v2467, 4294901760
        %v3176 = vsub.f32 %v2467, %v3175
        %v3177 = vand.u32 %v3176, 4294901760
        %3178 = vmatpush1.msra.mxu0 %v3177
        %v3179 = vand.u32 %v2470, 4294901760
        %v3180 = vsub.f32 %v2470, %v3179
        %v3181 = vand.u32 %v3180, 4294901760
        %3182 = vmatprep.subr.mxu0 %v3181
        %v3183 = vand.u32 %v2469, 4294901760
        %v3184 = vsub.f32 %v2469, %v3183
        %v3185 = vand.u32 %v3184, 4294901760
        %3186 = vmatpush1.msra.mxu0 %v3185
        %v3187 = vand.u32 %v2472, 4294901760
        %v3188 = vsub.f32 %v2472, %v3187
        %v3189 = vand.u32 %v3188, 4294901760
        %3190 = vmatprep.subr.mxu0 %v3189
        %v3191 = vand.u32 %v2471, 4294901760
        %v3192 = vsub.f32 %v2471, %v3191
        %v3193 = vand.u32 %v3192, 4294901760
        %3194 = vmatpush1.msra.mxu0 %v3193
        %v3195 = vand.u32 %v2474, 4294901760
        %v3196 = vsub.f32 %v2474, %v3195
        %v3197 = vand.u32 %v3196, 4294901760
        %3198 = vmatprep.subr.mxu0 %v3197
        %v3199 = vand.u32 %v2473, 4294901760
        %v3200 = vsub.f32 %v2473, %v3199
        %v3201 = vand.u32 %v3200, 4294901760
        %3202 = vmatpush1.msra.mxu0 %v3201
        %v3203 = vand.u32 %v2476, 4294901760
        %v3204 = vsub.f32 %v2476, %v3203
        %v3205 = vand.u32 %v3204, 4294901760
        %3206 = vmatprep.subr.mxu0 %v3205
        %v3207 = vand.u32 %v2475, 4294901760
        %v3208 = vsub.f32 %v2475, %v3207
        %v3209 = vand.u32 %v3208, 4294901760
        %3210 = vmatpush1.msra.mxu0 %v3209
        %v3211 = vand.u32 %v2478, 4294901760
        %v3212 = vsub.f32 %v2478, %v3211
        %v3213 = vand.u32 %v3212, 4294901760
        %3214 = vmatprep.subr.mxu0 %v3213
        %v3215 = vand.u32 %v2477, 4294901760
        %v3216 = vsub.f32 %v2477, %v3215
        %v3217 = vand.u32 %v3216, 4294901760
        %3218 = vmatpush1.msra.mxu0 %v3217
        %v3219 = vand.u32 %v2480, 4294901760
        %v3220 = vsub.f32 %v2480, %v3219
        %v3221 = vand.u32 %v3220, 4294901760
        %3222 = vmatprep.subr.mxu0 %v3221
        %v3223 = vand.u32 %v2479, 4294901760
        %v3224 = vsub.f32 %v2479, %v3223
        %v3225 = vand.u32 %v3224, 4294901760
        %3226 = vmatpush1.msra.mxu0 %v3225
        %v3227 = vand.u32 %v2482, 4294901760
        %v3228 = vsub.f32 %v2482, %v3227
        %v3229 = vand.u32 %v3228, 4294901760
        %3230 = vmatprep.subr.mxu0 %v3229
        %v3231 = vand.u32 %v2481, 4294901760
        %v3232 = vsub.f32 %v2481, %v3231
        %v3233 = vand.u32 %v3232, 4294901760
        %3234 = vmatpush1.msra.mxu0 %v3233
        %v3235 = vand.u32 %v2484, 4294901760
        %v3236 = vsub.f32 %v2484, %v3235
        %v3237 = vand.u32 %v3236, 4294901760
        %3238 = vmatprep.subr.mxu0 %v3237
        %v3239 = vand.u32 %v2483, 4294901760
        %v3240 = vsub.f32 %v2483, %v3239
        %v3241 = vand.u32 %v3240, 4294901760
        %3242 = vmatpush1.msra.mxu0 %v3241
        %3243 = vmatprep.subr.mxu0 0.0
        %3244 = vmatpush1.msra.mxu0 0.0
        %3245 = vmatprep.subr.mxu0 0.0
        %3246 = vmatpush1.msra.mxu0 0.0
        %3247 = vmatprep.subr.mxu0 0.0
        %3248 = vmatpush1.msra.mxu0 0.0
        %3249 = vmatprep.subr.mxu0 0.0
        %3250 = vmatpush1.msra.mxu0 0.0
        %3251 = vmatprep.subr.mxu0 0.0
        %3252 = vmatpush1.msra.mxu0 0.0
        %3253 = vmatprep.subr.mxu0 0.0
        %3254 = vmatpush1.msra.mxu0 0.0
        %3255 = vmatprep.subr.mxu0 0.0
        %3256 = vmatpush1.msra.mxu0 0.0
        %3257 = vmatprep.subr.mxu0 0.0
        %3258 = vmatpush1.msra.mxu0 0.0
        %3259 = vmatprep.subr.mxu0 0.0
        %3260 = vmatpush1.msra.mxu0 0.0
        %3261 = vmatprep.subr.mxu0 0.0
        %3262 = vmatpush1.msra.mxu0 0.0
        %3263 = vmatprep.subr.mxu0 0.0
        %3264 = vmatpush1.msra.mxu0 0.0
        %3265 = vmatprep.subr.mxu0 0.0
        %3266 = vmatpush1.msra.mxu0 0.0
        %3267 = vmatprep.subr.mxu0 0.0
        %3268 = vmatpush1.msra.mxu0 0.0
        %3269 = vmatprep.subr.mxu0 0.0
        %3270 = vmatpush1.msra.mxu0 0.0
        %3271 = vmatprep.subr.mxu0 0.0
        %3272 = vmatpush1.msra.mxu0 0.0
        %3273 = vmatprep.subr.mxu0 0.0
        %3274 = vmatpush1.msra.mxu0 0.0
        %3275 = vmatprep.mubr.f32.mxu0 0.0
        %v3276 = vand.u32 %v2451, 4294901760
        %3277 = vmatmul.mubr.f32.gmra.mrb[0].mxu0 %v3276
        %v3278 = vpop.f32.mrb[0].mxu0
        %v3279 = vadd.f32 %v3102, %v3278
        %v3280 = vpop.f32.mrb[0].mxu0
        %v3281 = vadd.f32 %v3104, %v3280
        %3282 = vmatprep.mubr.f32.mxu0 0.0
        %v3283 = vand.u32 %v2452, 4294901760
        %3284 = vmatmul.mubr.f32.gmra.mrb[0].mxu0 %v3283
        %v3285 = vpop.f32.mrb[0].mxu0
        %v3286 = vadd.f32 %v3111, %v3285
        %v3287 = vpop.f32.mrb[0].mxu0
        %v3288 = vadd.f32 %v3113, %v3287
        %3289 = vdwg.mxu0
        %v3290 = vand.u32 %v2454, 4294901760
        %3291 = vmatprep.subr.mxu0 %v3290
        %v3292 = vand.u32 %v2453, 4294901760
        %3293 = vmatpush1.msra.mxu0 %v3292
        %v3294 = vand.u32 %v2456, 4294901760
        %3295 = vmatprep.subr.mxu0 %v3294
        %v3296 = vand.u32 %v2455, 4294901760
        %3297 = vmatpush1.msra.mxu0 %v3296
        %v3298 = vand.u32 %v2458, 4294901760
        %3299 = vmatprep.subr.mxu0 %v3298
        %v3300 = vand.u32 %v2457, 4294901760
        %3301 = vmatpush1.msra.mxu0 %v3300
        %v3302 = vand.u32 %v2460, 4294901760
        %3303 = vmatprep.subr.mxu0 %v3302
        %v3304 = vand.u32 %v2459, 4294901760
        %3305 = vmatpush1.msra.mxu0 %v3304
        %v3306 = vand.u32 %v2462, 4294901760
        %3307 = vmatprep.subr.mxu0 %v3306
        %v3308 = vand.u32 %v2461, 4294901760
        %3309 = vmatpush1.msra.mxu0 %v3308
        %v3310 = vand.u32 %v2464, 4294901760
        %3311 = vmatprep.subr.mxu0 %v3310
        %v3312 = vand.u32 %v2463, 4294901760
        %3313 = vmatpush1.msra.mxu0 %v3312
        %v3314 = vand.u32 %v2466, 4294901760
        %3315 = vmatprep.subr.mxu0 %v3314
        %v3316 = vand.u32 %v2465, 4294901760
        %3317 = vmatpush1.msra.mxu0 %v3316
        %v3318 = vand.u32 %v2468, 4294901760
        %3319 = vmatprep.subr.mxu0 %v3318
        %v3320 = vand.u32 %v2467, 4294901760
        %3321 = vmatpush1.msra.mxu0 %v3320
        %v3322 = vand.u32 %v2470, 4294901760
        %3323 = vmatprep.subr.mxu0 %v3322
        %v3324 = vand.u32 %v2469, 4294901760
        %3325 = vmatpush1.msra.mxu0 %v3324
        %v3326 = vand.u32 %v2472, 4294901760
        %3327 = vmatprep.subr.mxu0 %v3326
        %v3328 = vand.u32 %v2471, 4294901760
        %3329 = vmatpush1.msra.mxu0 %v3328
        %v3330 = vand.u32 %v2474, 4294901760
        %3331 = vmatprep.subr.mxu0 %v3330
        %v3332 = vand.u32 %v2473, 4294901760
        %3333 = vmatpush1.msra.mxu0 %v3332
        %v3334 = vand.u32 %v2476, 4294901760
        %3335 = vmatprep.subr.mxu0 %v3334
        %v3336 = vand.u32 %v2475, 4294901760
        %3337 = vmatpush1.msra.mxu0 %v3336
        %v3338 = vand.u32 %v2478, 4294901760
        %3339 = vmatprep.subr.mxu0 %v3338
        %v3340 = vand.u32 %v2477, 4294901760
        %3341 = vmatpush1.msra.mxu0 %v3340
        %v3342 = vand.u32 %v2480, 4294901760
        %3343 = vmatprep.subr.mxu0 %v3342
        %v3344 = vand.u32 %v2479, 4294901760
        %3345 = vmatpush1.msra.mxu0 %v3344
        %v3346 = vand.u32 %v2482, 4294901760
        %3347 = vmatprep.subr.mxu0 %v3346
        %v3348 = vand.u32 %v2481, 4294901760
        %3349 = vmatpush1.msra.mxu0 %v3348
        %v3350 = vand.u32 %v2484, 4294901760
        %3351 = vmatprep.subr.mxu0 %v3350
        %v3352 = vand.u32 %v2483, 4294901760
        %3353 = vmatpush1.msra.mxu0 %v3352
        %3354 = vmatprep.subr.mxu0 0.0
        %3355 = vmatpush1.msra.mxu0 0.0
        %3356 = vmatprep.subr.mxu0 0.0
        %3357 = vmatpush1.msra.mxu0 0.0
        %3358 = vmatprep.subr.mxu0 0.0
        %3359 = vmatpush1.msra.mxu0 0.0
        %3360 = vmatprep.subr.mxu0 0.0
        %3361 = vmatpush1.msra.mxu0 0.0
        %3362 = vmatprep.subr.mxu0 0.0
        %3363 = vmatpush1.msra.mxu0 0.0
        %3364 = vmatprep.subr.mxu0 0.0
        %3365 = vmatpush1.msra.mxu0 0.0
        %3366 = vmatprep.subr.mxu0 0.0
        %3367 = vmatpush1.msra.mxu0 0.0
        %3368 = vmatprep.subr.mxu0 0.0
        %3369 = vmatpush1.msra.mxu0 0.0
        %3370 = vmatprep.subr.mxu0 0.0
        %3371 = vmatpush1.msra.mxu0 0.0
        %3372 = vmatprep.subr.mxu0 0.0
        %3373 = vmatpush1.msra.mxu0 0.0
        %3374 = vmatprep.subr.mxu0 0.0
        %3375 = vmatpush1.msra.mxu0 0.0
        %3376 = vmatprep.subr.mxu0 0.0
        %3377 = vmatpush1.msra.mxu0 0.0
        %3378 = vmatprep.subr.mxu0 0.0
        %3379 = vmatpush1.msra.mxu0 0.0
        %3380 = vmatprep.subr.mxu0 0.0
        %3381 = vmatpush1.msra.mxu0 0.0
        %3382 = vmatprep.subr.mxu0 0.0
        %3383 = vmatpush1.msra.mxu0 0.0
        %3384 = vmatprep.subr.mxu0 0.0
        %3385 = vmatpush1.msra.mxu0 0.0
        %3386 = vmatprep.mubr.f32.mxu0 0.0
        %v3387 = vand.u32 %v2451, 4294901760
        %3388 = vmatmul.mubr.f32.gmra.mrb[0].mxu0 %v3387
        %v3389 = vpop.f32.mrb[0].mxu0
        %v3390 = vadd.f32 %v3279, %v3389
        %v3391 = vpop.f32.mrb[0].mxu0
        %v3392 = vadd.f32 %v3281, %v3391
        %3393 = vmatprep.mubr.f32.mxu0 0.0
        %v3394 = vand.u32 %v2452, 4294901760
        %3395 = vmatmul.mubr.f32.gmra.mrb[0].mxu0 %v3394
        %v3396 = vpop.f32.mrb[0].mxu0
        %v3397 = vadd.f32 %v3286, %v3396
        %v3398 = vpop.f32.mrb[0].mxu0
        %v3399 = vadd.f32 %v3288, %v3398
        %3400 = vdwg.mxu0
        %v3401 = vmax.f32 %v3390, 0.0
        %v3402 = vmax.f32 %v3392, 0.0
        %v3403 = vmax.f32 %v3397, 0.0
        %v3404 = vmax.f32 %v3399, 0.0
        %v3405 = vadd.f32 %v3401, %v3402
        %v3406 = vadd.f32 %v3405, %v3403
        %v3407 = vadd.f32 %v3406, %v3404
        %3408 = vadd.xlane.f32.xlu0 %v3407
        %v3409 = vpop.xlane.xlu0 %3408
        %v3410 = vrot.slane %v3409, 4
        %v3411 = vadd.f32 %v3409, %v3410
        %v3412 = vrot.slane %v3411, 2
        %v3413 = vadd.f32 %v3411, %v3412
        %v3414 = vrot.slane %v3413, 1
        %v3415 = vadd.f32 %v3413, %v3414
        %s3416 = vtos %v3415
        %v3417 = vrcp.pop 4096.0
        %s3418 = vtos %v3417
        %s3419 = smul.f32 %s3416, %s3418
        %v3420 = vstv %s3419
        %v3421 = vsub.f32 %v3401, %v3420
        %v3422 = vsub.f32 %v3402, %v3420
        %v3423 = vsub.f32 %v3403, %v3420
        %v3424 = vsub.f32 %v3404, %v3420
        %v3425 = vmul.f32 %v3421, %v3421
        %v3426 = vmul.f32 %v3422, %v3422
        %v3427 = vmul.f32 %v3423, %v3423
        %v3428 = vmul.f32 %v3424, %v3424
        %v3429 = vadd.f32 %v3425, %v3426
        %v3430 = vadd.f32 %v3429, %v3427
        %v3431 = vadd.f32 %v3430, %v3428
        %3432 = vadd.xlane.f32.xlu0 %v3431
        %v3433 = vpop.xlane.xlu0 %3432
        %v3434 = vrot.slane %v3433, 4
        %v3435 = vadd.f32 %v3433, %v3434
        %v3436 = vrot.slane %v3435, 2
        %v3437 = vadd.f32 %v3435, %v3436
        %v3438 = vrot.slane %v3437, 1
        %v3439 = vadd.f32 %v3437, %v3438
        %s3440 = vtos %v3439
        %v3441 = vrcp.pop 4096.0
        %s3442 = vtos %v3441
        %s3443 = smul.f32 %s3440, %s3442
        %s3444 = sadd.f32 %s3443, 1e-05
        %v3445 = vstv %s3444
        %v3446 = vrsqrt.pop %v3445
        %s3447 = vtos %v3446
        %v3448 = vstv %s3447
        %v3449 = vmul.f32 %v3421, %v3448
        %v3450 = vmul.f32 %v3422, %v3448
        %v3451 = vmul.f32 %v3423, %v3448
        %v3452 = vmul.f32 %v3424, %v3448
        %v3453 = vld [vmem:[%s7] sm:$0xff]
        %v3454 = vld [vmem:[%s7 + $0x8] sm:$0xff]
        %v3455 = vld [vmem:[%s7 + $0x10] sm:$0xff]
        %v3456 = vld [vmem:[%s7 + $0x18] sm:$0xff]
        %v3457 = vmul.f32 %v3449, %v3453
        %v3458 = vmul.f32 %v3450, %v3454
        %v3459 = vmul.f32 %v3451, %v3455
        %v3460 = vmul.f32 %v3452, %v3456
        %v3461 = vld [vmem:[%s8] sm:$0xff]
        %v3462 = vld [vmem:[%s8 + $0x8] sm:$0xff]
        %v3463 = vld [vmem:[%s8 + $0x10] sm:$0xff]
        %v3464 = vld [vmem:[%s8 + $0x18] sm:$0xff]
        %v3465 = vadd.f32 %v3457, %v3461
        %v3466 = vadd.f32 %v3458, %v3462
        %v3467 = vadd.f32 %v3459, %v3463
        %v3468 = vadd.f32 %v3460, %v3464
        %3469 = vst [vmem:[%s325] sm:$0xff] %v3465
        %3470 = vst [vmem:[%s325 + $0x8] sm:$0xff] %v3466
        %3471 = vst [vmem:[%s325 + $0x10] sm:$0xff] %v3467
        %3472 = vst [vmem:[%s325 + $0x18] sm:$0xff] %v3468
        %s3473 = sand.u32 %s225, 1
        %s3474 = scalar_lea.sflag [#allocation3], %s3473
        %s3475 = sand.u32 %s225, 1
        %s3476 = smul.addr %s3475, 32
        %s3477 = scalar_lea.vmem [#allocation2], %s3476
        // Predicated region
        $region57: #{tpu_custom_call.1} parent=55 // pred_check
          %p3478 = pneg %p235
        $region58: #{tpu_custom_call.1} parent=55 // pred_check_branch
          %3480 = sbr.rel (%p3478) target = $region60
        $region59: #{tpu_custom_call.1} parent=55 // pred_region
          %s3482 = ssub.s32 512, 512
          %3483 = vsyncadd %s3474, %s3482
          %s3484 = smul.addr %s23, 4
          %s3485 = smul.addr %s3484, 128
          %s3486 = scalar_lea.hbm %s9, %s3485
          %s3487 = sshll.u32 %s3477, 4
          %s3488 = int_to_ptr.vmem [resolvable:$true] %s3487
          %3493 = dma.vmem_to_hbm [thread:$0]  %s3488, 512, %s3486, %s3474, 256, 256, 16
        $region60: #{tpu_custom_call.1} parent=55 // pred_fallthru
          _
      $region56: #{tpu_custom_call.1} parent=5 // pred_fallthru
        _
      %p3494 = scmp.le.s32.totalorder 2, %s18
      // Predicated region
      $region61: #{tpu_custom_call.1} parent=5 // pred_check
        %p3495 = pneg %p3494
      $region62: #{tpu_custom_call.1} parent=5 // pred_check_branch
        %3497 = sbr.rel (%p3495) target = $region64
      $region63: #{tpu_custom_call.1} parent=5 // pred_region
        %s3498 = ssub.s32 %s18, 2
        // Predicated region
        $region65: #{tpu_custom_call.1} parent=63 // pred_check
          %p3499 = pneg %p241
        $region66: #{tpu_custom_call.1} parent=63 // pred_check_branch
          %3501 = sbr.rel (%p3499) target = $region68
        $region67: #{tpu_custom_call.1} parent=63 // pred_region
          %s3502 = sand.u32 %s226, 1
          %s3503 = scalar_lea.sflag [#allocation3], %s3502
          %s3504 = sand.u32 %s226, 1
          %s3505 = smul.addr %s3504, 32
          %s3506 = scalar_lea.vmem [#allocation2], %s3505
          %3507 = dma.done %s3503, 512
        $region68: #{tpu_custom_call.1} parent=63 // pred_fallthru
          _
      $region64: #{tpu_custom_call.1} parent=5 // pred_fallthru
        _
    $region6: #{tpu_custom_call.1} parent=1 // loop_footer
      %s22 = sadd.s32 1, %s18
    $region7: #{tpu_custom_call.1} parent=1 // loop_footer_branch
      %17 = sbr.rel target = $region3
    $region8: #{tpu_custom_call.1} parent=1 // loop_exit
      _
    %3508 = vsyncpa [#allocation3], 1
    %s3509 = scalar_lea.sflag [#allocation3], 1
    %3510 = vsyncpa %s3509, 1

</llo_original>
